<compile_context>
chip_gen: v6e
topology: v6e:2x2x1
jax: 0.10.0
libtpu: 0.0.40
codegen_flags: <defaults>
</compile_context>

<pallas_src>
import functools

import jax
import jax.numpy as jnp
from jax.experimental import pallas as pl
from jax.experimental.pallas import tpu as pltpu


def _fused_shared_features_kernel(p1_ref, w1_ref, b1_ref, w2_ref, b2_ref,
                                  w3_ref, b3_ref, o_ref, a1p_ref, a2p_ref,
                                  *, H, W):
    """One batch element per grid step.

    p1_ref : (1, H*W, 9*Cin) bf16   layer-1 im2col patches (built in wrapper)
    w1_ref : (9*Cin, 32)     bf16   layer-1 weights, flattened HWIO
    b1_ref : (1, 32)         f32
    w2_ref : (288, 64)       bf16
    b2_ref : (1, 64)         f32
    w3_ref : (576, 64)       bf16
    b3_ref : (1, 64)         f32
    o_ref  : (1, 64, H*W)    f32    NCHW-flattened output (lane-dense, 256 lanes)
    a1p_ref: (H+2, W+2, 32)  f32    VMEM scratch, padded layer-1 activation
    a2p_ref: (H+2, W+2, 64)  f32    VMEM scratch, padded layer-2 activation
    """
    HW = H * W

    # ---------------- layer 1: single matmul on pre-built im2col patches -------
    a1 = jnp.dot(p1_ref[0], w1_ref[...], preferred_element_type=jnp.float32)
    a1 = jnp.maximum(a1 + b1_ref[...], 0.0)                      # (HW, 32) f32

    # Stash padded layer-1 activation in VMEM (zeros give the 'same' halo).
    a1p_ref[...] = jnp.zeros_like(a1p_ref)
    a1p_ref[1:H + 1, 1:W + 1, :] = a1.reshape(H, W, 32)

    def conv_from_padded(ap_ref, w_ref, b_ref, C):
        # Build the (HW, 9*C) im2col matrix once, then ONE big-K bf16 matmul.
        cols = [ap_ref[dy:dy + H, dx:dx + W, :].reshape(HW, C)
                for dy in range(3) for dx in range(3)]
        patches = jnp.concatenate(cols, axis=-1).astype(jnp.bfloat16)
        y = jnp.dot(patches, w_ref[...], preferred_element_type=jnp.float32)
        return jnp.maximum(y + b_ref[...], 0.0)

    # ---------------- layer 2 --------------------------------------------------
    a2 = conv_from_padded(a1p_ref, w2_ref, b2_ref, 32)            # (HW, 64)
    a2p_ref[...] = jnp.zeros_like(a2p_ref)
    a2p_ref[1:H + 1, 1:W + 1, :] = a2.reshape(H, W, 64)

    # ---------------- layer 3 --------------------------------------------------
    a3 = conv_from_padded(a2p_ref, w3_ref, b3_ref, 64)            # (HW, 64)

    # NCHW flatten inside the kernel: (HW, 64) -> (64, HW) lane-dense store.
    o_ref[0] = jnp.transpose(a3, (1, 0)).astype(o_ref.dtype)


def _im2col_nhwc(x_nhwc):
    """(N, H, W, Cin) -> (N, H*W, 9*Cin) patches for a 3x3 'same' conv.

    Column index = (dy*3 + dx)*Cin + c, matching w.reshape(9*Cin, Cout) of HWIO.
    """
    N, H, W, Cin = x_nhwc.shape
    xp = jnp.pad(x_nhwc, ((0, 0), (1, 1), (1, 1), (0, 0)))
    cols = [xp[:, dy:dy + H, dx:dx + W, :] for dy in range(3) for dx in range(3)]
    p = jnp.stack(cols, axis=3)                                   # (N, H, W, 9, Cin)
    return p.reshape(N, H * W, 9 * Cin)


def shared_features_forward(params, x_nchw):
    """Matches SharedFeatures.forward: 3x (conv3x3 same + ReLU), flatten to (N, 64*H*W)."""
    N, C, H, W = x_nchw.shape
    HW = H * W

    x = jnp.transpose(x_nchw, (0, 2, 3, 1))                       # NCHW -> NHWC
    p1 = _im2col_nhwc(x).astype(jnp.bfloat16)                     # (N, HW, 9*C)

    w1 = params["w1"].reshape(9 * C, 32).astype(jnp.bfloat16)
    w2 = params["w2"].reshape(9 * 32, 64).astype(jnp.bfloat16)
    w3 = params["w3"].reshape(9 * 64, 64).astype(jnp.bfloat16)
    b1 = params["b1"].reshape(1, 32)
    b2 = params["b2"].reshape(1, 64)
    b3 = params["b3"].reshape(1, 64)

    kernel = functools.partial(_fused_shared_features_kernel, H=H, W=W)

    out = pl.pallas_call(
        kernel,
        out_shape=jax.ShapeDtypeStruct((N, 64, HW), jnp.float32),
        grid_spec=pltpu.PrefetchScalarGridSpec(
            num_scalar_prefetch=0,
            grid=(N,),
            in_specs=[
                pl.BlockSpec((1, HW, 9 * C), lambda n: (n, 0, 0)),
                pl.BlockSpec((9 * C, 32), lambda n: (0, 0)),
                pl.BlockSpec((1, 32), lambda n: (0, 0)),
                pl.BlockSpec((9 * 32, 64), lambda n: (0, 0)),
                pl.BlockSpec((1, 64), lambda n: (0, 0)),
                pl.BlockSpec((9 * 64, 64), lambda n: (0, 0)),
                pl.BlockSpec((1, 64), lambda n: (0, 0)),
            ],
            out_specs=pl.BlockSpec((1, 64, HW), lambda n: (n, 0, 0)),
            scratch_shapes=[
                pltpu.VMEM((H + 2, W + 2, 32), jnp.float32),
                pltpu.VMEM((H + 2, W + 2, 64), jnp.float32),
            ],
        ),
        compiler_params=pltpu.CompilerParams(
            dimension_semantics=("parallel",),   # shards batch across v7x's 2 TCs
        ),
    )(p1, w1, b1, w2, b2, w3, b3)

    # (N, 64, H*W) is already NCHW order -> free contiguous reshape.
    return out.reshape(N, 64 * HW)


def init_params(input_shape, key):
    """Deterministic synthetic params.  input_shape = (C, H, W) as in the torch module."""
    C, H, W = input_shape
    ks = jax.random.split(key, 6)

    def w(k, cin, cout):
        return (jax.random.normal(k, (3, 3, cin, cout), jnp.float32)
                * (1.0 / jnp.sqrt(9.0 * cin)))

    def bias(k, cout):
        return jax.random.normal(k, (cout,), jnp.float32) * 0.01

    return {
        "w1": w(ks[0], C, 32),  "b1": bias(ks[1], 32),
        "w2": w(ks[2], 32, 64), "b2": bias(ks[3], 64),
        "w3": w(ks[4], 64, 64), "b3": bias(ks[5], 64),
    }


def _reference_forward(params, x_nchw, operand_dtype=jnp.float32):
    """Pure-JAX reference (lax conv).  operand_dtype=bf16 mirrors the kernel's MXU precision."""
    x = jnp.transpose(x_nchw, (0, 2, 3, 1))
    dn = jax.lax.conv_dimension_numbers(x.shape, params["w1"].shape,
                                        ("NHWC", "HWIO", "NHWC"))

    def layer(x, w, b):
        y = jax.lax.conv_general_dilated(
            x.astype(operand_dtype), w.astype(operand_dtype), (1, 1), "SAME",
            dimension_numbers=dn, preferred_element_type=jnp.float32)
        return jax.nn.relu(y + b)

    x = layer(x, params["w1"], params["b1"])
    x = layer(x, params["w2"], params["b2"])
    x = layer(x, params["w3"], params["b3"])
    x = jnp.transpose(x, (0, 3, 1, 2))
    return x.reshape(x.shape[0], -1)


if __name__ == "__main__":
    key = jax.random.PRNGKey(0)
    k_param, k_x = jax.random.split(key)

    input_shape = (4, 16, 16)          # (C, H, W), small
    batch = 2
    params = init_params(input_shape, k_param)
    x = jax.random.normal(k_x, (batch,) + input_shape, jnp.float32)   # NCHW like torch

    out = jax.jit(shared_features_forward)(params, x)
    out = jax.block_until_ready(out)
    assert out.shape == (batch, 64 * input_shape[1] * input_shape[2])

    # Exact-structure check: same bf16-operand / f32-accumulate precision as the kernel.
    ref_bf16 = _reference_forward(params, x, operand_dtype=jnp.bfloat16)
    assert jnp.allclose(out, ref_bf16, rtol=1e-3, atol=1e-3), "mismatch vs bf16-operand reference"

    # Sanity check against the full-f32 module semantics (bf16 MXU rounding tolerance).
    ref_f32 = _reference_forward(params, x, operand_dtype=jnp.float32)
    assert jnp.allclose(out, ref_f32, rtol=5e-2, atol=5e-2), "mismatch vs f32 reference"

    print("KERNEL_OK")
</pallas_src>

<mosaic_0001>
module attributes {stable_mosaic.version = 11 : i64} {
  func.func @_fused_shared_features_kernel(%arg0: i32, %arg1: memref<1x256x36xbf16, #tpu.memory_space<vmem>>, %arg2: memref<36x32xbf16, #tpu.memory_space<vmem>>, %arg3: memref<1x32xf32, #tpu.memory_space<vmem>>, %arg4: memref<288x64xbf16, #tpu.memory_space<vmem>>, %arg5: memref<1x64xf32, #tpu.memory_space<vmem>>, %arg6: memref<576x64xbf16, #tpu.memory_space<vmem>>, %arg7: memref<1x64xf32, #tpu.memory_space<vmem>>, %arg8: memref<1x64x256xf32, #tpu.memory_space<vmem>>, %arg9: memref<18x18x32xf32, #tpu.memory_space<vmem>>, %arg10: memref<18x18x64xf32, #tpu.memory_space<vmem>>) attributes {dimension_semantics = [#tpu.dimension_semantics<parallel>], iteration_bounds = array<i64: 2>, scalar_prefetch = 0 : i64, scratch_operands = 2 : i64, tpu.core_type = #tpu.core_type<tc>, window_params = [{transform_indices = @transform_0, window_bounds = array<i64: 1, 256, 36>}, {pipeline_mode = #tpu.pipeline_mode<synchronous>, transform_indices = @transform_1, window_bounds = array<i64: 36, 32>}, {pipeline_mode = #tpu.pipeline_mode<synchronous>, transform_indices = @transform_2, window_bounds = array<i64: 1, 32>}, {pipeline_mode = #tpu.pipeline_mode<synchronous>, transform_indices = @transform_3, window_bounds = array<i64: 288, 64>}, {pipeline_mode = #tpu.pipeline_mode<synchronous>, transform_indices = @transform_4, window_bounds = array<i64: 1, 64>}, {pipeline_mode = #tpu.pipeline_mode<synchronous>, transform_indices = @transform_5, window_bounds = array<i64: 576, 64>}, {pipeline_mode = #tpu.pipeline_mode<synchronous>, transform_indices = @transform_6, window_bounds = array<i64: 1, 64>}, {transform_indices = @transform_7, window_bounds = array<i64: 1, 64, 256>}]} {
    %c0 = arith.constant 0 : index
    %c0_0 = arith.constant 0 : index
    %c0_1 = arith.constant 0 : index
    %0 = vector.load %arg1[%c0, %c0_0, %c0_1] : memref<1x256x36xbf16, #tpu.memory_space<vmem>>, vector<1x256x36xbf16>
    %1 = vector.shape_cast %0 : vector<1x256x36xbf16> to vector<256x36xbf16>
    %c0_2 = arith.constant 0 : index
    %c0_3 = arith.constant 0 : index
    %2 = vector.load %arg2[%c0_2, %c0_3] : memref<36x32xbf16, #tpu.memory_space<vmem>>, vector<36x32xbf16>
    %cst = arith.constant dense<0.000000e+00> : vector<256x32xf32>
    %3 = tpu.matmul %1, %2, %cst {dimension_numbers = #tpu.dot_dimension_numbers<[1], [0], [0], [1], [0, 0, 1, 1], [], []>} : vector<256x36xbf16>, vector<36x32xbf16>, vector<256x32xf32> -> vector<256x32xf32>
    %c0_4 = arith.constant 0 : index
    %c0_5 = arith.constant 0 : index
    %4 = vector.load %arg3[%c0_4, %c0_5] : memref<1x32xf32, #tpu.memory_space<vmem>>, vector<1x32xf32>
    %5 = vector.broadcast %4 : vector<1x32xf32> to vector<256x32xf32>
    %6 = arith.addf %3, %5 : vector<256x32xf32>
    %cst_6 = arith.constant 0.000000e+00 : f32
    %7 = vector.broadcast %cst_6 : f32 to vector<256x32xf32>
    %8 = arith.maximumf %6, %7 : vector<256x32xf32>
    %cst_7 = arith.constant 0.000000e+00 : f32
    %9 = vector.broadcast %cst_7 : f32 to vector<18x18x32xf32>
    %c0_8 = arith.constant 0 : index
    %c0_9 = arith.constant 0 : index
    %c0_10 = arith.constant 0 : index
    %10 = vector.load %arg9[%c0_8, %c0_9, %c0_10] : memref<18x18x32xf32, #tpu.memory_space<vmem>>, vector<18x18x32xf32>
    tpu.vector_store %arg9[%c0_8, %c0_9, %c0_10], %9 {strides = array<i32>} : memref<18x18x32xf32, #tpu.memory_space<vmem>>, vector<18x18x32xf32>,
    %11 = vector.shape_cast %8 : vector<256x32xf32> to vector<16x16x32xf32>
    %c1 = arith.constant 1 : index
    %c1_11 = arith.constant 1 : index
    %c0_12 = arith.constant 0 : index
    %12 = vector.load %arg9[%c1, %c1_11, %c0_12] : memref<18x18x32xf32, #tpu.memory_space<vmem>>, vector<16x16x32xf32>
    tpu.vector_store %arg9[%c1, %c1_11, %c0_12], %11 {strides = array<i32>} : memref<18x18x32xf32, #tpu.memory_space<vmem>>, vector<16x16x32xf32>,
    %c0_13 = arith.constant 0 : index
    %c0_14 = arith.constant 0 : index
    %c0_15 = arith.constant 0 : index
    %13 = vector.load %arg9[%c0_13, %c0_14, %c0_15] : memref<18x18x32xf32, #tpu.memory_space<vmem>>, vector<16x16x32xf32>
    %14 = vector.shape_cast %13 : vector<16x16x32xf32> to vector<256x32xf32>
    %c0_16 = arith.constant 0 : index
    %c1_17 = arith.constant 1 : index
    %c0_18 = arith.constant 0 : index
    %15 = vector.load %arg9[%c0_16, %c1_17, %c0_18] : memref<18x18x32xf32, #tpu.memory_space<vmem>>, vector<16x16x32xf32>
    %16 = vector.shape_cast %15 : vector<16x16x32xf32> to vector<256x32xf32>
    %c0_19 = arith.constant 0 : index
    %c2 = arith.constant 2 : index
    %c0_20 = arith.constant 0 : index
    %17 = vector.load %arg9[%c0_19, %c2, %c0_20] : memref<18x18x32xf32, #tpu.memory_space<vmem>>, vector<16x16x32xf32>
    %18 = vector.shape_cast %17 : vector<16x16x32xf32> to vector<256x32xf32>
    %c1_21 = arith.constant 1 : index
    %c0_22 = arith.constant 0 : index
    %c0_23 = arith.constant 0 : index
    %19 = vector.load %arg9[%c1_21, %c0_22, %c0_23] : memref<18x18x32xf32, #tpu.memory_space<vmem>>, vector<16x16x32xf32>
    %20 = vector.shape_cast %19 : vector<16x16x32xf32> to vector<256x32xf32>
    %c1_24 = arith.constant 1 : index
    %c1_25 = arith.constant 1 : index
    %c0_26 = arith.constant 0 : index
    %21 = vector.load %arg9[%c1_24, %c1_25, %c0_26] : memref<18x18x32xf32, #tpu.memory_space<vmem>>, vector<16x16x32xf32>
    %22 = vector.shape_cast %21 : vector<16x16x32xf32> to vector<256x32xf32>
    %c1_27 = arith.constant 1 : index
    %c2_28 = arith.constant 2 : index
    %c0_29 = arith.constant 0 : index
    %23 = vector.load %arg9[%c1_27, %c2_28, %c0_29] : memref<18x18x32xf32, #tpu.memory_space<vmem>>, vector<16x16x32xf32>
    %24 = vector.shape_cast %23 : vector<16x16x32xf32> to vector<256x32xf32>
    %c2_30 = arith.constant 2 : index
    %c0_31 = arith.constant 0 : index
    %c0_32 = arith.constant 0 : index
    %25 = vector.load %arg9[%c2_30, %c0_31, %c0_32] : memref<18x18x32xf32, #tpu.memory_space<vmem>>, vector<16x16x32xf32>
    %26 = vector.shape_cast %25 : vector<16x16x32xf32> to vector<256x32xf32>
    %c2_33 = arith.constant 2 : index
    %c1_34 = arith.constant 1 : index
    %c0_35 = arith.constant 0 : index
    %27 = vector.load %arg9[%c2_33, %c1_34, %c0_35] : memref<18x18x32xf32, #tpu.memory_space<vmem>>, vector<16x16x32xf32>
    %28 = vector.shape_cast %27 : vector<16x16x32xf32> to vector<256x32xf32>
    %c2_36 = arith.constant 2 : index
    %c2_37 = arith.constant 2 : index
    %c0_38 = arith.constant 0 : index
    %29 = vector.load %arg9[%c2_36, %c2_37, %c0_38] : memref<18x18x32xf32, #tpu.memory_space<vmem>>, vector<16x16x32xf32>
    %30 = vector.shape_cast %29 : vector<16x16x32xf32> to vector<256x32xf32>
    %31 = tpu.concatenate %14, %16, %18, %20, %22, %24, %26, %28, %30 in 1 : vector<256x32xf32>, vector<256x32xf32>, vector<256x32xf32>, vector<256x32xf32>, vector<256x32xf32>, vector<256x32xf32>, vector<256x32xf32>, vector<256x32xf32>, vector<256x32xf32> -> vector<256x288xf32>
    %32 = arith.truncf %31 : vector<256x288xf32> to vector<256x288xbf16>
    %c0_39 = arith.constant 0 : index
    %c0_40 = arith.constant 0 : index
    %33 = vector.load %arg4[%c0_39, %c0_40] : memref<288x64xbf16, #tpu.memory_space<vmem>>, vector<288x64xbf16>
    %cst_41 = arith.constant dense<0.000000e+00> : vector<256x64xf32>
    %34 = tpu.matmul %32, %33, %cst_41 {dimension_numbers = #tpu.dot_dimension_numbers<[1], [0], [0], [1], [0, 0, 1, 1], [], []>} : vector<256x288xbf16>, vector<288x64xbf16>, vector<256x64xf32> -> vector<256x64xf32>
    %c0_42 = arith.constant 0 : index
    %c0_43 = arith.constant 0 : index
    %35 = vector.load %arg5[%c0_42, %c0_43] : memref<1x64xf32, #tpu.memory_space<vmem>>, vector<1x64xf32>
    %36 = vector.broadcast %35 : vector<1x64xf32> to vector<256x64xf32>
    %37 = arith.addf %34, %36 : vector<256x64xf32>
    %cst_44 = arith.constant 0.000000e+00 : f32
    %38 = vector.broadcast %cst_44 : f32 to vector<256x64xf32>
    %39 = arith.maximumf %37, %38 : vector<256x64xf32>
    %cst_45 = arith.constant 0.000000e+00 : f32
    %40 = vector.broadcast %cst_45 : f32 to vector<18x18x64xf32>
    %c0_46 = arith.constant 0 : index
    %c0_47 = arith.constant 0 : index
    %c0_48 = arith.constant 0 : index
    %41 = vector.load %arg10[%c0_46, %c0_47, %c0_48] : memref<18x18x64xf32, #tpu.memory_space<vmem>>, vector<18x18x64xf32>
    tpu.vector_store %arg10[%c0_46, %c0_47, %c0_48], %40 {strides = array<i32>} : memref<18x18x64xf32, #tpu.memory_space<vmem>>, vector<18x18x64xf32>,
    %42 = vector.shape_cast %39 : vector<256x64xf32> to vector<16x16x64xf32>
    %c1_49 = arith.constant 1 : index
    %c1_50 = arith.constant 1 : index
    %c0_51 = arith.constant 0 : index
    %43 = vector.load %arg10[%c1_49, %c1_50, %c0_51] : memref<18x18x64xf32, #tpu.memory_space<vmem>>, vector<16x16x64xf32>
    tpu.vector_store %arg10[%c1_49, %c1_50, %c0_51], %42 {strides = array<i32>} : memref<18x18x64xf32, #tpu.memory_space<vmem>>, vector<16x16x64xf32>,
    %c0_52 = arith.constant 0 : index
    %c0_53 = arith.constant 0 : index
    %c0_54 = arith.constant 0 : index
    %44 = vector.load %arg10[%c0_52, %c0_53, %c0_54] : memref<18x18x64xf32, #tpu.memory_space<vmem>>, vector<16x16x64xf32>
    %45 = vector.shape_cast %44 : vector<16x16x64xf32> to vector<256x64xf32>
    %c0_55 = arith.constant 0 : index
    %c1_56 = arith.constant 1 : index
    %c0_57 = arith.constant 0 : index
    %46 = vector.load %arg10[%c0_55, %c1_56, %c0_57] : memref<18x18x64xf32, #tpu.memory_space<vmem>>, vector<16x16x64xf32>
    %47 = vector.shape_cast %46 : vector<16x16x64xf32> to vector<256x64xf32>
    %c0_58 = arith.constant 0 : index
    %c2_59 = arith.constant 2 : index
    %c0_60 = arith.constant 0 : index
    %48 = vector.load %arg10[%c0_58, %c2_59, %c0_60] : memref<18x18x64xf32, #tpu.memory_space<vmem>>, vector<16x16x64xf32>
    %49 = vector.shape_cast %48 : vector<16x16x64xf32> to vector<256x64xf32>
    %c1_61 = arith.constant 1 : index
    %c0_62 = arith.constant 0 : index
    %c0_63 = arith.constant 0 : index
    %50 = vector.load %arg10[%c1_61, %c0_62, %c0_63] : memref<18x18x64xf32, #tpu.memory_space<vmem>>, vector<16x16x64xf32>
    %51 = vector.shape_cast %50 : vector<16x16x64xf32> to vector<256x64xf32>
    %c1_64 = arith.constant 1 : index
    %c1_65 = arith.constant 1 : index
    %c0_66 = arith.constant 0 : index
    %52 = vector.load %arg10[%c1_64, %c1_65, %c0_66] : memref<18x18x64xf32, #tpu.memory_space<vmem>>, vector<16x16x64xf32>
    %53 = vector.shape_cast %52 : vector<16x16x64xf32> to vector<256x64xf32>
    %c1_67 = arith.constant 1 : index
    %c2_68 = arith.constant 2 : index
    %c0_69 = arith.constant 0 : index
    %54 = vector.load %arg10[%c1_67, %c2_68, %c0_69] : memref<18x18x64xf32, #tpu.memory_space<vmem>>, vector<16x16x64xf32>
    %55 = vector.shape_cast %54 : vector<16x16x64xf32> to vector<256x64xf32>
    %c2_70 = arith.constant 2 : index
    %c0_71 = arith.constant 0 : index
    %c0_72 = arith.constant 0 : index
    %56 = vector.load %arg10[%c2_70, %c0_71, %c0_72] : memref<18x18x64xf32, #tpu.memory_space<vmem>>, vector<16x16x64xf32>
    %57 = vector.shape_cast %56 : vector<16x16x64xf32> to vector<256x64xf32>
    %c2_73 = arith.constant 2 : index
    %c1_74 = arith.constant 1 : index
    %c0_75 = arith.constant 0 : index
    %58 = vector.load %arg10[%c2_73, %c1_74, %c0_75] : memref<18x18x64xf32, #tpu.memory_space<vmem>>, vector<16x16x64xf32>
    %59 = vector.shape_cast %58 : vector<16x16x64xf32> to vector<256x64xf32>
    %c2_76 = arith.constant 2 : index
    %c2_77 = arith.constant 2 : index
    %c0_78 = arith.constant 0 : index
    %60 = vector.load %arg10[%c2_76, %c2_77, %c0_78] : memref<18x18x64xf32, #tpu.memory_space<vmem>>, vector<16x16x64xf32>
    %61 = vector.shape_cast %60 : vector<16x16x64xf32> to vector<256x64xf32>
    %62 = tpu.concatenate %45, %47, %49, %51, %53, %55, %57, %59, %61 in 1 : vector<256x64xf32>, vector<256x64xf32>, vector<256x64xf32>, vector<256x64xf32>, vector<256x64xf32>, vector<256x64xf32>, vector<256x64xf32>, vector<256x64xf32>, vector<256x64xf32> -> vector<256x576xf32>
    %63 = arith.truncf %62 : vector<256x576xf32> to vector<256x576xbf16>
    %c0_79 = arith.constant 0 : index
    %c0_80 = arith.constant 0 : index
    %64 = vector.load %arg6[%c0_79, %c0_80] : memref<576x64xbf16, #tpu.memory_space<vmem>>, vector<576x64xbf16>
    %cst_81 = arith.constant dense<0.000000e+00> : vector<256x64xf32>
    %65 = tpu.matmul %63, %64, %cst_81 {dimension_numbers = #tpu.dot_dimension_numbers<[1], [0], [0], [1], [0, 0, 1, 1], [], []>} : vector<256x576xbf16>, vector<576x64xbf16>, vector<256x64xf32> -> vector<256x64xf32>
    %c0_82 = arith.constant 0 : index
    %c0_83 = arith.constant 0 : index
    %66 = vector.load %arg7[%c0_82, %c0_83] : memref<1x64xf32, #tpu.memory_space<vmem>>, vector<1x64xf32>
    %67 = vector.broadcast %66 : vector<1x64xf32> to vector<256x64xf32>
    %68 = arith.addf %65, %67 : vector<256x64xf32>
    %cst_84 = arith.constant 0.000000e+00 : f32
    %69 = vector.broadcast %cst_84 : f32 to vector<256x64xf32>
    %70 = arith.maximumf %68, %69 : vector<256x64xf32>
    %71 = tpu.transpose %70, [1, 0] : vector<256x64xf32> -> vector<64x256xf32>
    %c0_85 = arith.constant 0 : index
    %c0_86 = arith.constant 0 : index
    %c0_87 = arith.constant 0 : index
    %72 = vector.load %arg8[%c0_85, %c0_86, %c0_87] : memref<1x64x256xf32, #tpu.memory_space<vmem>>, vector<1x64x256xf32>
    %73 = vector.shape_cast %72 : vector<1x64x256xf32> to vector<64x256xf32>
    %74 = vector.shape_cast %71 : vector<64x256xf32> to vector<1x64x256xf32>
    tpu.vector_store %arg8[%c0_85, %c0_86, %c0_87], %74 {strides = array<i32>} : memref<1x64x256xf32, #tpu.memory_space<vmem>>, vector<1x64x256xf32>,
    return
  }
  func.func @transform_0(%arg0: i32) -> (i32, i32, i32) {
    %c0_i32 = arith.constant 0 : i32
    %c0_i32_0 = arith.constant 0 : i32
    %c0_i32_1 = arith.constant 0 : i32
    return %arg0, %c0_i32, %c0_i32_0 : i32, i32, i32
  }
  func.func @transform_1(%arg0: i32) -> (i32, i32) {
    %c0_i32 = arith.constant 0 : i32
    %c0_i32_0 = arith.constant 0 : i32
    %c0_i32_1 = arith.constant 0 : i32
    return %c0_i32, %c0_i32_0 : i32, i32
  }
  func.func @transform_2(%arg0: i32) -> (i32, i32) {
    %c0_i32 = arith.constant 0 : i32
    %c0_i32_0 = arith.constant 0 : i32
    %c0_i32_1 = arith.constant 0 : i32
    return %c0_i32, %c0_i32_0 : i32, i32
  }
  func.func @transform_3(%arg0: i32) -> (i32, i32) {
    %c0_i32 = arith.constant 0 : i32
    %c0_i32_0 = arith.constant 0 : i32
    %c0_i32_1 = arith.constant 0 : i32
    return %c0_i32, %c0_i32_0 : i32, i32
  }
  func.func @transform_4(%arg0: i32) -> (i32, i32) {
    %c0_i32 = arith.constant 0 : i32
    %c0_i32_0 = arith.constant 0 : i32
    %c0_i32_1 = arith.constant 0 : i32
    return %c0_i32, %c0_i32_0 : i32, i32
  }
  func.func @transform_5(%arg0: i32) -> (i32, i32) {
    %c0_i32 = arith.constant 0 : i32
    %c0_i32_0 = arith.constant 0 : i32
    %c0_i32_1 = arith.constant 0 : i32
    return %c0_i32, %c0_i32_0 : i32, i32
  }
  func.func @transform_6(%arg0: i32) -> (i32, i32) {
    %c0_i32 = arith.constant 0 : i32
    %c0_i32_0 = arith.constant 0 : i32
    %c0_i32_1 = arith.constant 0 : i32
    return %c0_i32, %c0_i32_0 : i32, i32
  }
  func.func @transform_7(%arg0: i32) -> (i32, i32, i32) {
    %c0_i32 = arith.constant 0 : i32
    %c0_i32_0 = arith.constant 0 : i32
    %c0_i32_1 = arith.constant 0 : i32
    return %arg0, %c0_i32, %c0_i32_0 : i32, i32, i32
  }
}

</mosaic_0001>

<llo_original>
// kernel: shared_features_forward.1
$region0: #{shared_features_forward.1}
  #allocation0 [shape = 'u32[]', space=smem, size = 0x4, offset = 0x4, fixed_abs, tag = 'smem constant byte address 0x4 - core index']
  #allocation1 [shape = 'u32[144,128]{1,0:T(1,128)}', space=vmem, size = 0x12000, scoped, tag = 'internal scratch']
  #allocation2 [shape = 'f32[18,18,32]{2,1,0:T(8,128)}', space=vmem, size = 0x36000, scoped, tag = 'scratch operand']
  #allocation3 [shape = 'f32[18,18,64]{2,1,0:T(8,128)}', space=vmem, size = 0x36000, scoped, tag = 'scratch operand']
  %s0 = inlined_call_operand.vmem [shape: bf16[2,256,36], index: 0, kind: input, shape index: {}]
  %s1 = inlined_call_operand.vmem [shape: bf16[36,32], index: 1, kind: input, shape index: {}]
  %s2 = inlined_call_operand.vmem [shape: f32[1,32], index: 2, kind: input, shape index: {}]
  %s3 = inlined_call_operand.vmem [shape: bf16[288,64], index: 3, kind: input, shape index: {}]
  %s4 = inlined_call_operand.vmem [shape: f32[1,64], index: 4, kind: input, shape index: {}]
  %s5 = inlined_call_operand.vmem [shape: bf16[576,64], index: 5, kind: input, shape index: {}]
  %s6 = inlined_call_operand.vmem [shape: f32[1,64], index: 6, kind: input, shape index: {}]
  %s7 = inlined_call_operand.vmem [shape: f32[2,64,256], index: 7, kind: output, shape index: {}]
  %s8 = sld [smem:[#allocation0]]
  $region61: #{shared_features_forward.1} parent=0
    _
  %s10 = ssub.s32 1, %s8
  %s11 = scalar_select 0, %s10, %s8
  loop: start=0, step=1, limit=4
  $region2: #{shared_features_forward.1} parent=0 // loop_pre_header
    _
  $region3: #{shared_features_forward.1} parent=0 // loop_header
    %s13 = sphi 0, %s17
    %p14 = scmp.ge.s32.totalorder %s13, 4
    %s23 = sphi 0, %s25
    %s26 = sphi 0, %s23
    %s27 = sphi 0, %s26
    %s43 = sphi 0, %s27
    %s47 = sphi 0, %s47
    %s49 = sphi 0, %s47
    %s50 = sphi 0, %s49
    %s64 = sphi 0, %s50
    %s68 = sphi 0, %s68
    %s70 = sphi 0, %s68
    %s71 = sphi 0, %s70
    %s85 = sphi 0, %s71
    %s89 = sphi 0, %s89
    %s91 = sphi 0, %s89
    %s92 = sphi 0, %s91
    %s106 = sphi 0, %s92
    %s110 = sphi 0, %s110
    %s112 = sphi 0, %s110
    %s113 = sphi 0, %s112
    %s127 = sphi 0, %s113
    %s131 = sphi 0, %s131
    %s133 = sphi 0, %s131
    %s134 = sphi 0, %s133
    %s148 = sphi 0, %s134
    %s152 = sphi 0, %s152
    %s154 = sphi 0, %s152
    %s155 = sphi 0, %s154
    %s169 = sphi 0, %s155
    %s175 = sphi 0, %s177
    %s178 = sphi 0, %s175
    %s179 = sphi 0, %s178
    %s195 = sphi 0, %s179
  $region4: #{shared_features_forward.1} parent=0 // loop_header_branch
    %16 = sbr.rel (%p14) target = $region8
  $region5: #{shared_features_forward.1} parent=0 // loop_body
    %s18 = ssub.s32 %s13, 1
    %s19 = ssub.s32 %s13, 2
    %s20 = sadd.s32 %s13, 1
    %s21 = ssub.s32 %s13, %s20
    %p22 = scmp.eq.s32.totalorder %s21, 0
    %s24 = sadd.s32 %s23, 1
    %s25 = scalar_select %p22, %s23, %s24
    %p28 = pneg %p22
    %p29 = scmp.eq.s32.totalorder %s13, 1
    %p30 = por %p28, %p29
    %p31 = scmp.ne.s32.totalorder %s23, %s26
    %p32 = scmp.eq.s32.totalorder %s13, 0
    %p33 = por %p31, %p32
    %p34 = scmp.ne.s32.totalorder %s23, %s26
    %p35 = scmp.eq.s32.totalorder %s18, 1
    %p36 = por %p34, %p35
    %p37 = scmp.ne.s32.totalorder %s26, %s27
    %p38 = scmp.eq.s32.totalorder %s18, 0
    %p39 = por %p37, %p38
    %p40 = scmp.ne.s32.totalorder %s26, %s27
    %p41 = scmp.eq.s32.totalorder %s19, 1
    %p42 = por %p40, %p41
    %p44 = scmp.ne.s32.totalorder %s27, %s43
    %p45 = scmp.eq.s32.totalorder %s19, 0
    %p46 = por %p44, %p45
    %s48 = sadd.s32 %s47, 1
    %p51 = scmp.eq.s32.totalorder %s13, 1
    %p52 = scmp.ne.s32.totalorder %s47, %s49
    %p53 = scmp.eq.s32.totalorder %s13, 0
    %p54 = por %p52, %p53
    %p55 = scmp.ne.s32.totalorder %s47, %s49
    %p56 = scmp.eq.s32.totalorder %s18, 1
    %p57 = por %p55, %p56
    %p58 = scmp.ne.s32.totalorder %s49, %s50
    %p59 = scmp.eq.s32.totalorder %s18, 0
    %p60 = por %p58, %p59
    %p61 = scmp.ne.s32.totalorder %s49, %s50
    %p62 = scmp.eq.s32.totalorder %s19, 1
    %p63 = por %p61, %p62
    %p65 = scmp.ne.s32.totalorder %s50, %s64
    %p66 = scmp.eq.s32.totalorder %s19, 0
    %p67 = por %p65, %p66
    %s69 = sadd.s32 %s68, 1
    %p72 = scmp.eq.s32.totalorder %s13, 1
    %p73 = scmp.ne.s32.totalorder %s68, %s70
    %p74 = scmp.eq.s32.totalorder %s13, 0
    %p75 = por %p73, %p74
    %p76 = scmp.ne.s32.totalorder %s68, %s70
    %p77 = scmp.eq.s32.totalorder %s18, 1
    %p78 = por %p76, %p77
    %p79 = scmp.ne.s32.totalorder %s70, %s71
    %p80 = scmp.eq.s32.totalorder %s18, 0
    %p81 = por %p79, %p80
    %p82 = scmp.ne.s32.totalorder %s70, %s71
    %p83 = scmp.eq.s32.totalorder %s19, 1
    %p84 = por %p82, %p83
    %p86 = scmp.ne.s32.totalorder %s71, %s85
    %p87 = scmp.eq.s32.totalorder %s19, 0
    %p88 = por %p86, %p87
    %s90 = sadd.s32 %s89, 1
    %p93 = scmp.eq.s32.totalorder %s13, 1
    %p94 = scmp.ne.s32.totalorder %s89, %s91
    %p95 = scmp.eq.s32.totalorder %s13, 0
    %p96 = por %p94, %p95
    %p97 = scmp.ne.s32.totalorder %s89, %s91
    %p98 = scmp.eq.s32.totalorder %s18, 1
    %p99 = por %p97, %p98
    %p100 = scmp.ne.s32.totalorder %s91, %s92
    %p101 = scmp.eq.s32.totalorder %s18, 0
    %p102 = por %p100, %p101
    %p103 = scmp.ne.s32.totalorder %s91, %s92
    %p104 = scmp.eq.s32.totalorder %s19, 1
    %p105 = por %p103, %p104
    %p107 = scmp.ne.s32.totalorder %s92, %s106
    %p108 = scmp.eq.s32.totalorder %s19, 0
    %p109 = por %p107, %p108
    %s111 = sadd.s32 %s110, 1
    %p114 = scmp.eq.s32.totalorder %s13, 1
    %p115 = scmp.ne.s32.totalorder %s110, %s112
    %p116 = scmp.eq.s32.totalorder %s13, 0
    %p117 = por %p115, %p116
    %p118 = scmp.ne.s32.totalorder %s110, %s112
    %p119 = scmp.eq.s32.totalorder %s18, 1
    %p120 = por %p118, %p119
    %p121 = scmp.ne.s32.totalorder %s112, %s113
    %p122 = scmp.eq.s32.totalorder %s18, 0
    %p123 = por %p121, %p122
    %p124 = scmp.ne.s32.totalorder %s112, %s113
    %p125 = scmp.eq.s32.totalorder %s19, 1
    %p126 = por %p124, %p125
    %p128 = scmp.ne.s32.totalorder %s113, %s127
    %p129 = scmp.eq.s32.totalorder %s19, 0
    %p130 = por %p128, %p129
    %s132 = sadd.s32 %s131, 1
    %p135 = scmp.eq.s32.totalorder %s13, 1
    %p136 = scmp.ne.s32.totalorder %s131, %s133
    %p137 = scmp.eq.s32.totalorder %s13, 0
    %p138 = por %p136, %p137
    %p139 = scmp.ne.s32.totalorder %s131, %s133
    %p140 = scmp.eq.s32.totalorder %s18, 1
    %p141 = por %p139, %p140
    %p142 = scmp.ne.s32.totalorder %s133, %s134
    %p143 = scmp.eq.s32.totalorder %s18, 0
    %p144 = por %p142, %p143
    %p145 = scmp.ne.s32.totalorder %s133, %s134
    %p146 = scmp.eq.s32.totalorder %s19, 1
    %p147 = por %p145, %p146
    %p149 = scmp.ne.s32.totalorder %s134, %s148
    %p150 = scmp.eq.s32.totalorder %s19, 0
    %p151 = por %p149, %p150
    %s153 = sadd.s32 %s152, 1
    %p156 = scmp.eq.s32.totalorder %s13, 1
    %p157 = scmp.ne.s32.totalorder %s152, %s154
    %p158 = scmp.eq.s32.totalorder %s13, 0
    %p159 = por %p157, %p158
    %p160 = scmp.ne.s32.totalorder %s152, %s154
    %p161 = scmp.eq.s32.totalorder %s18, 1
    %p162 = por %p160, %p161
    %p163 = scmp.ne.s32.totalorder %s154, %s155
    %p164 = scmp.eq.s32.totalorder %s18, 0
    %p165 = por %p163, %p164
    %p166 = scmp.ne.s32.totalorder %s154, %s155
    %p167 = scmp.eq.s32.totalorder %s19, 1
    %p168 = por %p166, %p167
    %p170 = scmp.ne.s32.totalorder %s155, %s169
    %p171 = scmp.eq.s32.totalorder %s19, 0
    %p172 = por %p170, %p171
    %s173 = ssub.s32 %s13, %s20
    %p174 = scmp.eq.s32.totalorder %s173, 0
    %s176 = sadd.s32 %s175, 1
    %s177 = scalar_select %p174, %s175, %s176
    %p180 = pneg %p174
    %p181 = scmp.eq.s32.totalorder %s13, 1
    %p182 = por %p180, %p181
    %p183 = scmp.ne.s32.totalorder %s175, %s178
    %p184 = scmp.eq.s32.totalorder %s13, 0
    %p185 = por %p183, %p184
    %p186 = scmp.ne.s32.totalorder %s175, %s178
    %p187 = scmp.eq.s32.totalorder %s18, 1
    %p188 = por %p186, %p187
    %p189 = scmp.ne.s32.totalorder %s178, %s179
    %p190 = scmp.eq.s32.totalorder %s18, 0
    %p191 = por %p189, %p190
    %p192 = scmp.ne.s32.totalorder %s178, %s179
    %p193 = scmp.eq.s32.totalorder %s19, 1
    %p194 = por %p192, %p193
    %p196 = scmp.ne.s32.totalorder %s179, %s195
    %p197 = scmp.eq.s32.totalorder %s19, 0
    %p198 = por %p196, %p197
    %p199 = scmp.le.s32.totalorder 1, %s13
    %p200 = scmp.lt.s32.totalorder %s13, 3
    %p201 = pnand %p199, %p200
    %p202 = pneg %p201
    // Predicated region
    $region9: #{shared_features_forward.1} parent=5 // pred_check
      _
    $region10: #{shared_features_forward.1} parent=5 // pred_check_branch
      %204 = sbr.rel (%p201) target = $region12
    $region11: #{shared_features_forward.1} parent=5 // pred_region
      %s205 = ssub.s32 %s13, 1
      // Predicated region
      $region13: #{shared_features_forward.1} parent=11 // pred_check
        %p206 = pneg %p60
      $region14: #{shared_features_forward.1} parent=11 // pred_check_branch
        %208 = sbr.rel (%p206) target = $region16
      $region15: #{shared_features_forward.1} parent=11 // pred_region
        _
      $region16: #{shared_features_forward.1} parent=11 // pred_fallthru
        _
      // Predicated region
      $region17: #{shared_features_forward.1} parent=11 // pred_check
        %p209 = pneg %p81
      $region18: #{shared_features_forward.1} parent=11 // pred_check_branch
        %211 = sbr.rel (%p209) target = $region20
      $region19: #{shared_features_forward.1} parent=11 // pred_region
        _
      $region20: #{shared_features_forward.1} parent=11 // pred_fallthru
        _
      // Predicated region
      $region21: #{shared_features_forward.1} parent=11 // pred_check
        %p212 = pneg %p102
      $region22: #{shared_features_forward.1} parent=11 // pred_check_branch
        %214 = sbr.rel (%p212) target = $region24
      $region23: #{shared_features_forward.1} parent=11 // pred_region
        _
      $region24: #{shared_features_forward.1} parent=11 // pred_fallthru
        _
      // Predicated region
      $region25: #{shared_features_forward.1} parent=11 // pred_check
        %p215 = pneg %p123
      $region26: #{shared_features_forward.1} parent=11 // pred_check_branch
        %217 = sbr.rel (%p215) target = $region28
      $region27: #{shared_features_forward.1} parent=11 // pred_region
        _
      $region28: #{shared_features_forward.1} parent=11 // pred_fallthru
        _
      // Predicated region
      $region29: #{shared_features_forward.1} parent=11 // pred_check
        %p218 = pneg %p144
      $region30: #{shared_features_forward.1} parent=11 // pred_check_branch
        %220 = sbr.rel (%p218) target = $region32
      $region31: #{shared_features_forward.1} parent=11 // pred_region
        _
      $region32: #{shared_features_forward.1} parent=11 // pred_fallthru
        _
      // Predicated region
      $region33: #{shared_features_forward.1} parent=11 // pred_check
        %p221 = pneg %p165
      $region34: #{shared_features_forward.1} parent=11 // pred_check_branch
        %223 = sbr.rel (%p221) target = $region36
      $region35: #{shared_features_forward.1} parent=11 // pred_region
        _
      $region36: #{shared_features_forward.1} parent=11 // pred_fallthru
        _
    $region12: #{shared_features_forward.1} parent=5 // pred_fallthru
      _
    %p224 = scmp.lt.s32.totalorder %s13, 2
    // Predicated region
    $region37: #{shared_features_forward.1} parent=5 // pred_check
      %p225 = pneg %p224
    $region38: #{shared_features_forward.1} parent=5 // pred_check_branch
      %227 = sbr.rel (%p225) target = $region40
    $region39: #{shared_features_forward.1} parent=5 // pred_region
      // Predicated region
      $region41: #{shared_features_forward.1} parent=39 // pred_check
        %p228 = pneg %p33
      $region42: #{shared_features_forward.1} parent=39 // pred_check_branch
        %230 = sbr.rel (%p228) target = $region44
      $region43: #{shared_features_forward.1} parent=39 // pred_region
        %p231 = scmp.lt.s32.totalorder %s13, 1
        %s232 = scalar_select %p231, %s13, 1
        %s233 = smul.addr %s232, 32
        %s234 = smul.addr %s233, 4
        %s235 = scalar_lea.vmem %s0, %s234
      $region44: #{shared_features_forward.1} parent=39 // pred_fallthru
        _
    $region40: #{shared_features_forward.1} parent=5 // pred_fallthru
      _
    %p236 = scmp.le.s32.totalorder 1, %s13
    %p237 = scmp.lt.s32.totalorder %s13, 3
    %p238 = pnand %p236, %p237
    %p239 = pneg %p238
    // Predicated region
    $region45: #{shared_features_forward.1} parent=5 // pred_check
      _
    $region46: #{shared_features_forward.1} parent=5 // pred_check_branch
      %241 = sbr.rel (%p238) target = $region48
    $region47: #{shared_features_forward.1} parent=5 // pred_region
      %s242 = ssub.s32 %s13, 1
      %p243 = scmp.lt.s32.totalorder %s18, 1
      %s244 = scalar_select %p243, %s18, 1
      %s245 = smul.addr %s244, 32
      %s246 = smul.addr %s245, 4
      %s247 = scalar_lea.vmem %s0, %s246
      %p248 = pneg %p39
      %p249 = pneg %p36
      %p250 = pneg %p60
      %p251 = pneg %p57
      %p252 = pneg %p81
      %p253 = pneg %p78
      %p254 = pneg %p102
      %p255 = pneg %p99
      %p256 = pneg %p123
      %p257 = pneg %p120
      %p258 = pneg %p144
      %p259 = pneg %p141
      %p260 = pneg %p165
      %p261 = pneg %p162
      %p262 = pneg %p191
      %p263 = pneg %p188
      %p264 = scmp.lt.s32.totalorder %s18, 1
      %s265 = scalar_select %p264, %s18, 1
      %s266 = smul.addr %s265, 16
      %s267 = smul.addr %s266, 8
      %s268 = scalar_lea.vmem %s7, %s267
      %p269 = scmp.lt.s32.totalorder %s18, 1
      %s270 = scalar_select %p269, %s18, 1
      %s271 = smul.addr %s270, 32
      %s272 = smul.addr %s271, 4
      %s273 = scalar_lea.vmem %s0, %s272
      %p274 = scmp.lt.s32.totalorder %s18, 1
      %s275 = scalar_select %p274, %s18, 1
      %s276 = smul.addr %s275, 16
      %s277 = smul.addr %s276, 8
      %s278 = scalar_lea.vmem %s7, %s277
      %v280 = vld [vmem:[%s273] sm:$0xf]
      %v281 = vld [vmem:[%s273 + $0x4] sm:$0xf]
      %v282 = vld [vmem:[%s273 + $0x8] sm:$0xf]
      %v283 = vld [vmem:[%s273 + $0xc] sm:$0xf]
      %v284 = vld [vmem:[%s273 + $0x10] sm:$0xf]
      %v285 = vld [vmem:[%s273 + $0x14] sm:$0xf]
      %v286 = vld [vmem:[%s273 + $0x18] sm:$0xf]
      %v287 = vld [vmem:[%s273 + $0x1c] sm:$0xf]
      %v288 = vld [vmem:[%s273 + $0x20] sm:$0xf]
      %v289 = vld [vmem:[%s273 + $0x24] sm:$0xf]
      %v290 = vld [vmem:[%s273 + $0x28] sm:$0xf]
      %v291 = vld [vmem:[%s273 + $0x2c] sm:$0xf]
      %v292 = vld [vmem:[%s273 + $0x30] sm:$0xf]
      %v293 = vld [vmem:[%s273 + $0x34] sm:$0xf]
      %v294 = vld [vmem:[%s273 + $0x38] sm:$0xf]
      %v295 = vld [vmem:[%s273 + $0x3c] sm:$0xf]
      %v296 = vld [vmem:[%s273 + $0x40] sm:$0xf]
      %v297 = vld [vmem:[%s273 + $0x44] sm:$0xf]
      %v298 = vld [vmem:[%s273 + $0x48] sm:$0xf]
      %v299 = vld [vmem:[%s273 + $0x4c] sm:$0xf]
      %v300 = vld [vmem:[%s273 + $0x50] sm:$0xf]
      %v301 = vld [vmem:[%s273 + $0x54] sm:$0xf]
      %v302 = vld [vmem:[%s273 + $0x58] sm:$0xf]
      %v303 = vld [vmem:[%s273 + $0x5c] sm:$0xf]
      %v304 = vld [vmem:[%s273 + $0x60] sm:$0xf]
      %v305 = vld [vmem:[%s273 + $0x64] sm:$0xf]
      %v306 = vld [vmem:[%s273 + $0x68] sm:$0xf]
      %v307 = vld [vmem:[%s273 + $0x6c] sm:$0xf]
      %v308 = vld [vmem:[%s273 + $0x70] sm:$0xf]
      %v309 = vld [vmem:[%s273 + $0x74] sm:$0xf]
      %v310 = vld [vmem:[%s273 + $0x78] sm:$0xf]
      %v311 = vld [vmem:[%s273 + $0x7c] sm:$0xf]
      %v312 = vld [vmem:[%s1] sm:$0xf]
      %v313 = vld [vmem:[%s1 + $0x4] sm:$0xf]
      %v314 = vld [vmem:[%s1 + $0x8] sm:$0xf]
      %v315 = vld [vmem:[%s1 + $0xc] sm:$0xf]
      %v316 = vld [vmem:[%s1 + $0x10] sm:$0x3]
      %v317 = vld [vmem:[%s2] sm:$0x1]
      %v319 = vlaneseq
      %v320 = vshrl.u32 %v319, 7
      %v321 = vsub.s32 0, %v320
      %v322 = vrot.slane %v317, %v321
      %v356 = vunpack.c.l.b16 %v280
      %v357 = vunpack.c.l.b16 %v281
      %v358 = vunpack.c.l.b16 %v282
      %v359 = vunpack.c.l.b16 %v283
      %v360 = vunpack.c.l.b16 %v284
      %v361 = vunpack.c.l.b16 %v285
      %v362 = vunpack.c.l.b16 %v286
      %v363 = vunpack.c.l.b16 %v287
      %v364 = vunpack.c.l.b16 %v288
      %v365 = vunpack.c.l.b16 %v289
      %v366 = vunpack.c.l.b16 %v290
      %v367 = vunpack.c.l.b16 %v291
      %v368 = vunpack.c.l.b16 %v292
      %v369 = vunpack.c.l.b16 %v293
      %v370 = vunpack.c.l.b16 %v294
      %v371 = vunpack.c.l.b16 %v295
      %v372 = vunpack.c.l.b16 %v296
      %v373 = vunpack.c.l.b16 %v297
      %v374 = vunpack.c.l.b16 %v298
      %v375 = vunpack.c.l.b16 %v299
      %v376 = vunpack.c.l.b16 %v300
      %v377 = vunpack.c.l.b16 %v301
      %v378 = vunpack.c.l.b16 %v302
      %v379 = vunpack.c.l.b16 %v303
      %v380 = vunpack.c.l.b16 %v304
      %v381 = vunpack.c.l.b16 %v305
      %v382 = vunpack.c.l.b16 %v306
      %v383 = vunpack.c.l.b16 %v307
      %v384 = vunpack.c.l.b16 %v308
      %v385 = vunpack.c.l.b16 %v309
      %v386 = vunpack.c.l.b16 %v310
      %v387 = vunpack.c.l.b16 %v311
      %v388 = vpack.c.b16 %v357, %v356
      %v389 = vpack.c.b16 %v359, %v358
      %v390 = vpack.c.b16 %v361, %v360
      %v391 = vpack.c.b16 %v363, %v362
      %v392 = vpack.c.b16 %v365, %v364
      %v393 = vpack.c.b16 %v367, %v366
      %v394 = vpack.c.b16 %v369, %v368
      %v395 = vpack.c.b16 %v371, %v370
      %v396 = vpack.c.b16 %v373, %v372
      %v397 = vpack.c.b16 %v375, %v374
      %v398 = vpack.c.b16 %v377, %v376
      %v399 = vpack.c.b16 %v379, %v378
      %v400 = vpack.c.b16 %v381, %v380
      %v401 = vpack.c.b16 %v383, %v382
      %v402 = vpack.c.b16 %v385, %v384
      %v403 = vpack.c.b16 %v387, %v386
      %v409 = vunpack.c.l.b16 %v312
      %v410 = vunpack.c.l.b16 %v313
      %v411 = vunpack.c.l.b16 %v314
      %v412 = vunpack.c.l.b16 %v315
      %v413 = vunpack.c.l.b16 %v316
      %v414 = vpack.c.b16 %v410, %v409
      %v415 = vpack.c.b16 %v412, %v411
      %v416 = vpack.c.b16 %v413, %v413
      %vm419 = vcmask 293888
      %v421 = vsel %vm419, %v388, 0
      %v424 = vsel %vm419, %v389, 0
      %v427 = vsel %vm419, %v390, 0
      %v430 = vsel %vm419, %v391, 0
      %v433 = vsel %vm419, %v392, 0
      %v436 = vsel %vm419, %v393, 0
      %v439 = vsel %vm419, %v394, 0
      %v442 = vsel %vm419, %v395, 0
      %v445 = vsel %vm419, %v396, 0
      %v448 = vsel %vm419, %v397, 0
      %v451 = vsel %vm419, %v398, 0
      %v454 = vsel %vm419, %v399, 0
      %v457 = vsel %vm419, %v400, 0
      %v460 = vsel %vm419, %v401, 0
      %v463 = vsel %vm419, %v402, 0
      %v466 = vsel %vm419, %v403, 0
      %vm468 = vcmask 1041408
      %v470 = vsel %vm468, %v416, 0
      %472 = vmatprep.subr.bf16.mxu0 0
      %473 = vmatpush1.bf16.msra.mxu0 0
      %474 = vmatprep.subr.bf16.mxu0 0
      %475 = vmatpush1.bf16.msra.mxu0 0
      %476 = vmatprep.subr.bf16.mxu0 0
      %477 = vmatpush1.bf16.msra.mxu0 0
      %478 = vmatprep.subr.bf16.mxu0 0
      %479 = vmatpush1.bf16.msra.mxu0 0
      %480 = vmatprep.subr.bf16.mxu0 0
      %481 = vmatpush1.bf16.msra.mxu0 0
      %482 = vmatprep.subr.bf16.mxu0 0
      %483 = vmatpush1.bf16.msra.mxu0 %v470
      %484 = vmatprep.subr.bf16.mxu0 0
      %485 = vmatpush1.bf16.msra.mxu0 %v415
      %486 = vmatprep.subr.bf16.mxu0 0
      %487 = vmatpush1.bf16.msra.mxu0 %v414
      %488 = vmatprep.subr.bf16.mxu0 0
      %489 = vmatpush2.bf16.msra.mxu0 0
      %490 = vmatprep.subr.bf16.mxu0 0
      %491 = vmatpush2.bf16.msra.mxu0 0
      %492 = vmatprep.subr.bf16.mxu0 0
      %493 = vmatpush2.bf16.msra.mxu0 0
      %494 = vmatprep.subr.bf16.mxu0 0
      %495 = vmatpush2.bf16.msra.mxu0 0
      %496 = vmatprep.subr.bf16.mxu0 0
      %497 = vmatpush2.bf16.msra.mxu0 0
      %498 = vmatprep.subr.bf16.mxu0 0
      %499 = vmatpush2.bf16.msra.mxu0 0
      %500 = vmatprep.subr.bf16.mxu0 0
      %501 = vmatpush2.bf16.msra.mxu0 0
      %502 = vmatprep.subr.bf16.mxu0 0
      %503 = vmatpush2.bf16.msra.mxu0 0
      %504 = vmatprep.mubr.bf16.mxu0 0
      %505 = vmatmul.mubr.bf16.gmra.mxu0 %v421
      %v506 = vpop.f32.mrf.mxu0
      %v507 = vadd.f32 %v322, %v506
      %v508 = vpop.f32.mrf.mxu0
      %v509 = vpop.f32.mrf.mxu0
      %v510 = vadd.f32 %v322, %v509
      %v511 = vpop.f32.mrf.mxu0
      %512 = vmatprep.mubr.bf16.mxu0 0
      %513 = vmatmul.mubr.bf16.gmra.mxu0 %v424
      %v514 = vpop.f32.mrf.mxu0
      %v515 = vadd.f32 %v322, %v514
      %v516 = vpop.f32.mrf.mxu0
      %v517 = vpop.f32.mrf.mxu0
      %v518 = vadd.f32 %v322, %v517
      %v519 = vpop.f32.mrf.mxu0
      %520 = vmatprep.mubr.bf16.mxu0 0
      %521 = vmatmul.mubr.bf16.gmra.mxu0 %v427
      %v522 = vpop.f32.mrf.mxu0
      %v523 = vadd.f32 %v322, %v522
      %v524 = vpop.f32.mrf.mxu0
      %v525 = vpop.f32.mrf.mxu0
      %v526 = vadd.f32 %v322, %v525
      %v527 = vpop.f32.mrf.mxu0
      %528 = vmatprep.mubr.bf16.mxu0 0
      %529 = vmatmul.mubr.bf16.gmra.mxu0 %v430
      %v530 = vpop.f32.mrf.mxu0
      %v531 = vadd.f32 %v322, %v530
      %v532 = vpop.f32.mrf.mxu0
      %v533 = vpop.f32.mrf.mxu0
      %v534 = vadd.f32 %v322, %v533
      %v535 = vpop.f32.mrf.mxu0
      %536 = vmatprep.mubr.bf16.mxu0 0
      %537 = vmatmul.mubr.bf16.gmra.mxu0 %v433
      %v538 = vpop.f32.mrf.mxu0
      %v539 = vadd.f32 %v322, %v538
      %v540 = vpop.f32.mrf.mxu0
      %v541 = vpop.f32.mrf.mxu0
      %v542 = vadd.f32 %v322, %v541
      %v543 = vpop.f32.mrf.mxu0
      %544 = vmatprep.mubr.bf16.mxu0 0
      %545 = vmatmul.mubr.bf16.gmra.mxu0 %v436
      %v546 = vpop.f32.mrf.mxu0
      %v547 = vadd.f32 %v322, %v546
      %v548 = vpop.f32.mrf.mxu0
      %v549 = vpop.f32.mrf.mxu0
      %v550 = vadd.f32 %v322, %v549
      %v551 = vpop.f32.mrf.mxu0
      %552 = vmatprep.mubr.bf16.mxu0 0
      %553 = vmatmul.mubr.bf16.gmra.mxu0 %v439
      %v554 = vpop.f32.mrf.mxu0
      %v555 = vadd.f32 %v322, %v554
      %v556 = vpop.f32.mrf.mxu0
      %v557 = vpop.f32.mrf.mxu0
      %v558 = vadd.f32 %v322, %v557
      %v559 = vpop.f32.mrf.mxu0
      %560 = vmatprep.mubr.bf16.mxu0 0
      %561 = vmatmul.mubr.bf16.gmra.mxu0 %v442
      %v562 = vpop.f32.mrf.mxu0
      %v563 = vadd.f32 %v322, %v562
      %v564 = vpop.f32.mrf.mxu0
      %v565 = vpop.f32.mrf.mxu0
      %v566 = vadd.f32 %v322, %v565
      %v567 = vpop.f32.mrf.mxu0
      %568 = vmatprep.mubr.bf16.mxu0 0
      %569 = vmatmul.mubr.bf16.gmra.mxu0 %v445
      %v570 = vpop.f32.mrf.mxu0
      %v571 = vadd.f32 %v322, %v570
      %v572 = vpop.f32.mrf.mxu0
      %v573 = vpop.f32.mrf.mxu0
      %v574 = vadd.f32 %v322, %v573
      %v575 = vpop.f32.mrf.mxu0
      %576 = vmatprep.mubr.bf16.mxu0 0
      %577 = vmatmul.mubr.bf16.gmra.mxu0 %v448
      %v578 = vpop.f32.mrf.mxu0
      %v579 = vadd.f32 %v322, %v578
      %v580 = vpop.f32.mrf.mxu0
      %v581 = vpop.f32.mrf.mxu0
      %v582 = vadd.f32 %v322, %v581
      %v583 = vpop.f32.mrf.mxu0
      %584 = vmatprep.mubr.bf16.mxu0 0
      %585 = vmatmul.mubr.bf16.gmra.mxu0 %v451
      %v586 = vpop.f32.mrf.mxu0
      %v587 = vadd.f32 %v322, %v586
      %v588 = vpop.f32.mrf.mxu0
      %v589 = vpop.f32.mrf.mxu0
      %v590 = vadd.f32 %v322, %v589
      %v591 = vpop.f32.mrf.mxu0
      %592 = vmatprep.mubr.bf16.mxu0 0
      %593 = vmatmul.mubr.bf16.gmra.mxu0 %v454
      %v594 = vpop.f32.mrf.mxu0
      %v595 = vadd.f32 %v322, %v594
      %v596 = vpop.f32.mrf.mxu0
      %v597 = vpop.f32.mrf.mxu0
      %v598 = vadd.f32 %v322, %v597
      %v599 = vpop.f32.mrf.mxu0
      %600 = vmatprep.mubr.bf16.mxu0 0
      %601 = vmatmul.mubr.bf16.gmra.mxu0 %v457
      %v602 = vpop.f32.mrf.mxu0
      %v603 = vadd.f32 %v322, %v602
      %v604 = vpop.f32.mrf.mxu0
      %v605 = vpop.f32.mrf.mxu0
      %v606 = vadd.f32 %v322, %v605
      %v607 = vpop.f32.mrf.mxu0
      %608 = vmatprep.mubr.bf16.mxu0 0
      %609 = vmatmul.mubr.bf16.gmra.mxu0 %v460
      %v610 = vpop.f32.mrf.mxu0
      %v611 = vadd.f32 %v322, %v610
      %v612 = vpop.f32.mrf.mxu0
      %v613 = vpop.f32.mrf.mxu0
      %v614 = vadd.f32 %v322, %v613
      %v615 = vpop.f32.mrf.mxu0
      %616 = vmatprep.mubr.bf16.mxu0 0
      %617 = vmatmul.mubr.bf16.gmra.mxu0 %v463
      %v618 = vpop.f32.mrf.mxu0
      %v619 = vadd.f32 %v322, %v618
      %v620 = vpop.f32.mrf.mxu0
      %v621 = vpop.f32.mrf.mxu0
      %v622 = vadd.f32 %v322, %v621
      %v623 = vpop.f32.mrf.mxu0
      %624 = vmatprep.mubr.bf16.mxu0 0
      %625 = vmatmul.mubr.bf16.gmra.mxu0 %v466
      %v626 = vpop.f32.mrf.mxu0
      %v627 = vadd.f32 %v322, %v626
      %v628 = vpop.f32.mrf.mxu0
      %v629 = vpop.f32.mrf.mxu0
      %v630 = vadd.f32 %v322, %v629
      %v631 = vpop.f32.mrf.mxu0
      %632 = vdwg.mxu0
      %v633 = vmax.f32 %v507, 0.0
      %v634 = vmax.f32 %v510, 0.0
      %v635 = vmax.f32 %v515, 0.0
      %v636 = vmax.f32 %v518, 0.0
      %v637 = vmax.f32 %v523, 0.0
      %v638 = vmax.f32 %v526, 0.0
      %v639 = vmax.f32 %v531, 0.0
      %v640 = vmax.f32 %v534, 0.0
      %v641 = vmax.f32 %v539, 0.0
      %v642 = vmax.f32 %v542, 0.0
      %v643 = vmax.f32 %v547, 0.0
      %v644 = vmax.f32 %v550, 0.0
      %v645 = vmax.f32 %v555, 0.0
      %v646 = vmax.f32 %v558, 0.0
      %v647 = vmax.f32 %v563, 0.0
      %v648 = vmax.f32 %v566, 0.0
      %v649 = vmax.f32 %v571, 0.0
      %v650 = vmax.f32 %v574, 0.0
      %v651 = vmax.f32 %v579, 0.0
      %v652 = vmax.f32 %v582, 0.0
      %v653 = vmax.f32 %v587, 0.0
      %v654 = vmax.f32 %v590, 0.0
      %v655 = vmax.f32 %v595, 0.0
      %v656 = vmax.f32 %v598, 0.0
      %v657 = vmax.f32 %v603, 0.0
      %v658 = vmax.f32 %v606, 0.0
      %v659 = vmax.f32 %v611, 0.0
      %v660 = vmax.f32 %v614, 0.0
      %v661 = vmax.f32 %v619, 0.0
      %v662 = vmax.f32 %v622, 0.0
      %v663 = vmax.f32 %v627, 0.0
      %v664 = vmax.f32 %v630, 0.0
      %vm665 = vcmask 261120
      %666 = vst.msk [vmem:[#allocation2] sm:$0xff] %vm665, 0.0
      %667 = vst.msk [vmem:[#allocation2 + $0x8] sm:$0xff] %vm665, 0.0
      %vm668 = vcmask 254976
      %669 = vst.msk [vmem:[#allocation2 + $0x10] sm:$0x3] %vm668, 0.0
      %670 = vst.msk [vmem:[#allocation2 + $0x18] sm:$0xff] %vm665, 0.0
      %671 = vst.msk [vmem:[#allocation2 + $0x20] sm:$0xff] %vm665, 0.0
      %672 = vst.msk [vmem:[#allocation2 + $0x28] sm:$0x3] %vm668, 0.0
      %673 = vst.msk [vmem:[#allocation2 + $0x30] sm:$0xff] %vm665, 0.0
      %674 = vst.msk [vmem:[#allocation2 + $0x38] sm:$0xff] %vm665, 0.0
      %675 = vst.msk [vmem:[#allocation2 + $0x40] sm:$0x3] %vm668, 0.0
      %676 = vst.msk [vmem:[#allocation2 + $0x48] sm:$0xff] %vm665, 0.0
      %677 = vst.msk [vmem:[#allocation2 + $0x50] sm:$0xff] %vm665, 0.0
      %678 = vst.msk [vmem:[#allocation2 + $0x58] sm:$0x3] %vm668, 0.0
      %679 = vst.msk [vmem:[#allocation2 + $0x60] sm:$0xff] %vm665, 0.0
      %680 = vst.msk [vmem:[#allocation2 + $0x68] sm:$0xff] %vm665, 0.0
      %681 = vst.msk [vmem:[#allocation2 + $0x70] sm:$0x3] %vm668, 0.0
      %682 = vst.msk [vmem:[#allocation2 + $0x78] sm:$0xff] %vm665, 0.0
      %683 = vst.msk [vmem:[#allocation2 + $0x80] sm:$0xff] %vm665, 0.0
      %684 = vst.msk [vmem:[#allocation2 + $0x88] sm:$0x3] %vm668, 0.0
      %685 = vst.msk [vmem:[#allocation2 + $0x90] sm:$0xff] %vm665, 0.0
      %686 = vst.msk [vmem:[#allocation2 + $0x98] sm:$0xff] %vm665, 0.0
      %687 = vst.msk [vmem:[#allocation2 + $0xa0] sm:$0x3] %vm668, 0.0
      %688 = vst.msk [vmem:[#allocation2 + $0xa8] sm:$0xff] %vm665, 0.0
      %689 = vst.msk [vmem:[#allocation2 + $0xb0] sm:$0xff] %vm665, 0.0
      %690 = vst.msk [vmem:[#allocation2 + $0xb8] sm:$0x3] %vm668, 0.0
      %691 = vst.msk [vmem:[#allocation2 + $0xc0] sm:$0xff] %vm665, 0.0
      %692 = vst.msk [vmem:[#allocation2 + $0xc8] sm:$0xff] %vm665, 0.0
      %693 = vst.msk [vmem:[#allocation2 + $0xd0] sm:$0x3] %vm668, 0.0
      %694 = vst.msk [vmem:[#allocation2 + $0xd8] sm:$0xff] %vm665, 0.0
      %695 = vst.msk [vmem:[#allocation2 + $0xe0] sm:$0xff] %vm665, 0.0
      %696 = vst.msk [vmem:[#allocation2 + $0xe8] sm:$0x3] %vm668, 0.0
      %697 = vst.msk [vmem:[#allocation2 + $0xf0] sm:$0xff] %vm665, 0.0
      %698 = vst.msk [vmem:[#allocation2 + $0xf8] sm:$0xff] %vm665, 0.0
      %699 = vst.msk [vmem:[#allocation2 + $0x100] sm:$0x3] %vm668, 0.0
      %700 = vst.msk [vmem:[#allocation2 + $0x108] sm:$0xff] %vm665, 0.0
      %701 = vst.msk [vmem:[#allocation2 + $0x110] sm:$0xff] %vm665, 0.0
      %702 = vst.msk [vmem:[#allocation2 + $0x118] sm:$0x3] %vm668, 0.0
      %703 = vst.msk [vmem:[#allocation2 + $0x120] sm:$0xff] %vm665, 0.0
      %704 = vst.msk [vmem:[#allocation2 + $0x128] sm:$0xff] %vm665, 0.0
      %705 = vst.msk [vmem:[#allocation2 + $0x130] sm:$0x3] %vm668, 0.0
      %706 = vst.msk [vmem:[#allocation2 + $0x138] sm:$0xff] %vm665, 0.0
      %707 = vst.msk [vmem:[#allocation2 + $0x140] sm:$0xff] %vm665, 0.0
      %708 = vst.msk [vmem:[#allocation2 + $0x148] sm:$0x3] %vm668, 0.0
      %709 = vst.msk [vmem:[#allocation2 + $0x150] sm:$0xff] %vm665, 0.0
      %710 = vst.msk [vmem:[#allocation2 + $0x158] sm:$0xff] %vm665, 0.0
      %711 = vst.msk [vmem:[#allocation2 + $0x160] sm:$0x3] %vm668, 0.0
      %712 = vst.msk [vmem:[#allocation2 + $0x168] sm:$0xff] %vm665, 0.0
      %713 = vst.msk [vmem:[#allocation2 + $0x170] sm:$0xff] %vm665, 0.0
      %714 = vst.msk [vmem:[#allocation2 + $0x178] sm:$0x3] %vm668, 0.0
      %715 = vst.msk [vmem:[#allocation2 + $0x180] sm:$0xff] %vm665, 0.0
      %716 = vst.msk [vmem:[#allocation2 + $0x188] sm:$0xff] %vm665, 0.0
      %717 = vst.msk [vmem:[#allocation2 + $0x190] sm:$0x3] %vm668, 0.0
      %718 = vst.msk [vmem:[#allocation2 + $0x198] sm:$0xff] %vm665, 0.0
      %719 = vst.msk [vmem:[#allocation2 + $0x1a0] sm:$0xff] %vm665, 0.0
      %720 = vst.msk [vmem:[#allocation2 + $0x1a8] sm:$0x3] %vm668, 0.0
      %s721 = scalar_lea.vmem [#allocation2], 24
      %722 = vst.msk [vmem:[%s721 + $0x1] sm:$0xff] %vm665, %v633
      %723 = vst.msk [vmem:[%s721 + $0x9] sm:$0xff] %vm665, %v634
      %724 = vst.msk [vmem:[%s721 + $0x19] sm:$0xff] %vm665, %v635
      %725 = vst.msk [vmem:[%s721 + $0x21] sm:$0xff] %vm665, %v636
      %726 = vst.msk [vmem:[%s721 + $0x31] sm:$0xff] %vm665, %v637
      %727 = vst.msk [vmem:[%s721 + $0x39] sm:$0xff] %vm665, %v638
      %728 = vst.msk [vmem:[%s721 + $0x49] sm:$0xff] %vm665, %v639
      %729 = vst.msk [vmem:[%s721 + $0x51] sm:$0xff] %vm665, %v640
      %730 = vst.msk [vmem:[%s721 + $0x61] sm:$0xff] %vm665, %v641
      %731 = vst.msk [vmem:[%s721 + $0x69] sm:$0xff] %vm665, %v642
      %732 = vst.msk [vmem:[%s721 + $0x79] sm:$0xff] %vm665, %v643
      %733 = vst.msk [vmem:[%s721 + $0x81] sm:$0xff] %vm665, %v644
      %734 = vst.msk [vmem:[%s721 + $0x91] sm:$0xff] %vm665, %v645
      %735 = vst.msk [vmem:[%s721 + $0x99] sm:$0xff] %vm665, %v646
      %736 = vst.msk [vmem:[%s721 + $0xa9] sm:$0xff] %vm665, %v647
      %737 = vst.msk [vmem:[%s721 + $0xb1] sm:$0xff] %vm665, %v648
      %738 = vst.msk [vmem:[%s721 + $0xc1] sm:$0xff] %vm665, %v649
      %739 = vst.msk [vmem:[%s721 + $0xc9] sm:$0xff] %vm665, %v650
      %740 = vst.msk [vmem:[%s721 + $0xd9] sm:$0xff] %vm665, %v651
      %741 = vst.msk [vmem:[%s721 + $0xe1] sm:$0xff] %vm665, %v652
      %742 = vst.msk [vmem:[%s721 + $0xf1] sm:$0xff] %vm665, %v653
      %743 = vst.msk [vmem:[%s721 + $0xf9] sm:$0xff] %vm665, %v654
      %744 = vst.msk [vmem:[%s721 + $0x109] sm:$0xff] %vm665, %v655
      %745 = vst.msk [vmem:[%s721 + $0x111] sm:$0xff] %vm665, %v656
      %746 = vst.msk [vmem:[%s721 + $0x121] sm:$0xff] %vm665, %v657
      %747 = vst.msk [vmem:[%s721 + $0x129] sm:$0xff] %vm665, %v658
      %748 = vst.msk [vmem:[%s721 + $0x139] sm:$0xff] %vm665, %v659
      %749 = vst.msk [vmem:[%s721 + $0x141] sm:$0xff] %vm665, %v660
      %750 = vst.msk [vmem:[%s721 + $0x151] sm:$0xff] %vm665, %v661
      %751 = vst.msk [vmem:[%s721 + $0x159] sm:$0xff] %vm665, %v662
      %752 = vst.msk [vmem:[%s721 + $0x169] sm:$0xff] %vm665, %v663
      %753 = vst.msk [vmem:[%s721 + $0x171] sm:$0xff] %vm665, %v664
      %v754 = vld [vmem:[#allocation2] sm:$0xff]
      %v755 = vld [vmem:[#allocation2 + $0x8] sm:$0xff]
      %v756 = vld [vmem:[#allocation2 + $0x18] sm:$0xff]
      %v757 = vld [vmem:[#allocation2 + $0x20] sm:$0xff]
      %v758 = vld [vmem:[#allocation2 + $0x30] sm:$0xff]
      %v759 = vld [vmem:[#allocation2 + $0x38] sm:$0xff]
      %v760 = vld [vmem:[#allocation2 + $0x48] sm:$0xff]
      %v761 = vld [vmem:[#allocation2 + $0x50] sm:$0xff]
      %v762 = vld [vmem:[#allocation2 + $0x60] sm:$0xff]
      %v763 = vld [vmem:[#allocation2 + $0x68] sm:$0xff]
      %v764 = vld [vmem:[#allocation2 + $0x78] sm:$0xff]
      %v765 = vld [vmem:[#allocation2 + $0x80] sm:$0xff]
      %v766 = vld [vmem:[#allocation2 + $0x90] sm:$0xff]
      %v767 = vld [vmem:[#allocation2 + $0x98] sm:$0xff]
      %v768 = vld [vmem:[#allocation2 + $0xa8] sm:$0xff]
      %v769 = vld [vmem:[#allocation2 + $0xb0] sm:$0xff]
      %v770 = vld [vmem:[#allocation2 + $0xc0] sm:$0xff]
      %v771 = vld [vmem:[#allocation2 + $0xc8] sm:$0xff]
      %v772 = vld [vmem:[#allocation2 + $0xd8] sm:$0xff]
      %v773 = vld [vmem:[#allocation2 + $0xe0] sm:$0xff]
      %v774 = vld [vmem:[#allocation2 + $0xf0] sm:$0xff]
      %v775 = vld [vmem:[#allocation2 + $0xf8] sm:$0xff]
      %v776 = vld [vmem:[#allocation2 + $0x108] sm:$0xff]
      %v777 = vld [vmem:[#allocation2 + $0x110] sm:$0xff]
      %v778 = vld [vmem:[#allocation2 + $0x120] sm:$0xff]
      %v779 = vld [vmem:[#allocation2 + $0x128] sm:$0xff]
      %v780 = vld [vmem:[#allocation2 + $0x138] sm:$0xff]
      %v781 = vld [vmem:[#allocation2 + $0x140] sm:$0xff]
      %v782 = vld [vmem:[#allocation2 + $0x150] sm:$0xff]
      %v783 = vld [vmem:[#allocation2 + $0x158] sm:$0xff]
      %v784 = vld [vmem:[#allocation2 + $0x168] sm:$0xff]
      %v785 = vld [vmem:[#allocation2 + $0x170] sm:$0xff]
      %v786 = vld [vmem:[#allocation2 + $0x1] sm:$0xff]
      %v787 = vld [vmem:[#allocation2 + $0x9] sm:$0xff]
      %v788 = vld [vmem:[#allocation2 + $0x19] sm:$0xff]
      %v789 = vld [vmem:[#allocation2 + $0x21] sm:$0xff]
      %v790 = vld [vmem:[#allocation2 + $0x31] sm:$0xff]
      %v791 = vld [vmem:[#allocation2 + $0x39] sm:$0xff]
      %v792 = vld [vmem:[#allocation2 + $0x49] sm:$0xff]
      %v793 = vld [vmem:[#allocation2 + $0x51] sm:$0xff]
      %v794 = vld [vmem:[#allocation2 + $0x61] sm:$0xff]
      %v795 = vld [vmem:[#allocation2 + $0x69] sm:$0xff]
      %v796 = vld [vmem:[#allocation2 + $0x79] sm:$0xff]
      %v797 = vld [vmem:[#allocation2 + $0x81] sm:$0xff]
      %v798 = vld [vmem:[#allocation2 + $0x91] sm:$0xff]
      %v799 = vld [vmem:[#allocation2 + $0x99] sm:$0xff]
      %v800 = vld [vmem:[#allocation2 + $0xa9] sm:$0xff]
      %v801 = vld [vmem:[#allocation2 + $0xb1] sm:$0xff]
      %v802 = vld [vmem:[#allocation2 + $0xc1] sm:$0xff]
      %v803 = vld [vmem:[#allocation2 + $0xc9] sm:$0xff]
      %v804 = vld [vmem:[#allocation2 + $0xd9] sm:$0xff]
      %v805 = vld [vmem:[#allocation2 + $0xe1] sm:$0xff]
      %v806 = vld [vmem:[#allocation2 + $0xf1] sm:$0xff]
      %v807 = vld [vmem:[#allocation2 + $0xf9] sm:$0xff]
      %v808 = vld [vmem:[#allocation2 + $0x109] sm:$0xff]
      %v809 = vld [vmem:[#allocation2 + $0x111] sm:$0xff]
      %v810 = vld [vmem:[#allocation2 + $0x121] sm:$0xff]
      %v811 = vld [vmem:[#allocation2 + $0x129] sm:$0xff]
      %v812 = vld [vmem:[#allocation2 + $0x139] sm:$0xff]
      %v813 = vld [vmem:[#allocation2 + $0x141] sm:$0xff]
      %v814 = vld [vmem:[#allocation2 + $0x151] sm:$0xff]
      %v815 = vld [vmem:[#allocation2 + $0x159] sm:$0xff]
      %v816 = vld [vmem:[#allocation2 + $0x169] sm:$0xff]
      %v817 = vld [vmem:[#allocation2 + $0x171] sm:$0xff]
      %v818 = vld [vmem:[#allocation2 + $0x2] sm:$0xff]
      %v819 = vld [vmem:[#allocation2 + $0xa] sm:$0xff]
      %v820 = vld [vmem:[#allocation2 + $0x1a] sm:$0xff]
      %v821 = vld [vmem:[#allocation2 + $0x22] sm:$0xff]
      %v822 = vld [vmem:[#allocation2 + $0x32] sm:$0xff]
      %v823 = vld [vmem:[#allocation2 + $0x3a] sm:$0xff]
      %v824 = vld [vmem:[#allocation2 + $0x4a] sm:$0xff]
      %v825 = vld [vmem:[#allocation2 + $0x52] sm:$0xff]
      %v826 = vld [vmem:[#allocation2 + $0x62] sm:$0xff]
      %v827 = vld [vmem:[#allocation2 + $0x6a] sm:$0xff]
      %v828 = vld [vmem:[#allocation2 + $0x7a] sm:$0xff]
      %v829 = vld [vmem:[#allocation2 + $0x82] sm:$0xff]
      %v830 = vld [vmem:[#allocation2 + $0x92] sm:$0xff]
      %v831 = vld [vmem:[#allocation2 + $0x9a] sm:$0xff]
      %v832 = vld [vmem:[#allocation2 + $0xaa] sm:$0xff]
      %v833 = vld [vmem:[#allocation2 + $0xb2] sm:$0xff]
      %v834 = vld [vmem:[#allocation2 + $0xc2] sm:$0xff]
      %v835 = vld [vmem:[#allocation2 + $0xca] sm:$0xff]
      %v836 = vld [vmem:[#allocation2 + $0xda] sm:$0xff]
      %v837 = vld [vmem:[#allocation2 + $0xe2] sm:$0xff]
      %v838 = vld [vmem:[#allocation2 + $0xf2] sm:$0xff]
      %v839 = vld [vmem:[#allocation2 + $0xfa] sm:$0xff]
      %v840 = vld [vmem:[#allocation2 + $0x10a] sm:$0xff]
      %v841 = vld [vmem:[#allocation2 + $0x112] sm:$0xff]
      %v842 = vld [vmem:[#allocation2 + $0x122] sm:$0xff]
      %v843 = vld [vmem:[#allocation2 + $0x12a] sm:$0xff]
      %v844 = vld [vmem:[#allocation2 + $0x13a] sm:$0xff]
      %v845 = vld [vmem:[#allocation2 + $0x142] sm:$0xff]
      %v846 = vld [vmem:[#allocation2 + $0x152] sm:$0xff]
      %v847 = vld [vmem:[#allocation2 + $0x15a] sm:$0xff]
      %v848 = vld [vmem:[#allocation2 + $0x16a] sm:$0xff]
      %v849 = vld [vmem:[#allocation2 + $0x172] sm:$0xff]
      %v850 = vld [vmem:[%s721] sm:$0xff]
      %v851 = vld [vmem:[%s721 + $0x8] sm:$0xff]
      %v852 = vld [vmem:[%s721 + $0x18] sm:$0xff]
      %v853 = vld [vmem:[%s721 + $0x20] sm:$0xff]
      %v854 = vld [vmem:[%s721 + $0x30] sm:$0xff]
      %v855 = vld [vmem:[%s721 + $0x38] sm:$0xff]
      %v856 = vld [vmem:[%s721 + $0x48] sm:$0xff]
      %v857 = vld [vmem:[%s721 + $0x50] sm:$0xff]
      %v858 = vld [vmem:[%s721 + $0x60] sm:$0xff]
      %v859 = vld [vmem:[%s721 + $0x68] sm:$0xff]
      %v860 = vld [vmem:[%s721 + $0x78] sm:$0xff]
      %v861 = vld [vmem:[%s721 + $0x80] sm:$0xff]
      %v862 = vld [vmem:[%s721 + $0x90] sm:$0xff]
      %v863 = vld [vmem:[%s721 + $0x98] sm:$0xff]
      %v864 = vld [vmem:[%s721 + $0xa8] sm:$0xff]
      %v865 = vld [vmem:[%s721 + $0xb0] sm:$0xff]
      %v866 = vld [vmem:[%s721 + $0xc0] sm:$0xff]
      %v867 = vld [vmem:[%s721 + $0xc8] sm:$0xff]
      %v868 = vld [vmem:[%s721 + $0xd8] sm:$0xff]
      %v869 = vld [vmem:[%s721 + $0xe0] sm:$0xff]
      %v870 = vld [vmem:[%s721 + $0xf0] sm:$0xff]
      %v871 = vld [vmem:[%s721 + $0xf8] sm:$0xff]
      %v872 = vld [vmem:[%s721 + $0x108] sm:$0xff]
      %v873 = vld [vmem:[%s721 + $0x110] sm:$0xff]
      %v874 = vld [vmem:[%s721 + $0x120] sm:$0xff]
      %v875 = vld [vmem:[%s721 + $0x128] sm:$0xff]
      %v876 = vld [vmem:[%s721 + $0x138] sm:$0xff]
      %v877 = vld [vmem:[%s721 + $0x140] sm:$0xff]
      %v878 = vld [vmem:[%s721 + $0x150] sm:$0xff]
      %v879 = vld [vmem:[%s721 + $0x158] sm:$0xff]
      %v880 = vld [vmem:[%s721 + $0x168] sm:$0xff]
      %v881 = vld [vmem:[%s721 + $0x170] sm:$0xff]
      %v882 = vld [vmem:[%s721 + $0x1] sm:$0xff]
      %v883 = vld [vmem:[%s721 + $0x9] sm:$0xff]
      %v884 = vld [vmem:[%s721 + $0x19] sm:$0xff]
      %v885 = vld [vmem:[%s721 + $0x21] sm:$0xff]
      %v886 = vld [vmem:[%s721 + $0x31] sm:$0xff]
      %v887 = vld [vmem:[%s721 + $0x39] sm:$0xff]
      %v888 = vld [vmem:[%s721 + $0x49] sm:$0xff]
      %v889 = vld [vmem:[%s721 + $0x51] sm:$0xff]
      %v890 = vld [vmem:[%s721 + $0x61] sm:$0xff]
      %v891 = vld [vmem:[%s721 + $0x69] sm:$0xff]
      %v892 = vld [vmem:[%s721 + $0x79] sm:$0xff]
      %v893 = vld [vmem:[%s721 + $0x81] sm:$0xff]
      %v894 = vld [vmem:[%s721 + $0x91] sm:$0xff]
      %v895 = vld [vmem:[%s721 + $0x99] sm:$0xff]
      %v896 = vld [vmem:[%s721 + $0xa9] sm:$0xff]
      %v897 = vld [vmem:[%s721 + $0xb1] sm:$0xff]
      %v898 = vld [vmem:[%s721 + $0xc1] sm:$0xff]
      %v899 = vld [vmem:[%s721 + $0xc9] sm:$0xff]
      %v900 = vld [vmem:[%s721 + $0xd9] sm:$0xff]
      %v901 = vld [vmem:[%s721 + $0xe1] sm:$0xff]
      %v902 = vld [vmem:[%s721 + $0xf1] sm:$0xff]
      %v903 = vld [vmem:[%s721 + $0xf9] sm:$0xff]
      %v904 = vld [vmem:[%s721 + $0x109] sm:$0xff]
      %v905 = vld [vmem:[%s721 + $0x111] sm:$0xff]
      %v906 = vld [vmem:[%s721 + $0x121] sm:$0xff]
      %v907 = vld [vmem:[%s721 + $0x129] sm:$0xff]
      %v908 = vld [vmem:[%s721 + $0x139] sm:$0xff]
      %v909 = vld [vmem:[%s721 + $0x141] sm:$0xff]
      %v910 = vld [vmem:[%s721 + $0x151] sm:$0xff]
      %v911 = vld [vmem:[%s721 + $0x159] sm:$0xff]
      %v912 = vld [vmem:[%s721 + $0x169] sm:$0xff]
      %v913 = vld [vmem:[%s721 + $0x171] sm:$0xff]
      %v914 = vld [vmem:[%s721 + $0x2] sm:$0xff]
      %v915 = vld [vmem:[%s721 + $0xa] sm:$0xff]
      %v916 = vld [vmem:[%s721 + $0x1a] sm:$0xff]
      %v917 = vld [vmem:[%s721 + $0x22] sm:$0xff]
      %v918 = vld [vmem:[%s721 + $0x32] sm:$0xff]
      %v919 = vld [vmem:[%s721 + $0x3a] sm:$0xff]
      %v920 = vld [vmem:[%s721 + $0x4a] sm:$0xff]
      %v921 = vld [vmem:[%s721 + $0x52] sm:$0xff]
      %v922 = vld [vmem:[%s721 + $0x62] sm:$0xff]
      %v923 = vld [vmem:[%s721 + $0x6a] sm:$0xff]
      %v924 = vld [vmem:[%s721 + $0x7a] sm:$0xff]
      %v925 = vld [vmem:[%s721 + $0x82] sm:$0xff]
      %v926 = vld [vmem:[%s721 + $0x92] sm:$0xff]
      %v927 = vld [vmem:[%s721 + $0x9a] sm:$0xff]
      %v928 = vld [vmem:[%s721 + $0xaa] sm:$0xff]
      %v929 = vld [vmem:[%s721 + $0xb2] sm:$0xff]
      %v930 = vld [vmem:[%s721 + $0xc2] sm:$0xff]
      %v931 = vld [vmem:[%s721 + $0xca] sm:$0xff]
      %v932 = vld [vmem:[%s721 + $0xda] sm:$0xff]
      %v933 = vld [vmem:[%s721 + $0xe2] sm:$0xff]
      %v934 = vld [vmem:[%s721 + $0xf2] sm:$0xff]
      %v935 = vld [vmem:[%s721 + $0xfa] sm:$0xff]
      %v936 = vld [vmem:[%s721 + $0x10a] sm:$0xff]
      %v937 = vld [vmem:[%s721 + $0x112] sm:$0xff]
      %v938 = vld [vmem:[%s721 + $0x122] sm:$0xff]
      %v939 = vld [vmem:[%s721 + $0x12a] sm:$0xff]
      %v940 = vld [vmem:[%s721 + $0x13a] sm:$0xff]
      %v941 = vld [vmem:[%s721 + $0x142] sm:$0xff]
      %v942 = vld [vmem:[%s721 + $0x152] sm:$0xff]
      %v943 = vld [vmem:[%s721 + $0x15a] sm:$0xff]
      %v944 = vld [vmem:[%s721 + $0x16a] sm:$0xff]
      %v945 = vld [vmem:[%s721 + $0x172] sm:$0xff]
      %s946 = scalar_lea.vmem [#allocation2], 48
      %v947 = vld [vmem:[%s946] sm:$0xff]
      %v948 = vld [vmem:[%s946 + $0x8] sm:$0xff]
      %v949 = vld [vmem:[%s946 + $0x18] sm:$0xff]
      %v950 = vld [vmem:[%s946 + $0x20] sm:$0xff]
      %v951 = vld [vmem:[%s946 + $0x30] sm:$0xff]
      %v952 = vld [vmem:[%s946 + $0x38] sm:$0xff]
      %v953 = vld [vmem:[%s946 + $0x48] sm:$0xff]
      %v954 = vld [vmem:[%s946 + $0x50] sm:$0xff]
      %v955 = vld [vmem:[%s946 + $0x60] sm:$0xff]
      %v956 = vld [vmem:[%s946 + $0x68] sm:$0xff]
      %v957 = vld [vmem:[%s946 + $0x78] sm:$0xff]
      %v958 = vld [vmem:[%s946 + $0x80] sm:$0xff]
      %v959 = vld [vmem:[%s946 + $0x90] sm:$0xff]
      %v960 = vld [vmem:[%s946 + $0x98] sm:$0xff]
      %v961 = vld [vmem:[%s946 + $0xa8] sm:$0xff]
      %v962 = vld [vmem:[%s946 + $0xb0] sm:$0xff]
      %v963 = vld [vmem:[%s946 + $0xc0] sm:$0xff]
      %v964 = vld [vmem:[%s946 + $0xc8] sm:$0xff]
      %v965 = vld [vmem:[%s946 + $0xd8] sm:$0xff]
      %v966 = vld [vmem:[%s946 + $0xe0] sm:$0xff]
      %v967 = vld [vmem:[%s946 + $0xf0] sm:$0xff]
      %v968 = vld [vmem:[%s946 + $0xf8] sm:$0xff]
      %v969 = vld [vmem:[%s946 + $0x108] sm:$0xff]
      %v970 = vld [vmem:[%s946 + $0x110] sm:$0xff]
      %v971 = vld [vmem:[%s946 + $0x120] sm:$0xff]
      %v972 = vld [vmem:[%s946 + $0x128] sm:$0xff]
      %v973 = vld [vmem:[%s946 + $0x138] sm:$0xff]
      %v974 = vld [vmem:[%s946 + $0x140] sm:$0xff]
      %v975 = vld [vmem:[%s946 + $0x150] sm:$0xff]
      %v976 = vld [vmem:[%s946 + $0x158] sm:$0xff]
      %v977 = vld [vmem:[%s946 + $0x168] sm:$0xff]
      %v978 = vld [vmem:[%s946 + $0x170] sm:$0xff]
      %v979 = vld [vmem:[%s946 + $0x1] sm:$0xff]
      %v980 = vld [vmem:[%s946 + $0x9] sm:$0xff]
      %v981 = vld [vmem:[%s946 + $0x19] sm:$0xff]
      %v982 = vld [vmem:[%s946 + $0x21] sm:$0xff]
      %v983 = vld [vmem:[%s946 + $0x31] sm:$0xff]
      %v984 = vld [vmem:[%s946 + $0x39] sm:$0xff]
      %v985 = vld [vmem:[%s946 + $0x49] sm:$0xff]
      %v986 = vld [vmem:[%s946 + $0x51] sm:$0xff]
      %v987 = vld [vmem:[%s946 + $0x61] sm:$0xff]
      %v988 = vld [vmem:[%s946 + $0x69] sm:$0xff]
      %v989 = vld [vmem:[%s946 + $0x79] sm:$0xff]
      %v990 = vld [vmem:[%s946 + $0x81] sm:$0xff]
      %v991 = vld [vmem:[%s946 + $0x91] sm:$0xff]
      %v992 = vld [vmem:[%s946 + $0x99] sm:$0xff]
      %v993 = vld [vmem:[%s946 + $0xa9] sm:$0xff]
      %v994 = vld [vmem:[%s946 + $0xb1] sm:$0xff]
      %v995 = vld [vmem:[%s946 + $0xc1] sm:$0xff]
      %v996 = vld [vmem:[%s946 + $0xc9] sm:$0xff]
      %v997 = vld [vmem:[%s946 + $0xd9] sm:$0xff]
      %v998 = vld [vmem:[%s946 + $0xe1] sm:$0xff]
      %v999 = vld [vmem:[%s946 + $0xf1] sm:$0xff]
      %v1000 = vld [vmem:[%s946 + $0xf9] sm:$0xff]
      %v1001 = vld [vmem:[%s946 + $0x109] sm:$0xff]
      %v1002 = vld [vmem:[%s946 + $0x111] sm:$0xff]
      %v1003 = vld [vmem:[%s946 + $0x121] sm:$0xff]
      %v1004 = vld [vmem:[%s946 + $0x129] sm:$0xff]
      %v1005 = vld [vmem:[%s946 + $0x139] sm:$0xff]
      %v1006 = vld [vmem:[%s946 + $0x141] sm:$0xff]
      %v1007 = vld [vmem:[%s946 + $0x151] sm:$0xff]
      %v1008 = vld [vmem:[%s946 + $0x159] sm:$0xff]
      %v1009 = vld [vmem:[%s946 + $0x169] sm:$0xff]
      %v1010 = vld [vmem:[%s946 + $0x171] sm:$0xff]
      %v1011 = vld [vmem:[%s946 + $0x2] sm:$0xff]
      %v1012 = vld [vmem:[%s946 + $0xa] sm:$0xff]
      %v1013 = vld [vmem:[%s946 + $0x1a] sm:$0xff]
      %v1014 = vld [vmem:[%s946 + $0x22] sm:$0xff]
      %v1015 = vld [vmem:[%s946 + $0x32] sm:$0xff]
      %v1016 = vld [vmem:[%s946 + $0x3a] sm:$0xff]
      %v1017 = vld [vmem:[%s946 + $0x4a] sm:$0xff]
      %v1018 = vld [vmem:[%s946 + $0x52] sm:$0xff]
      %v1019 = vld [vmem:[%s946 + $0x62] sm:$0xff]
      %v1020 = vld [vmem:[%s946 + $0x6a] sm:$0xff]
      %v1021 = vld [vmem:[%s946 + $0x7a] sm:$0xff]
      %v1022 = vld [vmem:[%s946 + $0x82] sm:$0xff]
      %v1023 = vld [vmem:[%s946 + $0x92] sm:$0xff]
      %v1024 = vld [vmem:[%s946 + $0x9a] sm:$0xff]
      %v1025 = vld [vmem:[%s946 + $0xaa] sm:$0xff]
      %v1026 = vld [vmem:[%s946 + $0xb2] sm:$0xff]
      %v1027 = vld [vmem:[%s946 + $0xc2] sm:$0xff]
      %v1028 = vld [vmem:[%s946 + $0xca] sm:$0xff]
      %v1029 = vld [vmem:[%s946 + $0xda] sm:$0xff]
      %v1030 = vld [vmem:[%s946 + $0xe2] sm:$0xff]
      %v1031 = vld [vmem:[%s946 + $0xf2] sm:$0xff]
      %v1032 = vld [vmem:[%s946 + $0xfa] sm:$0xff]
      %v1033 = vld [vmem:[%s946 + $0x10a] sm:$0xff]
      %v1034 = vld [vmem:[%s946 + $0x112] sm:$0xff]
      %v1035 = vld [vmem:[%s946 + $0x122] sm:$0xff]
      %v1036 = vld [vmem:[%s946 + $0x12a] sm:$0xff]
      %v1037 = vld [vmem:[%s946 + $0x13a] sm:$0xff]
      %v1038 = vld [vmem:[%s946 + $0x142] sm:$0xff]
      %v1039 = vld [vmem:[%s946 + $0x152] sm:$0xff]
      %v1040 = vld [vmem:[%s946 + $0x15a] sm:$0xff]
      %v1041 = vld [vmem:[%s946 + $0x16a] sm:$0xff]
      %v1042 = vld [vmem:[%s946 + $0x172] sm:$0xff]
      %1075 = vrot.lane.b32.xlu0 %v786, 32
      %v1076 = vpop.permute.xlu0 %1075
      %1077 = vrot.lane.b32.xlu0 %v787, 32
      %v1078 = vpop.permute.xlu0 %1077
      %1079 = vrot.lane.b32.xlu0 %v788, 32
      %v1080 = vpop.permute.xlu0 %1079
      %1081 = vrot.lane.b32.xlu0 %v789, 32
      %v1082 = vpop.permute.xlu0 %1081
      %1083 = vrot.lane.b32.xlu0 %v790, 32
      %v1084 = vpop.permute.xlu0 %1083
      %1085 = vrot.lane.b32.xlu0 %v791, 32
      %v1086 = vpop.permute.xlu0 %1085
      %1087 = vrot.lane.b32.xlu0 %v792, 32
      %v1088 = vpop.permute.xlu0 %1087
      %1089 = vrot.lane.b32.xlu0 %v793, 32
      %v1090 = vpop.permute.xlu0 %1089
      %1091 = vrot.lane.b32.xlu0 %v794, 32
      %v1092 = vpop.permute.xlu0 %1091
      %1093 = vrot.lane.b32.xlu0 %v795, 32
      %v1094 = vpop.permute.xlu0 %1093
      %1095 = vrot.lane.b32.xlu0 %v796, 32
      %v1096 = vpop.permute.xlu0 %1095
      %1097 = vrot.lane.b32.xlu0 %v797, 32
      %v1098 = vpop.permute.xlu0 %1097
      %1099 = vrot.lane.b32.xlu0 %v798, 32
      %v1100 = vpop.permute.xlu0 %1099
      %1101 = vrot.lane.b32.xlu0 %v799, 32
      %v1102 = vpop.permute.xlu0 %1101
      %1103 = vrot.lane.b32.xlu0 %v800, 32
      %v1104 = vpop.permute.xlu0 %1103
      %1105 = vrot.lane.b32.xlu0 %v801, 32
      %v1106 = vpop.permute.xlu0 %1105
      %1107 = vrot.lane.b32.xlu0 %v802, 32
      %v1108 = vpop.permute.xlu0 %1107
      %1109 = vrot.lane.b32.xlu0 %v803, 32
      %v1110 = vpop.permute.xlu0 %1109
      %1111 = vrot.lane.b32.xlu0 %v804, 32
      %v1112 = vpop.permute.xlu0 %1111
      %1113 = vrot.lane.b32.xlu0 %v805, 32
      %v1114 = vpop.permute.xlu0 %1113
      %1115 = vrot.lane.b32.xlu0 %v806, 32
      %v1116 = vpop.permute.xlu0 %1115
      %1117 = vrot.lane.b32.xlu0 %v807, 32
      %v1118 = vpop.permute.xlu0 %1117
      %1119 = vrot.lane.b32.xlu0 %v808, 32
      %v1120 = vpop.permute.xlu0 %1119
      %1121 = vrot.lane.b32.xlu0 %v809, 32
      %v1122 = vpop.permute.xlu0 %1121
      %1123 = vrot.lane.b32.xlu0 %v810, 32
      %v1124 = vpop.permute.xlu0 %1123
      %1125 = vrot.lane.b32.xlu0 %v811, 32
      %v1126 = vpop.permute.xlu0 %1125
      %1127 = vrot.lane.b32.xlu0 %v812, 32
      %v1128 = vpop.permute.xlu0 %1127
      %1129 = vrot.lane.b32.xlu0 %v813, 32
      %v1130 = vpop.permute.xlu0 %1129
      %1131 = vrot.lane.b32.xlu0 %v814, 32
      %v1132 = vpop.permute.xlu0 %1131
      %1133 = vrot.lane.b32.xlu0 %v815, 32
      %v1134 = vpop.permute.xlu0 %1133
      %1135 = vrot.lane.b32.xlu0 %v816, 32
      %v1136 = vpop.permute.xlu0 %1135
      %1137 = vrot.lane.b32.xlu0 %v817, 32
      %v1138 = vpop.permute.xlu0 %1137
      %1203 = vrot.lane.b32.xlu0 %v818, 64
      %v1204 = vpop.permute.xlu0 %1203
      %1205 = vrot.lane.b32.xlu0 %v819, 64
      %v1206 = vpop.permute.xlu0 %1205
      %1207 = vrot.lane.b32.xlu0 %v820, 64
      %v1208 = vpop.permute.xlu0 %1207
      %1209 = vrot.lane.b32.xlu0 %v821, 64
      %v1210 = vpop.permute.xlu0 %1209
      %1211 = vrot.lane.b32.xlu0 %v822, 64
      %v1212 = vpop.permute.xlu0 %1211
      %1213 = vrot.lane.b32.xlu0 %v823, 64
      %v1214 = vpop.permute.xlu0 %1213
      %1215 = vrot.lane.b32.xlu0 %v824, 64
      %v1216 = vpop.permute.xlu0 %1215
      %1217 = vrot.lane.b32.xlu0 %v825, 64
      %v1218 = vpop.permute.xlu0 %1217
      %1219 = vrot.lane.b32.xlu0 %v826, 64
      %v1220 = vpop.permute.xlu0 %1219
      %1221 = vrot.lane.b32.xlu0 %v827, 64
      %v1222 = vpop.permute.xlu0 %1221
      %1223 = vrot.lane.b32.xlu0 %v828, 64
      %v1224 = vpop.permute.xlu0 %1223
      %1225 = vrot.lane.b32.xlu0 %v829, 64
      %v1226 = vpop.permute.xlu0 %1225
      %1227 = vrot.lane.b32.xlu0 %v830, 64
      %v1228 = vpop.permute.xlu0 %1227
      %1229 = vrot.lane.b32.xlu0 %v831, 64
      %v1230 = vpop.permute.xlu0 %1229
      %1231 = vrot.lane.b32.xlu0 %v832, 64
      %v1232 = vpop.permute.xlu0 %1231
      %1233 = vrot.lane.b32.xlu0 %v833, 64
      %v1234 = vpop.permute.xlu0 %1233
      %1235 = vrot.lane.b32.xlu0 %v834, 64
      %v1236 = vpop.permute.xlu0 %1235
      %1237 = vrot.lane.b32.xlu0 %v835, 64
      %v1238 = vpop.permute.xlu0 %1237
      %1239 = vrot.lane.b32.xlu0 %v836, 64
      %v1240 = vpop.permute.xlu0 %1239
      %1241 = vrot.lane.b32.xlu0 %v837, 64
      %v1242 = vpop.permute.xlu0 %1241
      %1243 = vrot.lane.b32.xlu0 %v838, 64
      %v1244 = vpop.permute.xlu0 %1243
      %1245 = vrot.lane.b32.xlu0 %v839, 64
      %v1246 = vpop.permute.xlu0 %1245
      %1247 = vrot.lane.b32.xlu0 %v840, 64
      %v1248 = vpop.permute.xlu0 %1247
      %1249 = vrot.lane.b32.xlu0 %v841, 64
      %v1250 = vpop.permute.xlu0 %1249
      %1251 = vrot.lane.b32.xlu0 %v842, 64
      %v1252 = vpop.permute.xlu0 %1251
      %1253 = vrot.lane.b32.xlu0 %v843, 64
      %v1254 = vpop.permute.xlu0 %1253
      %1255 = vrot.lane.b32.xlu0 %v844, 64
      %v1256 = vpop.permute.xlu0 %1255
      %1257 = vrot.lane.b32.xlu0 %v845, 64
      %v1258 = vpop.permute.xlu0 %1257
      %1259 = vrot.lane.b32.xlu0 %v846, 64
      %v1260 = vpop.permute.xlu0 %1259
      %1261 = vrot.lane.b32.xlu0 %v847, 64
      %v1262 = vpop.permute.xlu0 %1261
      %1263 = vrot.lane.b32.xlu0 %v848, 64
      %v1264 = vpop.permute.xlu0 %1263
      %1265 = vrot.lane.b32.xlu0 %v849, 64
      %v1266 = vpop.permute.xlu0 %1265
      %1331 = vrot.lane.b32.xlu0 %v850, 96
      %v1332 = vpop.permute.xlu0 %1331
      %1333 = vrot.lane.b32.xlu0 %v851, 96
      %v1334 = vpop.permute.xlu0 %1333
      %1335 = vrot.lane.b32.xlu0 %v852, 96
      %v1336 = vpop.permute.xlu0 %1335
      %1337 = vrot.lane.b32.xlu0 %v853, 96
      %v1338 = vpop.permute.xlu0 %1337
      %1339 = vrot.lane.b32.xlu0 %v854, 96
      %v1340 = vpop.permute.xlu0 %1339
      %1341 = vrot.lane.b32.xlu0 %v855, 96
      %v1342 = vpop.permute.xlu0 %1341
      %1343 = vrot.lane.b32.xlu0 %v856, 96
      %v1344 = vpop.permute.xlu0 %1343
      %1345 = vrot.lane.b32.xlu0 %v857, 96
      %v1346 = vpop.permute.xlu0 %1345
      %1347 = vrot.lane.b32.xlu0 %v858, 96
      %v1348 = vpop.permute.xlu0 %1347
      %1349 = vrot.lane.b32.xlu0 %v859, 96
      %v1350 = vpop.permute.xlu0 %1349
      %1351 = vrot.lane.b32.xlu0 %v860, 96
      %v1352 = vpop.permute.xlu0 %1351
      %1353 = vrot.lane.b32.xlu0 %v861, 96
      %v1354 = vpop.permute.xlu0 %1353
      %1355 = vrot.lane.b32.xlu0 %v862, 96
      %v1356 = vpop.permute.xlu0 %1355
      %1357 = vrot.lane.b32.xlu0 %v863, 96
      %v1358 = vpop.permute.xlu0 %1357
      %1359 = vrot.lane.b32.xlu0 %v864, 96
      %v1360 = vpop.permute.xlu0 %1359
      %1361 = vrot.lane.b32.xlu0 %v865, 96
      %v1362 = vpop.permute.xlu0 %1361
      %1363 = vrot.lane.b32.xlu0 %v866, 96
      %v1364 = vpop.permute.xlu0 %1363
      %1365 = vrot.lane.b32.xlu0 %v867, 96
      %v1366 = vpop.permute.xlu0 %1365
      %1367 = vrot.lane.b32.xlu0 %v868, 96
      %v1368 = vpop.permute.xlu0 %1367
      %1369 = vrot.lane.b32.xlu0 %v869, 96
      %v1370 = vpop.permute.xlu0 %1369
      %1371 = vrot.lane.b32.xlu0 %v870, 96
      %v1372 = vpop.permute.xlu0 %1371
      %1373 = vrot.lane.b32.xlu0 %v871, 96
      %v1374 = vpop.permute.xlu0 %1373
      %1375 = vrot.lane.b32.xlu0 %v872, 96
      %v1376 = vpop.permute.xlu0 %1375
      %1377 = vrot.lane.b32.xlu0 %v873, 96
      %v1378 = vpop.permute.xlu0 %1377
      %1379 = vrot.lane.b32.xlu0 %v874, 96
      %v1380 = vpop.permute.xlu0 %1379
      %1381 = vrot.lane.b32.xlu0 %v875, 96
      %v1382 = vpop.permute.xlu0 %1381
      %1383 = vrot.lane.b32.xlu0 %v876, 96
      %v1384 = vpop.permute.xlu0 %1383
      %1385 = vrot.lane.b32.xlu0 %v877, 96
      %v1386 = vpop.permute.xlu0 %1385
      %1387 = vrot.lane.b32.xlu0 %v878, 96
      %v1388 = vpop.permute.xlu0 %1387
      %1389 = vrot.lane.b32.xlu0 %v879, 96
      %v1390 = vpop.permute.xlu0 %1389
      %1391 = vrot.lane.b32.xlu0 %v880, 96
      %v1392 = vpop.permute.xlu0 %1391
      %1393 = vrot.lane.b32.xlu0 %v881, 96
      %v1394 = vpop.permute.xlu0 %1393
      %1459 = vrot.lane.b32.xlu0 %v914, 32
      %v1460 = vpop.permute.xlu0 %1459
      %1461 = vrot.lane.b32.xlu0 %v915, 32
      %v1462 = vpop.permute.xlu0 %1461
      %1463 = vrot.lane.b32.xlu0 %v916, 32
      %v1464 = vpop.permute.xlu0 %1463
      %1465 = vrot.lane.b32.xlu0 %v917, 32
      %v1466 = vpop.permute.xlu0 %1465
      %1467 = vrot.lane.b32.xlu0 %v918, 32
      %v1468 = vpop.permute.xlu0 %1467
      %1469 = vrot.lane.b32.xlu0 %v919, 32
      %v1470 = vpop.permute.xlu0 %1469
      %1471 = vrot.lane.b32.xlu0 %v920, 32
      %v1472 = vpop.permute.xlu0 %1471
      %1473 = vrot.lane.b32.xlu0 %v921, 32
      %v1474 = vpop.permute.xlu0 %1473
      %1475 = vrot.lane.b32.xlu0 %v922, 32
      %v1476 = vpop.permute.xlu0 %1475
      %1477 = vrot.lane.b32.xlu0 %v923, 32
      %v1478 = vpop.permute.xlu0 %1477
      %1479 = vrot.lane.b32.xlu0 %v924, 32
      %v1480 = vpop.permute.xlu0 %1479
      %1481 = vrot.lane.b32.xlu0 %v925, 32
      %v1482 = vpop.permute.xlu0 %1481
      %1483 = vrot.lane.b32.xlu0 %v926, 32
      %v1484 = vpop.permute.xlu0 %1483
      %1485 = vrot.lane.b32.xlu0 %v927, 32
      %v1486 = vpop.permute.xlu0 %1485
      %1487 = vrot.lane.b32.xlu0 %v928, 32
      %v1488 = vpop.permute.xlu0 %1487
      %1489 = vrot.lane.b32.xlu0 %v929, 32
      %v1490 = vpop.permute.xlu0 %1489
      %1491 = vrot.lane.b32.xlu0 %v930, 32
      %v1492 = vpop.permute.xlu0 %1491
      %1493 = vrot.lane.b32.xlu0 %v931, 32
      %v1494 = vpop.permute.xlu0 %1493
      %1495 = vrot.lane.b32.xlu0 %v932, 32
      %v1496 = vpop.permute.xlu0 %1495
      %1497 = vrot.lane.b32.xlu0 %v933, 32
      %v1498 = vpop.permute.xlu0 %1497
      %1499 = vrot.lane.b32.xlu0 %v934, 32
      %v1500 = vpop.permute.xlu0 %1499
      %1501 = vrot.lane.b32.xlu0 %v935, 32
      %v1502 = vpop.permute.xlu0 %1501
      %1503 = vrot.lane.b32.xlu0 %v936, 32
      %v1504 = vpop.permute.xlu0 %1503
      %1505 = vrot.lane.b32.xlu0 %v937, 32
      %v1506 = vpop.permute.xlu0 %1505
      %1507 = vrot.lane.b32.xlu0 %v938, 32
      %v1508 = vpop.permute.xlu0 %1507
      %1509 = vrot.lane.b32.xlu0 %v939, 32
      %v1510 = vpop.permute.xlu0 %1509
      %1511 = vrot.lane.b32.xlu0 %v940, 32
      %v1512 = vpop.permute.xlu0 %1511
      %1513 = vrot.lane.b32.xlu0 %v941, 32
      %v1514 = vpop.permute.xlu0 %1513
      %1515 = vrot.lane.b32.xlu0 %v942, 32
      %v1516 = vpop.permute.xlu0 %1515
      %1517 = vrot.lane.b32.xlu0 %v943, 32
      %v1518 = vpop.permute.xlu0 %1517
      %1519 = vrot.lane.b32.xlu0 %v944, 32
      %v1520 = vpop.permute.xlu0 %1519
      %1521 = vrot.lane.b32.xlu0 %v945, 32
      %v1522 = vpop.permute.xlu0 %1521
      %1587 = vrot.lane.b32.xlu0 %v947, 64
      %v1588 = vpop.permute.xlu0 %1587
      %1589 = vrot.lane.b32.xlu0 %v948, 64
      %v1590 = vpop.permute.xlu0 %1589
      %1591 = vrot.lane.b32.xlu0 %v949, 64
      %v1592 = vpop.permute.xlu0 %1591
      %1593 = vrot.lane.b32.xlu0 %v950, 64
      %v1594 = vpop.permute.xlu0 %1593
      %1595 = vrot.lane.b32.xlu0 %v951, 64
      %v1596 = vpop.permute.xlu0 %1595
      %1597 = vrot.lane.b32.xlu0 %v952, 64
      %v1598 = vpop.permute.xlu0 %1597
      %1599 = vrot.lane.b32.xlu0 %v953, 64
      %v1600 = vpop.permute.xlu0 %1599
      %1601 = vrot.lane.b32.xlu0 %v954, 64
      %v1602 = vpop.permute.xlu0 %1601
      %1603 = vrot.lane.b32.xlu0 %v955, 64
      %v1604 = vpop.permute.xlu0 %1603
      %1605 = vrot.lane.b32.xlu0 %v956, 64
      %v1606 = vpop.permute.xlu0 %1605
      %1607 = vrot.lane.b32.xlu0 %v957, 64
      %v1608 = vpop.permute.xlu0 %1607
      %1609 = vrot.lane.b32.xlu0 %v958, 64
      %v1610 = vpop.permute.xlu0 %1609
      %1611 = vrot.lane.b32.xlu0 %v959, 64
      %v1612 = vpop.permute.xlu0 %1611
      %1613 = vrot.lane.b32.xlu0 %v960, 64
      %v1614 = vpop.permute.xlu0 %1613
      %1615 = vrot.lane.b32.xlu0 %v961, 64
      %v1616 = vpop.permute.xlu0 %1615
      %1617 = vrot.lane.b32.xlu0 %v962, 64
      %v1618 = vpop.permute.xlu0 %1617
      %1619 = vrot.lane.b32.xlu0 %v963, 64
      %v1620 = vpop.permute.xlu0 %1619
      %1621 = vrot.lane.b32.xlu0 %v964, 64
      %v1622 = vpop.permute.xlu0 %1621
      %1623 = vrot.lane.b32.xlu0 %v965, 64
      %v1624 = vpop.permute.xlu0 %1623
      %1625 = vrot.lane.b32.xlu0 %v966, 64
      %v1626 = vpop.permute.xlu0 %1625
      %1627 = vrot.lane.b32.xlu0 %v967, 64
      %v1628 = vpop.permute.xlu0 %1627
      %1629 = vrot.lane.b32.xlu0 %v968, 64
      %v1630 = vpop.permute.xlu0 %1629
      %1631 = vrot.lane.b32.xlu0 %v969, 64
      %v1632 = vpop.permute.xlu0 %1631
      %1633 = vrot.lane.b32.xlu0 %v970, 64
      %v1634 = vpop.permute.xlu0 %1633
      %1635 = vrot.lane.b32.xlu0 %v971, 64
      %v1636 = vpop.permute.xlu0 %1635
      %1637 = vrot.lane.b32.xlu0 %v972, 64
      %v1638 = vpop.permute.xlu0 %1637
      %1639 = vrot.lane.b32.xlu0 %v973, 64
      %v1640 = vpop.permute.xlu0 %1639
      %1641 = vrot.lane.b32.xlu0 %v974, 64
      %v1642 = vpop.permute.xlu0 %1641
      %1643 = vrot.lane.b32.xlu0 %v975, 64
      %v1644 = vpop.permute.xlu0 %1643
      %1645 = vrot.lane.b32.xlu0 %v976, 64
      %v1646 = vpop.permute.xlu0 %1645
      %1647 = vrot.lane.b32.xlu0 %v977, 64
      %v1648 = vpop.permute.xlu0 %1647
      %1649 = vrot.lane.b32.xlu0 %v978, 64
      %v1650 = vpop.permute.xlu0 %1649
      %1715 = vrot.lane.b32.xlu0 %v979, 96
      %v1716 = vpop.permute.xlu0 %1715
      %1717 = vrot.lane.b32.xlu0 %v980, 96
      %v1718 = vpop.permute.xlu0 %1717
      %1719 = vrot.lane.b32.xlu0 %v981, 96
      %v1720 = vpop.permute.xlu0 %1719
      %1721 = vrot.lane.b32.xlu0 %v982, 96
      %v1722 = vpop.permute.xlu0 %1721
      %1723 = vrot.lane.b32.xlu0 %v983, 96
      %v1724 = vpop.permute.xlu0 %1723
      %1725 = vrot.lane.b32.xlu0 %v984, 96
      %v1726 = vpop.permute.xlu0 %1725
      %1727 = vrot.lane.b32.xlu0 %v985, 96
      %v1728 = vpop.permute.xlu0 %1727
      %1729 = vrot.lane.b32.xlu0 %v986, 96
      %v1730 = vpop.permute.xlu0 %1729
      %1731 = vrot.lane.b32.xlu0 %v987, 96
      %v1732 = vpop.permute.xlu0 %1731
      %1733 = vrot.lane.b32.xlu0 %v988, 96
      %v1734 = vpop.permute.xlu0 %1733
      %1735 = vrot.lane.b32.xlu0 %v989, 96
      %v1736 = vpop.permute.xlu0 %1735
      %1737 = vrot.lane.b32.xlu0 %v990, 96
      %v1738 = vpop.permute.xlu0 %1737
      %1739 = vrot.lane.b32.xlu0 %v991, 96
      %v1740 = vpop.permute.xlu0 %1739
      %1741 = vrot.lane.b32.xlu0 %v992, 96
      %v1742 = vpop.permute.xlu0 %1741
      %1743 = vrot.lane.b32.xlu0 %v993, 96
      %v1744 = vpop.permute.xlu0 %1743
      %1745 = vrot.lane.b32.xlu0 %v994, 96
      %v1746 = vpop.permute.xlu0 %1745
      %1747 = vrot.lane.b32.xlu0 %v995, 96
      %v1748 = vpop.permute.xlu0 %1747
      %1749 = vrot.lane.b32.xlu0 %v996, 96
      %v1750 = vpop.permute.xlu0 %1749
      %1751 = vrot.lane.b32.xlu0 %v997, 96
      %v1752 = vpop.permute.xlu0 %1751
      %1753 = vrot.lane.b32.xlu0 %v998, 96
      %v1754 = vpop.permute.xlu0 %1753
      %1755 = vrot.lane.b32.xlu0 %v999, 96
      %v1756 = vpop.permute.xlu0 %1755
      %1757 = vrot.lane.b32.xlu0 %v1000, 96
      %v1758 = vpop.permute.xlu0 %1757
      %1759 = vrot.lane.b32.xlu0 %v1001, 96
      %v1760 = vpop.permute.xlu0 %1759
      %1761 = vrot.lane.b32.xlu0 %v1002, 96
      %v1762 = vpop.permute.xlu0 %1761
      %1763 = vrot.lane.b32.xlu0 %v1003, 96
      %v1764 = vpop.permute.xlu0 %1763
      %1765 = vrot.lane.b32.xlu0 %v1004, 96
      %v1766 = vpop.permute.xlu0 %1765
      %1767 = vrot.lane.b32.xlu0 %v1005, 96
      %v1768 = vpop.permute.xlu0 %1767
      %1769 = vrot.lane.b32.xlu0 %v1006, 96
      %v1770 = vpop.permute.xlu0 %1769
      %1771 = vrot.lane.b32.xlu0 %v1007, 96
      %v1772 = vpop.permute.xlu0 %1771
      %1773 = vrot.lane.b32.xlu0 %v1008, 96
      %v1774 = vpop.permute.xlu0 %1773
      %1775 = vrot.lane.b32.xlu0 %v1009, 96
      %v1776 = vpop.permute.xlu0 %1775
      %1777 = vrot.lane.b32.xlu0 %v1010, 96
      %v1778 = vpop.permute.xlu0 %1777
      %v1811 = vsel %vm665, %v754, %v1076
      %v1812 = vsel %vm665, %v755, %v1078
      %v1813 = vsel %vm665, %v756, %v1080
      %v1814 = vsel %vm665, %v757, %v1082
      %v1815 = vsel %vm665, %v758, %v1084
      %v1816 = vsel %vm665, %v759, %v1086
      %v1817 = vsel %vm665, %v760, %v1088
      %v1818 = vsel %vm665, %v761, %v1090
      %v1819 = vsel %vm665, %v762, %v1092
      %v1820 = vsel %vm665, %v763, %v1094
      %v1821 = vsel %vm665, %v764, %v1096
      %v1822 = vsel %vm665, %v765, %v1098
      %v1823 = vsel %vm665, %v766, %v1100
      %v1824 = vsel %vm665, %v767, %v1102
      %v1825 = vsel %vm665, %v768, %v1104
      %v1826 = vsel %vm665, %v769, %v1106
      %v1827 = vsel %vm665, %v770, %v1108
      %v1828 = vsel %vm665, %v771, %v1110
      %v1829 = vsel %vm665, %v772, %v1112
      %v1830 = vsel %vm665, %v773, %v1114
      %v1831 = vsel %vm665, %v774, %v1116
      %v1832 = vsel %vm665, %v775, %v1118
      %v1833 = vsel %vm665, %v776, %v1120
      %v1834 = vsel %vm665, %v777, %v1122
      %v1835 = vsel %vm665, %v778, %v1124
      %v1836 = vsel %vm665, %v779, %v1126
      %v1837 = vsel %vm665, %v780, %v1128
      %v1838 = vsel %vm665, %v781, %v1130
      %v1839 = vsel %vm665, %v782, %v1132
      %v1840 = vsel %vm665, %v783, %v1134
      %v1841 = vsel %vm665, %v784, %v1136
      %v1842 = vsel %vm665, %v785, %v1138
      %vm1843 = vcmask 523264
      %v1844 = vsel %vm1843, %v1811, %v1204
      %v1845 = vsel %vm1843, %v1812, %v1206
      %v1846 = vsel %vm1843, %v1813, %v1208
      %v1847 = vsel %vm1843, %v1814, %v1210
      %v1848 = vsel %vm1843, %v1815, %v1212
      %v1849 = vsel %vm1843, %v1816, %v1214
      %v1850 = vsel %vm1843, %v1817, %v1216
      %v1851 = vsel %vm1843, %v1818, %v1218
      %v1852 = vsel %vm1843, %v1819, %v1220
      %v1853 = vsel %vm1843, %v1820, %v1222
      %v1854 = vsel %vm1843, %v1821, %v1224
      %v1855 = vsel %vm1843, %v1822, %v1226
      %v1856 = vsel %vm1843, %v1823, %v1228
      %v1857 = vsel %vm1843, %v1824, %v1230
      %v1858 = vsel %vm1843, %v1825, %v1232
      %v1859 = vsel %vm1843, %v1826, %v1234
      %v1860 = vsel %vm1843, %v1827, %v1236
      %v1861 = vsel %vm1843, %v1828, %v1238
      %v1862 = vsel %vm1843, %v1829, %v1240
      %v1863 = vsel %vm1843, %v1830, %v1242
      %v1864 = vsel %vm1843, %v1831, %v1244
      %v1865 = vsel %vm1843, %v1832, %v1246
      %v1866 = vsel %vm1843, %v1833, %v1248
      %v1867 = vsel %vm1843, %v1834, %v1250
      %v1868 = vsel %vm1843, %v1835, %v1252
      %v1869 = vsel %vm1843, %v1836, %v1254
      %v1870 = vsel %vm1843, %v1837, %v1256
      %v1871 = vsel %vm1843, %v1838, %v1258
      %v1872 = vsel %vm1843, %v1839, %v1260
      %v1873 = vsel %vm1843, %v1840, %v1262
      %v1874 = vsel %vm1843, %v1841, %v1264
      %v1875 = vsel %vm1843, %v1842, %v1266
      %vm1876 = vcmask 785408
      %v1877 = vsel %vm1876, %v1844, %v1332
      %v1878 = vsel %vm1876, %v1845, %v1334
      %v1879 = vsel %vm1876, %v1846, %v1336
      %v1880 = vsel %vm1876, %v1847, %v1338
      %v1881 = vsel %vm1876, %v1848, %v1340
      %v1882 = vsel %vm1876, %v1849, %v1342
      %v1883 = vsel %vm1876, %v1850, %v1344
      %v1884 = vsel %vm1876, %v1851, %v1346
      %v1885 = vsel %vm1876, %v1852, %v1348
      %v1886 = vsel %vm1876, %v1853, %v1350
      %v1887 = vsel %vm1876, %v1854, %v1352
      %v1888 = vsel %vm1876, %v1855, %v1354
      %v1889 = vsel %vm1876, %v1856, %v1356
      %v1890 = vsel %vm1876, %v1857, %v1358
      %v1891 = vsel %vm1876, %v1858, %v1360
      %v1892 = vsel %vm1876, %v1859, %v1362
      %v1893 = vsel %vm1876, %v1860, %v1364
      %v1894 = vsel %vm1876, %v1861, %v1366
      %v1895 = vsel %vm1876, %v1862, %v1368
      %v1896 = vsel %vm1876, %v1863, %v1370
      %v1897 = vsel %vm1876, %v1864, %v1372
      %v1898 = vsel %vm1876, %v1865, %v1374
      %v1899 = vsel %vm1876, %v1866, %v1376
      %v1900 = vsel %vm1876, %v1867, %v1378
      %v1901 = vsel %vm1876, %v1868, %v1380
      %v1902 = vsel %vm1876, %v1869, %v1382
      %v1903 = vsel %vm1876, %v1870, %v1384
      %v1904 = vsel %vm1876, %v1871, %v1386
      %v1905 = vsel %vm1876, %v1872, %v1388
      %v1906 = vsel %vm1876, %v1873, %v1390
      %v1907 = vsel %vm1876, %v1874, %v1392
      %v1908 = vsel %vm1876, %v1875, %v1394
      %v1909 = vsel %vm665, %v882, %v1460
      %v1910 = vsel %vm665, %v883, %v1462
      %v1911 = vsel %vm665, %v884, %v1464
      %v1912 = vsel %vm665, %v885, %v1466
      %v1913 = vsel %vm665, %v886, %v1468
      %v1914 = vsel %vm665, %v887, %v1470
      %v1915 = vsel %vm665, %v888, %v1472
      %v1916 = vsel %vm665, %v889, %v1474
      %v1917 = vsel %vm665, %v890, %v1476
      %v1918 = vsel %vm665, %v891, %v1478
      %v1919 = vsel %vm665, %v892, %v1480
      %v1920 = vsel %vm665, %v893, %v1482
      %v1921 = vsel %vm665, %v894, %v1484
      %v1922 = vsel %vm665, %v895, %v1486
      %v1923 = vsel %vm665, %v896, %v1488
      %v1924 = vsel %vm665, %v897, %v1490
      %v1925 = vsel %vm665, %v898, %v1492
      %v1926 = vsel %vm665, %v899, %v1494
      %v1927 = vsel %vm665, %v900, %v1496
      %v1928 = vsel %vm665, %v901, %v1498
      %v1929 = vsel %vm665, %v902, %v1500
      %v1930 = vsel %vm665, %v903, %v1502
      %v1931 = vsel %vm665, %v904, %v1504
      %v1932 = vsel %vm665, %v905, %v1506
      %v1933 = vsel %vm665, %v906, %v1508
      %v1934 = vsel %vm665, %v907, %v1510
      %v1935 = vsel %vm665, %v908, %v1512
      %v1936 = vsel %vm665, %v909, %v1514
      %v1937 = vsel %vm665, %v910, %v1516
      %v1938 = vsel %vm665, %v911, %v1518
      %v1939 = vsel %vm665, %v912, %v1520
      %v1940 = vsel %vm665, %v913, %v1522
      %v1941 = vsel %vm1843, %v1909, %v1588
      %v1942 = vsel %vm1843, %v1910, %v1590
      %v1943 = vsel %vm1843, %v1911, %v1592
      %v1944 = vsel %vm1843, %v1912, %v1594
      %v1945 = vsel %vm1843, %v1913, %v1596
      %v1946 = vsel %vm1843, %v1914, %v1598
      %v1947 = vsel %vm1843, %v1915, %v1600
      %v1948 = vsel %vm1843, %v1916, %v1602
      %v1949 = vsel %vm1843, %v1917, %v1604
      %v1950 = vsel %vm1843, %v1918, %v1606
      %v1951 = vsel %vm1843, %v1919, %v1608
      %v1952 = vsel %vm1843, %v1920, %v1610
      %v1953 = vsel %vm1843, %v1921, %v1612
      %v1954 = vsel %vm1843, %v1922, %v1614
      %v1955 = vsel %vm1843, %v1923, %v1616
      %v1956 = vsel %vm1843, %v1924, %v1618
      %v1957 = vsel %vm1843, %v1925, %v1620
      %v1958 = vsel %vm1843, %v1926, %v1622
      %v1959 = vsel %vm1843, %v1927, %v1624
      %v1960 = vsel %vm1843, %v1928, %v1626
      %v1961 = vsel %vm1843, %v1929, %v1628
      %v1962 = vsel %vm1843, %v1930, %v1630
      %v1963 = vsel %vm1843, %v1931, %v1632
      %v1964 = vsel %vm1843, %v1932, %v1634
      %v1965 = vsel %vm1843, %v1933, %v1636
      %v1966 = vsel %vm1843, %v1934, %v1638
      %v1967 = vsel %vm1843, %v1935, %v1640
      %v1968 = vsel %vm1843, %v1936, %v1642
      %v1969 = vsel %vm1843, %v1937, %v1644
      %v1970 = vsel %vm1843, %v1938, %v1646
      %v1971 = vsel %vm1843, %v1939, %v1648
      %v1972 = vsel %vm1843, %v1940, %v1650
      %v1973 = vsel %vm1876, %v1941, %v1716
      %v1974 = vsel %vm1876, %v1942, %v1718
      %v1975 = vsel %vm1876, %v1943, %v1720
      %v1976 = vsel %vm1876, %v1944, %v1722
      %v1977 = vsel %vm1876, %v1945, %v1724
      %v1978 = vsel %vm1876, %v1946, %v1726
      %v1979 = vsel %vm1876, %v1947, %v1728
      %v1980 = vsel %vm1876, %v1948, %v1730
      %v1981 = vsel %vm1876, %v1949, %v1732
      %v1982 = vsel %vm1876, %v1950, %v1734
      %v1983 = vsel %vm1876, %v1951, %v1736
      %v1984 = vsel %vm1876, %v1952, %v1738
      %v1985 = vsel %vm1876, %v1953, %v1740
      %v1986 = vsel %vm1876, %v1954, %v1742
      %v1987 = vsel %vm1876, %v1955, %v1744
      %v1988 = vsel %vm1876, %v1956, %v1746
      %v1989 = vsel %vm1876, %v1957, %v1748
      %v1990 = vsel %vm1876, %v1958, %v1750
      %v1991 = vsel %vm1876, %v1959, %v1752
      %v1992 = vsel %vm1876, %v1960, %v1754
      %v1993 = vsel %vm1876, %v1961, %v1756
      %v1994 = vsel %vm1876, %v1962, %v1758
      %v1995 = vsel %vm1876, %v1963, %v1760
      %v1996 = vsel %vm1876, %v1964, %v1762
      %v1997 = vsel %vm1876, %v1965, %v1764
      %v1998 = vsel %vm1876, %v1966, %v1766
      %v1999 = vsel %vm1876, %v1967, %v1768
      %v2000 = vsel %vm1876, %v1968, %v1770
      %v2001 = vsel %vm1876, %v1969, %v1772
      %v2002 = vsel %vm1876, %v1970, %v1774
      %v2003 = vsel %vm1876, %v1971, %v1776
      %v2004 = vsel %vm1876, %v1972, %v1778
      %v2005 = vpack.c.bf16 %v1878, %v1877
      %v2006 = vpack.c.bf16 %v1974, %v1973
      %v2007 = vpack.c.bf16 %v1012, %v1011
      %v2008 = vpack.c.bf16 %v1880, %v1879
      %v2009 = vpack.c.bf16 %v1976, %v1975
      %v2010 = vpack.c.bf16 %v1014, %v1013
      %v2011 = vpack.c.bf16 %v1882, %v1881
      %v2012 = vpack.c.bf16 %v1978, %v1977
      %v2013 = vpack.c.bf16 %v1016, %v1015
      %v2014 = vpack.c.bf16 %v1884, %v1883
      %v2015 = vpack.c.bf16 %v1980, %v1979
      %v2016 = vpack.c.bf16 %v1018, %v1017
      %v2017 = vpack.c.bf16 %v1886, %v1885
      %v2018 = vpack.c.bf16 %v1982, %v1981
      %v2019 = vpack.c.bf16 %v1020, %v1019
      %v2020 = vpack.c.bf16 %v1888, %v1887
      %v2021 = vpack.c.bf16 %v1984, %v1983
      %v2022 = vpack.c.bf16 %v1022, %v1021
      %v2023 = vpack.c.bf16 %v1890, %v1889
      %v2024 = vpack.c.bf16 %v1986, %v1985
      %v2025 = vpack.c.bf16 %v1024, %v1023
      %v2026 = vpack.c.bf16 %v1892, %v1891
      %v2027 = vpack.c.bf16 %v1988, %v1987
      %v2028 = vpack.c.bf16 %v1026, %v1025
      %v2029 = vpack.c.bf16 %v1894, %v1893
      %v2030 = vpack.c.bf16 %v1990, %v1989
      %v2031 = vpack.c.bf16 %v1028, %v1027
      %v2032 = vpack.c.bf16 %v1896, %v1895
      %v2033 = vpack.c.bf16 %v1992, %v1991
      %v2034 = vpack.c.bf16 %v1030, %v1029
      %v2035 = vpack.c.bf16 %v1898, %v1897
      %v2036 = vpack.c.bf16 %v1994, %v1993
      %v2037 = vpack.c.bf16 %v1032, %v1031
      %v2038 = vpack.c.bf16 %v1900, %v1899
      %v2039 = vpack.c.bf16 %v1996, %v1995
      %v2040 = vpack.c.bf16 %v1034, %v1033
      %v2041 = vpack.c.bf16 %v1902, %v1901
      %v2042 = vpack.c.bf16 %v1998, %v1997
      %v2043 = vpack.c.bf16 %v1036, %v1035
      %v2044 = vpack.c.bf16 %v1904, %v1903
      %v2045 = vpack.c.bf16 %v2000, %v1999
      %v2046 = vpack.c.bf16 %v1038, %v1037
      %v2047 = vpack.c.bf16 %v1906, %v1905
      %v2048 = vpack.c.bf16 %v2002, %v2001
      %v2049 = vpack.c.bf16 %v1040, %v1039
      %v2050 = vpack.c.bf16 %v1908, %v1907
      %v2051 = vpack.c.bf16 %v2004, %v2003
      %v2052 = vpack.c.bf16 %v1042, %v1041
      %v2053 = vld [vmem:[%s3] sm:$0xf]
      %v2054 = vld [vmem:[%s3 + $0x4] sm:$0xf]
      %v2055 = vld [vmem:[%s3 + $0x8] sm:$0xf]
      %v2056 = vld [vmem:[%s3 + $0xc] sm:$0xf]
      %v2057 = vld [vmem:[%s3 + $0x10] sm:$0xf]
      %v2058 = vld [vmem:[%s3 + $0x14] sm:$0xf]
      %v2059 = vld [vmem:[%s3 + $0x18] sm:$0xf]
      %v2060 = vld [vmem:[%s3 + $0x1c] sm:$0xf]
      %v2061 = vld [vmem:[%s3 + $0x20] sm:$0xf]
      %v2062 = vld [vmem:[%s3 + $0x24] sm:$0xf]
      %v2063 = vld [vmem:[%s3 + $0x28] sm:$0xf]
      %v2064 = vld [vmem:[%s3 + $0x2c] sm:$0xf]
      %v2065 = vld [vmem:[%s3 + $0x30] sm:$0xf]
      %v2066 = vld [vmem:[%s3 + $0x34] sm:$0xf]
      %v2067 = vld [vmem:[%s3 + $0x38] sm:$0xf]
      %v2068 = vld [vmem:[%s3 + $0x3c] sm:$0xf]
      %v2069 = vld [vmem:[%s3 + $0x40] sm:$0xf]
      %v2070 = vld [vmem:[%s3 + $0x44] sm:$0xf]
      %v2071 = vld [vmem:[%s3 + $0x48] sm:$0xf]
      %v2072 = vld [vmem:[%s3 + $0x4c] sm:$0xf]
      %v2073 = vld [vmem:[%s3 + $0x50] sm:$0xf]
      %v2074 = vld [vmem:[%s3 + $0x54] sm:$0xf]
      %v2075 = vld [vmem:[%s3 + $0x58] sm:$0xf]
      %v2076 = vld [vmem:[%s3 + $0x5c] sm:$0xf]
      %v2077 = vld [vmem:[%s3 + $0x60] sm:$0xf]
      %v2078 = vld [vmem:[%s3 + $0x64] sm:$0xf]
      %v2079 = vld [vmem:[%s3 + $0x68] sm:$0xf]
      %v2080 = vld [vmem:[%s3 + $0x6c] sm:$0xf]
      %v2081 = vld [vmem:[%s3 + $0x70] sm:$0xf]
      %v2082 = vld [vmem:[%s3 + $0x74] sm:$0xf]
      %v2083 = vld [vmem:[%s3 + $0x78] sm:$0xf]
      %v2084 = vld [vmem:[%s3 + $0x7c] sm:$0xf]
      %v2085 = vld [vmem:[%s3 + $0x80] sm:$0xf]
      %v2086 = vld [vmem:[%s3 + $0x84] sm:$0xf]
      %v2087 = vld [vmem:[%s3 + $0x88] sm:$0xf]
      %v2088 = vld [vmem:[%s3 + $0x8c] sm:$0xf]
      %v2089 = vld [vmem:[%s4] sm:$0x1]
      %v2091 = vlaneseq
      %v2092 = vshrl.u32 %v2091, 7
      %v2093 = vsub.s32 0, %v2092
      %v2094 = vrot.slane %v2089, %v2093
      %v2132 = vunpack.c.l.b16 %v2053
      %v2133 = vunpack.c.l.b16 %v2054
      %v2134 = vunpack.c.l.b16 %v2055
      %v2135 = vunpack.c.l.b16 %v2056
      %v2136 = vunpack.c.l.b16 %v2057
      %v2137 = vunpack.c.l.b16 %v2058
      %v2138 = vunpack.c.l.b16 %v2059
      %v2139 = vunpack.c.l.b16 %v2060
      %v2140 = vunpack.c.l.b16 %v2061
      %v2141 = vunpack.c.l.b16 %v2062
      %v2142 = vunpack.c.l.b16 %v2063
      %v2143 = vunpack.c.l.b16 %v2064
      %v2144 = vunpack.c.l.b16 %v2065
      %v2145 = vunpack.c.l.b16 %v2066
      %v2146 = vunpack.c.l.b16 %v2067
      %v2147 = vunpack.c.l.b16 %v2068
      %v2148 = vunpack.c.l.b16 %v2069
      %v2149 = vunpack.c.l.b16 %v2070
      %v2150 = vunpack.c.l.b16 %v2071
      %v2151 = vunpack.c.l.b16 %v2072
      %v2152 = vunpack.c.l.b16 %v2073
      %v2153 = vunpack.c.l.b16 %v2074
      %v2154 = vunpack.c.l.b16 %v2075
      %v2155 = vunpack.c.l.b16 %v2076
      %v2156 = vunpack.c.l.b16 %v2077
      %v2157 = vunpack.c.l.b16 %v2078
      %v2158 = vunpack.c.l.b16 %v2079
      %v2159 = vunpack.c.l.b16 %v2080
      %v2160 = vunpack.c.l.b16 %v2081
      %v2161 = vunpack.c.l.b16 %v2082
      %v2162 = vunpack.c.l.b16 %v2083
      %v2163 = vunpack.c.l.b16 %v2084
      %v2164 = vunpack.c.l.b16 %v2085
      %v2165 = vunpack.c.l.b16 %v2086
      %v2166 = vunpack.c.l.b16 %v2087
      %v2167 = vunpack.c.l.b16 %v2088
      %v2168 = vpack.c.b16 %v2133, %v2132
      %v2169 = vpack.c.b16 %v2135, %v2134
      %v2170 = vpack.c.b16 %v2137, %v2136
      %v2171 = vpack.c.b16 %v2139, %v2138
      %v2172 = vpack.c.b16 %v2141, %v2140
      %v2173 = vpack.c.b16 %v2143, %v2142
      %v2174 = vpack.c.b16 %v2145, %v2144
      %v2175 = vpack.c.b16 %v2147, %v2146
      %v2176 = vpack.c.b16 %v2149, %v2148
      %v2177 = vpack.c.b16 %v2151, %v2150
      %v2178 = vpack.c.b16 %v2153, %v2152
      %v2179 = vpack.c.b16 %v2155, %v2154
      %v2180 = vpack.c.b16 %v2157, %v2156
      %v2181 = vpack.c.b16 %v2159, %v2158
      %v2182 = vpack.c.b16 %v2161, %v2160
      %v2183 = vpack.c.b16 %v2163, %v2162
      %v2184 = vpack.c.b16 %v2165, %v2164
      %v2185 = vpack.c.b16 %v2167, %v2166
      %v2205 = vsel %vm665, %v2007, 0
      %v2208 = vsel %vm665, %v2010, 0
      %v2211 = vsel %vm665, %v2013, 0
      %v2214 = vsel %vm665, %v2016, 0
      %v2217 = vsel %vm665, %v2019, 0
      %v2220 = vsel %vm665, %v2022, 0
      %v2223 = vsel %vm665, %v2025, 0
      %v2226 = vsel %vm665, %v2028, 0
      %v2229 = vsel %vm665, %v2031, 0
      %v2232 = vsel %vm665, %v2034, 0
      %v2235 = vsel %vm665, %v2037, 0
      %v2238 = vsel %vm665, %v2040, 0
      %v2241 = vsel %vm665, %v2043, 0
      %v2244 = vsel %vm665, %v2046, 0
      %v2247 = vsel %vm665, %v2049, 0
      %v2250 = vsel %vm665, %v2052, 0
      %2252 = vmatprep.subr.bf16.mxu0 0
      %2253 = vmatpush1.bf16.msra.mxu0 %v2175
      %2254 = vmatprep.subr.bf16.mxu0 0
      %2255 = vmatpush1.bf16.msra.mxu0 %v2174
      %2256 = vmatprep.subr.bf16.mxu0 0
      %2257 = vmatpush1.bf16.msra.mxu0 %v2173
      %2258 = vmatprep.subr.bf16.mxu0 0
      %2259 = vmatpush1.bf16.msra.mxu0 %v2172
      %2260 = vmatprep.subr.bf16.mxu0 0
      %2261 = vmatpush1.bf16.msra.mxu0 %v2171
      %2262 = vmatprep.subr.bf16.mxu0 0
      %2263 = vmatpush1.bf16.msra.mxu0 %v2170
      %2264 = vmatprep.subr.bf16.mxu0 0
      %2265 = vmatpush1.bf16.msra.mxu0 %v2169
      %2266 = vmatprep.subr.bf16.mxu0 0
      %2267 = vmatpush1.bf16.msra.mxu0 %v2168
      %2268 = vmatprep.subr.bf16.mxu0 0
      %2269 = vmatpush2.bf16.msra.mxu0 %v2183
      %2270 = vmatprep.subr.bf16.mxu0 0
      %2271 = vmatpush2.bf16.msra.mxu0 %v2182
      %2272 = vmatprep.subr.bf16.mxu0 0
      %2273 = vmatpush2.bf16.msra.mxu0 %v2181
      %2274 = vmatprep.subr.bf16.mxu0 0
      %2275 = vmatpush2.bf16.msra.mxu0 %v2180
      %2276 = vmatprep.subr.bf16.mxu0 0
      %2277 = vmatpush2.bf16.msra.mxu0 %v2179
      %2278 = vmatprep.subr.bf16.mxu0 0
      %2279 = vmatpush2.bf16.msra.mxu0 %v2178
      %2280 = vmatprep.subr.bf16.mxu0 0
      %2281 = vmatpush2.bf16.msra.mxu0 %v2177
      %2282 = vmatprep.subr.bf16.mxu0 0
      %2283 = vmatpush2.bf16.msra.mxu0 %v2176
      %2284 = vmatprep.mubr.bf16.mxu0 %v2006
      %2285 = vmatmul.mubr.bf16.gmra.mxu0 %v2005
      %v2286 = vpop.f32.mrf.mxu0
      %v2287 = vadd.f32 %v2094, %v2286
      %v2288 = vpop.f32.mrf.mxu0
      %v2289 = vpop.f32.mrf.mxu0
      %v2290 = vadd.f32 %v2094, %v2289
      %v2291 = vpop.f32.mrf.mxu0
      %2292 = vmatprep.mubr.bf16.mxu0 %v2009
      %2293 = vmatmul.mubr.bf16.gmra.mxu0 %v2008
      %v2294 = vpop.f32.mrf.mxu0
      %v2295 = vadd.f32 %v2094, %v2294
      %v2296 = vpop.f32.mrf.mxu0
      %v2297 = vpop.f32.mrf.mxu0
      %v2298 = vadd.f32 %v2094, %v2297
      %v2299 = vpop.f32.mrf.mxu0
      %2300 = vmatprep.mubr.bf16.mxu0 %v2012
      %2301 = vmatmul.mubr.bf16.gmra.mxu0 %v2011
      %v2302 = vpop.f32.mrf.mxu0
      %v2303 = vadd.f32 %v2094, %v2302
      %v2304 = vpop.f32.mrf.mxu0
      %v2305 = vpop.f32.mrf.mxu0
      %v2306 = vadd.f32 %v2094, %v2305
      %v2307 = vpop.f32.mrf.mxu0
      %2308 = vmatprep.mubr.bf16.mxu0 %v2015
      %2309 = vmatmul.mubr.bf16.gmra.mxu0 %v2014
      %v2310 = vpop.f32.mrf.mxu0
      %v2311 = vadd.f32 %v2094, %v2310
      %v2312 = vpop.f32.mrf.mxu0
      %v2313 = vpop.f32.mrf.mxu0
      %v2314 = vadd.f32 %v2094, %v2313
      %v2315 = vpop.f32.mrf.mxu0
      %2316 = vmatprep.mubr.bf16.mxu0 %v2018
      %2317 = vmatmul.mubr.bf16.gmra.mxu0 %v2017
      %v2318 = vpop.f32.mrf.mxu0
      %v2319 = vadd.f32 %v2094, %v2318
      %v2320 = vpop.f32.mrf.mxu0
      %v2321 = vpop.f32.mrf.mxu0
      %v2322 = vadd.f32 %v2094, %v2321
      %v2323 = vpop.f32.mrf.mxu0
      %2324 = vmatprep.mubr.bf16.mxu0 %v2021
      %2325 = vmatmul.mubr.bf16.gmra.mxu0 %v2020
      %v2326 = vpop.f32.mrf.mxu0
      %v2327 = vadd.f32 %v2094, %v2326
      %v2328 = vpop.f32.mrf.mxu0
      %v2329 = vpop.f32.mrf.mxu0
      %v2330 = vadd.f32 %v2094, %v2329
      %v2331 = vpop.f32.mrf.mxu0
      %2332 = vmatprep.mubr.bf16.mxu0 %v2024
      %2333 = vmatmul.mubr.bf16.gmra.mxu0 %v2023
      %v2334 = vpop.f32.mrf.mxu0
      %v2335 = vadd.f32 %v2094, %v2334
      %v2336 = vpop.f32.mrf.mxu0
      %v2337 = vpop.f32.mrf.mxu0
      %v2338 = vadd.f32 %v2094, %v2337
      %v2339 = vpop.f32.mrf.mxu0
      %2340 = vmatprep.mubr.bf16.mxu0 %v2027
      %2341 = vmatmul.mubr.bf16.gmra.mxu0 %v2026
      %v2342 = vpop.f32.mrf.mxu0
      %v2343 = vadd.f32 %v2094, %v2342
      %v2344 = vpop.f32.mrf.mxu0
      %v2345 = vpop.f32.mrf.mxu0
      %v2346 = vadd.f32 %v2094, %v2345
      %v2347 = vpop.f32.mrf.mxu0
      %2348 = vmatprep.mubr.bf16.mxu0 %v2030
      %2349 = vmatmul.mubr.bf16.gmra.mxu0 %v2029
      %v2350 = vpop.f32.mrf.mxu0
      %v2351 = vadd.f32 %v2094, %v2350
      %v2352 = vpop.f32.mrf.mxu0
      %v2353 = vpop.f32.mrf.mxu0
      %v2354 = vadd.f32 %v2094, %v2353
      %v2355 = vpop.f32.mrf.mxu0
      %2356 = vmatprep.mubr.bf16.mxu0 %v2033
      %2357 = vmatmul.mubr.bf16.gmra.mxu0 %v2032
      %v2358 = vpop.f32.mrf.mxu0
      %v2359 = vadd.f32 %v2094, %v2358
      %v2360 = vpop.f32.mrf.mxu0
      %v2361 = vpop.f32.mrf.mxu0
      %v2362 = vadd.f32 %v2094, %v2361
      %v2363 = vpop.f32.mrf.mxu0
      %2364 = vmatprep.mubr.bf16.mxu0 %v2036
      %2365 = vmatmul.mubr.bf16.gmra.mxu0 %v2035
      %v2366 = vpop.f32.mrf.mxu0
      %v2367 = vadd.f32 %v2094, %v2366
      %v2368 = vpop.f32.mrf.mxu0
      %v2369 = vpop.f32.mrf.mxu0
      %v2370 = vadd.f32 %v2094, %v2369
      %v2371 = vpop.f32.mrf.mxu0
      %2372 = vmatprep.mubr.bf16.mxu0 %v2039
      %2373 = vmatmul.mubr.bf16.gmra.mxu0 %v2038
      %v2374 = vpop.f32.mrf.mxu0
      %v2375 = vadd.f32 %v2094, %v2374
      %v2376 = vpop.f32.mrf.mxu0
      %v2377 = vpop.f32.mrf.mxu0
      %v2378 = vadd.f32 %v2094, %v2377
      %v2379 = vpop.f32.mrf.mxu0
      %2380 = vmatprep.mubr.bf16.mxu0 %v2042
      %2381 = vmatmul.mubr.bf16.gmra.mxu0 %v2041
      %v2382 = vpop.f32.mrf.mxu0
      %v2383 = vadd.f32 %v2094, %v2382
      %v2384 = vpop.f32.mrf.mxu0
      %v2385 = vpop.f32.mrf.mxu0
      %v2386 = vadd.f32 %v2094, %v2385
      %v2387 = vpop.f32.mrf.mxu0
      %2388 = vmatprep.mubr.bf16.mxu0 %v2045
      %2389 = vmatmul.mubr.bf16.gmra.mxu0 %v2044
      %v2390 = vpop.f32.mrf.mxu0
      %v2391 = vadd.f32 %v2094, %v2390
      %v2392 = vpop.f32.mrf.mxu0
      %v2393 = vpop.f32.mrf.mxu0
      %v2394 = vadd.f32 %v2094, %v2393
      %v2395 = vpop.f32.mrf.mxu0
      %2396 = vmatprep.mubr.bf16.mxu0 %v2048
      %2397 = vmatmul.mubr.bf16.gmra.mxu0 %v2047
      %v2398 = vpop.f32.mrf.mxu0
      %v2399 = vadd.f32 %v2094, %v2398
      %v2400 = vpop.f32.mrf.mxu0
      %v2401 = vpop.f32.mrf.mxu0
      %v2402 = vadd.f32 %v2094, %v2401
      %v2403 = vpop.f32.mrf.mxu0
      %2404 = vmatprep.mubr.bf16.mxu0 %v2051
      %2405 = vmatmul.mubr.bf16.gmra.mxu0 %v2050
      %v2406 = vpop.f32.mrf.mxu0
      %v2407 = vadd.f32 %v2094, %v2406
      %v2408 = vpop.f32.mrf.mxu0
      %v2409 = vpop.f32.mrf.mxu0
      %v2410 = vadd.f32 %v2094, %v2409
      %v2411 = vpop.f32.mrf.mxu0
      %2412 = vdwg.mxu0
      %2413 = vmatprep.subr.bf16.mxu0 0
      %2414 = vmatpush1.bf16.msra.mxu0 0
      %2415 = vmatprep.subr.bf16.mxu0 0
      %2416 = vmatpush1.bf16.msra.mxu0 0
      %2417 = vmatprep.subr.bf16.mxu0 0
      %2418 = vmatpush1.bf16.msra.mxu0 0
      %2419 = vmatprep.subr.bf16.mxu0 0
      %2420 = vmatpush1.bf16.msra.mxu0 0
      %2421 = vmatprep.subr.bf16.mxu0 0
      %2422 = vmatpush1.bf16.msra.mxu0 0
      %2423 = vmatprep.subr.bf16.mxu0 0
      %2424 = vmatpush1.bf16.msra.mxu0 0
      %2425 = vmatprep.subr.bf16.mxu0 0
      %2426 = vmatpush1.bf16.msra.mxu0 %v2185
      %2427 = vmatprep.subr.bf16.mxu0 0
      %2428 = vmatpush1.bf16.msra.mxu0 %v2184
      %2429 = vmatprep.subr.bf16.mxu0 0
      %2430 = vmatpush2.bf16.msra.mxu0 0
      %2431 = vmatprep.subr.bf16.mxu0 0
      %2432 = vmatpush2.bf16.msra.mxu0 0
      %2433 = vmatprep.subr.bf16.mxu0 0
      %2434 = vmatpush2.bf16.msra.mxu0 0
      %2435 = vmatprep.subr.bf16.mxu0 0
      %2436 = vmatpush2.bf16.msra.mxu0 0
      %2437 = vmatprep.subr.bf16.mxu0 0
      %2438 = vmatpush2.bf16.msra.mxu0 0
      %2439 = vmatprep.subr.bf16.mxu0 0
      %2440 = vmatpush2.bf16.msra.mxu0 0
      %2441 = vmatprep.subr.bf16.mxu0 0
      %2442 = vmatpush2.bf16.msra.mxu0 0
      %2443 = vmatprep.subr.bf16.mxu0 0
      %2444 = vmatpush2.bf16.msra.mxu0 0
      %2445 = vmatprep.mubr.bf16.mxu0 0
      %2446 = vmatmul.mubr.bf16.gmra.mxu0 %v2205
      %v2447 = vpop.f32.mrf.mxu0
      %v2448 = vadd.f32 %v2287, %v2447
      %v2449 = vpop.f32.mrf.mxu0
      %v2450 = vpop.f32.mrf.mxu0
      %v2451 = vadd.f32 %v2290, %v2450
      %v2452 = vpop.f32.mrf.mxu0
      %2453 = vmatprep.mubr.bf16.mxu0 0
      %2454 = vmatmul.mubr.bf16.gmra.mxu0 %v2208
      %v2455 = vpop.f32.mrf.mxu0
      %v2456 = vadd.f32 %v2295, %v2455
      %v2457 = vpop.f32.mrf.mxu0
      %v2458 = vpop.f32.mrf.mxu0
      %v2459 = vadd.f32 %v2298, %v2458
      %v2460 = vpop.f32.mrf.mxu0
      %2461 = vmatprep.mubr.bf16.mxu0 0
      %2462 = vmatmul.mubr.bf16.gmra.mxu0 %v2211
      %v2463 = vpop.f32.mrf.mxu0
      %v2464 = vadd.f32 %v2303, %v2463
      %v2465 = vpop.f32.mrf.mxu0
      %v2466 = vpop.f32.mrf.mxu0
      %v2467 = vadd.f32 %v2306, %v2466
      %v2468 = vpop.f32.mrf.mxu0
      %2469 = vmatprep.mubr.bf16.mxu0 0
      %2470 = vmatmul.mubr.bf16.gmra.mxu0 %v2214
      %v2471 = vpop.f32.mrf.mxu0
      %v2472 = vadd.f32 %v2311, %v2471
      %v2473 = vpop.f32.mrf.mxu0
      %v2474 = vpop.f32.mrf.mxu0
      %v2475 = vadd.f32 %v2314, %v2474
      %v2476 = vpop.f32.mrf.mxu0
      %2477 = vmatprep.mubr.bf16.mxu0 0
      %2478 = vmatmul.mubr.bf16.gmra.mxu0 %v2217
      %v2479 = vpop.f32.mrf.mxu0
      %v2480 = vadd.f32 %v2319, %v2479
      %v2481 = vpop.f32.mrf.mxu0
      %v2482 = vpop.f32.mrf.mxu0
      %v2483 = vadd.f32 %v2322, %v2482
      %v2484 = vpop.f32.mrf.mxu0
      %2485 = vmatprep.mubr.bf16.mxu0 0
      %2486 = vmatmul.mubr.bf16.gmra.mxu0 %v2220
      %v2487 = vpop.f32.mrf.mxu0
      %v2488 = vadd.f32 %v2327, %v2487
      %v2489 = vpop.f32.mrf.mxu0
      %v2490 = vpop.f32.mrf.mxu0
      %v2491 = vadd.f32 %v2330, %v2490
      %v2492 = vpop.f32.mrf.mxu0
      %2493 = vmatprep.mubr.bf16.mxu0 0
      %2494 = vmatmul.mubr.bf16.gmra.mxu0 %v2223
      %v2495 = vpop.f32.mrf.mxu0
      %v2496 = vadd.f32 %v2335, %v2495
      %v2497 = vpop.f32.mrf.mxu0
      %v2498 = vpop.f32.mrf.mxu0
      %v2499 = vadd.f32 %v2338, %v2498
      %v2500 = vpop.f32.mrf.mxu0
      %2501 = vmatprep.mubr.bf16.mxu0 0
      %2502 = vmatmul.mubr.bf16.gmra.mxu0 %v2226
      %v2503 = vpop.f32.mrf.mxu0
      %v2504 = vadd.f32 %v2343, %v2503
      %v2505 = vpop.f32.mrf.mxu0
      %v2506 = vpop.f32.mrf.mxu0
      %v2507 = vadd.f32 %v2346, %v2506
      %v2508 = vpop.f32.mrf.mxu0
      %2509 = vmatprep.mubr.bf16.mxu0 0
      %2510 = vmatmul.mubr.bf16.gmra.mxu0 %v2229
      %v2511 = vpop.f32.mrf.mxu0
      %v2512 = vadd.f32 %v2351, %v2511
      %v2513 = vpop.f32.mrf.mxu0
      %v2514 = vpop.f32.mrf.mxu0
      %v2515 = vadd.f32 %v2354, %v2514
      %v2516 = vpop.f32.mrf.mxu0
      %2517 = vmatprep.mubr.bf16.mxu0 0
      %2518 = vmatmul.mubr.bf16.gmra.mxu0 %v2232
      %v2519 = vpop.f32.mrf.mxu0
      %v2520 = vadd.f32 %v2359, %v2519
      %v2521 = vpop.f32.mrf.mxu0
      %v2522 = vpop.f32.mrf.mxu0
      %v2523 = vadd.f32 %v2362, %v2522
      %v2524 = vpop.f32.mrf.mxu0
      %2525 = vmatprep.mubr.bf16.mxu0 0
      %2526 = vmatmul.mubr.bf16.gmra.mxu0 %v2235
      %v2527 = vpop.f32.mrf.mxu0
      %v2528 = vadd.f32 %v2367, %v2527
      %v2529 = vpop.f32.mrf.mxu0
      %v2530 = vpop.f32.mrf.mxu0
      %v2531 = vadd.f32 %v2370, %v2530
      %v2532 = vpop.f32.mrf.mxu0
      %2533 = vmatprep.mubr.bf16.mxu0 0
      %2534 = vmatmul.mubr.bf16.gmra.mxu0 %v2238
      %v2535 = vpop.f32.mrf.mxu0
      %v2536 = vadd.f32 %v2375, %v2535
      %v2537 = vpop.f32.mrf.mxu0
      %v2538 = vpop.f32.mrf.mxu0
      %v2539 = vadd.f32 %v2378, %v2538
      %v2540 = vpop.f32.mrf.mxu0
      %2541 = vmatprep.mubr.bf16.mxu0 0
      %2542 = vmatmul.mubr.bf16.gmra.mxu0 %v2241
      %v2543 = vpop.f32.mrf.mxu0
      %v2544 = vadd.f32 %v2383, %v2543
      %v2545 = vpop.f32.mrf.mxu0
      %v2546 = vpop.f32.mrf.mxu0
      %v2547 = vadd.f32 %v2386, %v2546
      %v2548 = vpop.f32.mrf.mxu0
      %2549 = vmatprep.mubr.bf16.mxu0 0
      %2550 = vmatmul.mubr.bf16.gmra.mxu0 %v2244
      %v2551 = vpop.f32.mrf.mxu0
      %v2552 = vadd.f32 %v2391, %v2551
      %v2553 = vpop.f32.mrf.mxu0
      %v2554 = vpop.f32.mrf.mxu0
      %v2555 = vadd.f32 %v2394, %v2554
      %v2556 = vpop.f32.mrf.mxu0
      %2557 = vmatprep.mubr.bf16.mxu0 0
      %2558 = vmatmul.mubr.bf16.gmra.mxu0 %v2247
      %v2559 = vpop.f32.mrf.mxu0
      %v2560 = vadd.f32 %v2399, %v2559
      %v2561 = vpop.f32.mrf.mxu0
      %v2562 = vpop.f32.mrf.mxu0
      %v2563 = vadd.f32 %v2402, %v2562
      %v2564 = vpop.f32.mrf.mxu0
      %2565 = vmatprep.mubr.bf16.mxu0 0
      %2566 = vmatmul.mubr.bf16.gmra.mxu0 %v2250
      %v2567 = vpop.f32.mrf.mxu0
      %v2568 = vadd.f32 %v2407, %v2567
      %v2569 = vpop.f32.mrf.mxu0
      %v2570 = vpop.f32.mrf.mxu0
      %v2571 = vadd.f32 %v2410, %v2570
      %v2572 = vpop.f32.mrf.mxu0
      %2573 = vdwg.mxu0
      %v2574 = vmax.f32 %v2448, 0.0
      %v2575 = vmax.f32 %v2451, 0.0
      %v2576 = vmax.f32 %v2456, 0.0
      %v2577 = vmax.f32 %v2459, 0.0
      %v2578 = vmax.f32 %v2464, 0.0
      %v2579 = vmax.f32 %v2467, 0.0
      %v2580 = vmax.f32 %v2472, 0.0
      %v2581 = vmax.f32 %v2475, 0.0
      %v2582 = vmax.f32 %v2480, 0.0
      %v2583 = vmax.f32 %v2483, 0.0
      %v2584 = vmax.f32 %v2488, 0.0
      %v2585 = vmax.f32 %v2491, 0.0
      %v2586 = vmax.f32 %v2496, 0.0
      %v2587 = vmax.f32 %v2499, 0.0
      %v2588 = vmax.f32 %v2504, 0.0
      %v2589 = vmax.f32 %v2507, 0.0
      %v2590 = vmax.f32 %v2512, 0.0
      %v2591 = vmax.f32 %v2515, 0.0
      %v2592 = vmax.f32 %v2520, 0.0
      %v2593 = vmax.f32 %v2523, 0.0
      %v2594 = vmax.f32 %v2528, 0.0
      %v2595 = vmax.f32 %v2531, 0.0
      %v2596 = vmax.f32 %v2536, 0.0
      %v2597 = vmax.f32 %v2539, 0.0
      %v2598 = vmax.f32 %v2544, 0.0
      %v2599 = vmax.f32 %v2547, 0.0
      %v2600 = vmax.f32 %v2552, 0.0
      %v2601 = vmax.f32 %v2555, 0.0
      %v2602 = vmax.f32 %v2560, 0.0
      %v2603 = vmax.f32 %v2563, 0.0
      %v2604 = vmax.f32 %v2568, 0.0
      %v2605 = vmax.f32 %v2571, 0.0
      %2606 = vst.msk [vmem:[#allocation3] sm:$0xff] %vm1843, 0.0
      %2607 = vst.msk [vmem:[#allocation3 + $0x8] sm:$0xff] %vm1843, 0.0
      %vm2608 = vcmask 517120
      %2609 = vst.msk [vmem:[#allocation3 + $0x10] sm:$0x3] %vm2608, 0.0
      %2610 = vst.msk [vmem:[#allocation3 + $0x18] sm:$0xff] %vm1843, 0.0
      %2611 = vst.msk [vmem:[#allocation3 + $0x20] sm:$0xff] %vm1843, 0.0
      %2612 = vst.msk [vmem:[#allocation3 + $0x28] sm:$0x3] %vm2608, 0.0
      %2613 = vst.msk [vmem:[#allocation3 + $0x30] sm:$0xff] %vm1843, 0.0
      %2614 = vst.msk [vmem:[#allocation3 + $0x38] sm:$0xff] %vm1843, 0.0
      %2615 = vst.msk [vmem:[#allocation3 + $0x40] sm:$0x3] %vm2608, 0.0
      %2616 = vst.msk [vmem:[#allocation3 + $0x48] sm:$0xff] %vm1843, 0.0
      %2617 = vst.msk [vmem:[#allocation3 + $0x50] sm:$0xff] %vm1843, 0.0
      %2618 = vst.msk [vmem:[#allocation3 + $0x58] sm:$0x3] %vm2608, 0.0
      %2619 = vst.msk [vmem:[#allocation3 + $0x60] sm:$0xff] %vm1843, 0.0
      %2620 = vst.msk [vmem:[#allocation3 + $0x68] sm:$0xff] %vm1843, 0.0
      %2621 = vst.msk [vmem:[#allocation3 + $0x70] sm:$0x3] %vm2608, 0.0
      %2622 = vst.msk [vmem:[#allocation3 + $0x78] sm:$0xff] %vm1843, 0.0
      %2623 = vst.msk [vmem:[#allocation3 + $0x80] sm:$0xff] %vm1843, 0.0
      %2624 = vst.msk [vmem:[#allocation3 + $0x88] sm:$0x3] %vm2608, 0.0
      %2625 = vst.msk [vmem:[#allocation3 + $0x90] sm:$0xff] %vm1843, 0.0
      %2626 = vst.msk [vmem:[#allocation3 + $0x98] sm:$0xff] %vm1843, 0.0
      %2627 = vst.msk [vmem:[#allocation3 + $0xa0] sm:$0x3] %vm2608, 0.0
      %2628 = vst.msk [vmem:[#allocation3 + $0xa8] sm:$0xff] %vm1843, 0.0
      %2629 = vst.msk [vmem:[#allocation3 + $0xb0] sm:$0xff] %vm1843, 0.0
      %2630 = vst.msk [vmem:[#allocation3 + $0xb8] sm:$0x3] %vm2608, 0.0
      %2631 = vst.msk [vmem:[#allocation3 + $0xc0] sm:$0xff] %vm1843, 0.0
      %2632 = vst.msk [vmem:[#allocation3 + $0xc8] sm:$0xff] %vm1843, 0.0
      %2633 = vst.msk [vmem:[#allocation3 + $0xd0] sm:$0x3] %vm2608, 0.0
      %2634 = vst.msk [vmem:[#allocation3 + $0xd8] sm:$0xff] %vm1843, 0.0
      %2635 = vst.msk [vmem:[#allocation3 + $0xe0] sm:$0xff] %vm1843, 0.0
      %2636 = vst.msk [vmem:[#allocation3 + $0xe8] sm:$0x3] %vm2608, 0.0
      %2637 = vst.msk [vmem:[#allocation3 + $0xf0] sm:$0xff] %vm1843, 0.0
      %2638 = vst.msk [vmem:[#allocation3 + $0xf8] sm:$0xff] %vm1843, 0.0
      %2639 = vst.msk [vmem:[#allocation3 + $0x100] sm:$0x3] %vm2608, 0.0
      %2640 = vst.msk [vmem:[#allocation3 + $0x108] sm:$0xff] %vm1843, 0.0
      %2641 = vst.msk [vmem:[#allocation3 + $0x110] sm:$0xff] %vm1843, 0.0
      %2642 = vst.msk [vmem:[#allocation3 + $0x118] sm:$0x3] %vm2608, 0.0
      %2643 = vst.msk [vmem:[#allocation3 + $0x120] sm:$0xff] %vm1843, 0.0
      %2644 = vst.msk [vmem:[#allocation3 + $0x128] sm:$0xff] %vm1843, 0.0
      %2645 = vst.msk [vmem:[#allocation3 + $0x130] sm:$0x3] %vm2608, 0.0
      %2646 = vst.msk [vmem:[#allocation3 + $0x138] sm:$0xff] %vm1843, 0.0
      %2647 = vst.msk [vmem:[#allocation3 + $0x140] sm:$0xff] %vm1843, 0.0
      %2648 = vst.msk [vmem:[#allocation3 + $0x148] sm:$0x3] %vm2608, 0.0
      %2649 = vst.msk [vmem:[#allocation3 + $0x150] sm:$0xff] %vm1843, 0.0
      %2650 = vst.msk [vmem:[#allocation3 + $0x158] sm:$0xff] %vm1843, 0.0
      %2651 = vst.msk [vmem:[#allocation3 + $0x160] sm:$0x3] %vm2608, 0.0
      %2652 = vst.msk [vmem:[#allocation3 + $0x168] sm:$0xff] %vm1843, 0.0
      %2653 = vst.msk [vmem:[#allocation3 + $0x170] sm:$0xff] %vm1843, 0.0
      %2654 = vst.msk [vmem:[#allocation3 + $0x178] sm:$0x3] %vm2608, 0.0
      %2655 = vst.msk [vmem:[#allocation3 + $0x180] sm:$0xff] %vm1843, 0.0
      %2656 = vst.msk [vmem:[#allocation3 + $0x188] sm:$0xff] %vm1843, 0.0
      %2657 = vst.msk [vmem:[#allocation3 + $0x190] sm:$0x3] %vm2608, 0.0
      %2658 = vst.msk [vmem:[#allocation3 + $0x198] sm:$0xff] %vm1843, 0.0
      %2659 = vst.msk [vmem:[#allocation3 + $0x1a0] sm:$0xff] %vm1843, 0.0
      %2660 = vst.msk [vmem:[#allocation3 + $0x1a8] sm:$0x3] %vm2608, 0.0
      %s2661 = scalar_lea.vmem [#allocation3], 24
      %2662 = vst.msk [vmem:[%s2661 + $0x1] sm:$0xff] %vm1843, %v2574
      %2663 = vst.msk [vmem:[%s2661 + $0x9] sm:$0xff] %vm1843, %v2575
      %2664 = vst.msk [vmem:[%s2661 + $0x19] sm:$0xff] %vm1843, %v2576
      %2665 = vst.msk [vmem:[%s2661 + $0x21] sm:$0xff] %vm1843, %v2577
      %2666 = vst.msk [vmem:[%s2661 + $0x31] sm:$0xff] %vm1843, %v2578
      %2667 = vst.msk [vmem:[%s2661 + $0x39] sm:$0xff] %vm1843, %v2579
      %2668 = vst.msk [vmem:[%s2661 + $0x49] sm:$0xff] %vm1843, %v2580
      %2669 = vst.msk [vmem:[%s2661 + $0x51] sm:$0xff] %vm1843, %v2581
      %2670 = vst.msk [vmem:[%s2661 + $0x61] sm:$0xff] %vm1843, %v2582
      %2671 = vst.msk [vmem:[%s2661 + $0x69] sm:$0xff] %vm1843, %v2583
      %2672 = vst.msk [vmem:[%s2661 + $0x79] sm:$0xff] %vm1843, %v2584
      %2673 = vst.msk [vmem:[%s2661 + $0x81] sm:$0xff] %vm1843, %v2585
      %2674 = vst.msk [vmem:[%s2661 + $0x91] sm:$0xff] %vm1843, %v2586
      %2675 = vst.msk [vmem:[%s2661 + $0x99] sm:$0xff] %vm1843, %v2587
      %2676 = vst.msk [vmem:[%s2661 + $0xa9] sm:$0xff] %vm1843, %v2588
      %2677 = vst.msk [vmem:[%s2661 + $0xb1] sm:$0xff] %vm1843, %v2589
      %2678 = vst.msk [vmem:[%s2661 + $0xc1] sm:$0xff] %vm1843, %v2590
      %2679 = vst.msk [vmem:[%s2661 + $0xc9] sm:$0xff] %vm1843, %v2591
      %2680 = vst.msk [vmem:[%s2661 + $0xd9] sm:$0xff] %vm1843, %v2592
      %2681 = vst.msk [vmem:[%s2661 + $0xe1] sm:$0xff] %vm1843, %v2593
      %2682 = vst.msk [vmem:[%s2661 + $0xf1] sm:$0xff] %vm1843, %v2594
      %2683 = vst.msk [vmem:[%s2661 + $0xf9] sm:$0xff] %vm1843, %v2595
      %2684 = vst.msk [vmem:[%s2661 + $0x109] sm:$0xff] %vm1843, %v2596
      %2685 = vst.msk [vmem:[%s2661 + $0x111] sm:$0xff] %vm1843, %v2597
      %2686 = vst.msk [vmem:[%s2661 + $0x121] sm:$0xff] %vm1843, %v2598
      %2687 = vst.msk [vmem:[%s2661 + $0x129] sm:$0xff] %vm1843, %v2599
      %2688 = vst.msk [vmem:[%s2661 + $0x139] sm:$0xff] %vm1843, %v2600
      %2689 = vst.msk [vmem:[%s2661 + $0x141] sm:$0xff] %vm1843, %v2601
      %2690 = vst.msk [vmem:[%s2661 + $0x151] sm:$0xff] %vm1843, %v2602
      %2691 = vst.msk [vmem:[%s2661 + $0x159] sm:$0xff] %vm1843, %v2603
      %2692 = vst.msk [vmem:[%s2661 + $0x169] sm:$0xff] %vm1843, %v2604
      %2693 = vst.msk [vmem:[%s2661 + $0x171] sm:$0xff] %vm1843, %v2605
      %v2694 = vld [vmem:[#allocation3] sm:$0xff]
      %v2695 = vld [vmem:[#allocation3 + $0x8] sm:$0xff]
      %v2696 = vld [vmem:[#allocation3 + $0x18] sm:$0xff]
      %v2697 = vld [vmem:[#allocation3 + $0x20] sm:$0xff]
      %v2698 = vld [vmem:[#allocation3 + $0x30] sm:$0xff]
      %v2699 = vld [vmem:[#allocation3 + $0x38] sm:$0xff]
      %v2700 = vld [vmem:[#allocation3 + $0x48] sm:$0xff]
      %v2701 = vld [vmem:[#allocation3 + $0x50] sm:$0xff]
      %v2702 = vld [vmem:[#allocation3 + $0x60] sm:$0xff]
      %v2703 = vld [vmem:[#allocation3 + $0x68] sm:$0xff]
      %v2704 = vld [vmem:[#allocation3 + $0x78] sm:$0xff]
      %v2705 = vld [vmem:[#allocation3 + $0x80] sm:$0xff]
      %v2706 = vld [vmem:[#allocation3 + $0x90] sm:$0xff]
      %v2707 = vld [vmem:[#allocation3 + $0x98] sm:$0xff]
      %v2708 = vld [vmem:[#allocation3 + $0xa8] sm:$0xff]
      %v2709 = vld [vmem:[#allocation3 + $0xb0] sm:$0xff]
      %v2710 = vld [vmem:[#allocation3 + $0xc0] sm:$0xff]
      %v2711 = vld [vmem:[#allocation3 + $0xc8] sm:$0xff]
      %v2712 = vld [vmem:[#allocation3 + $0xd8] sm:$0xff]
      %v2713 = vld [vmem:[#allocation3 + $0xe0] sm:$0xff]
      %v2714 = vld [vmem:[#allocation3 + $0xf0] sm:$0xff]
      %v2715 = vld [vmem:[#allocation3 + $0xf8] sm:$0xff]
      %v2716 = vld [vmem:[#allocation3 + $0x108] sm:$0xff]
      %v2717 = vld [vmem:[#allocation3 + $0x110] sm:$0xff]
      %v2718 = vld [vmem:[#allocation3 + $0x120] sm:$0xff]
      %v2719 = vld [vmem:[#allocation3 + $0x128] sm:$0xff]
      %v2720 = vld [vmem:[#allocation3 + $0x138] sm:$0xff]
      %v2721 = vld [vmem:[#allocation3 + $0x140] sm:$0xff]
      %v2722 = vld [vmem:[#allocation3 + $0x150] sm:$0xff]
      %v2723 = vld [vmem:[#allocation3 + $0x158] sm:$0xff]
      %v2724 = vld [vmem:[#allocation3 + $0x168] sm:$0xff]
      %v2725 = vld [vmem:[#allocation3 + $0x170] sm:$0xff]
      %v2726 = vld [vmem:[#allocation3 + $0x1] sm:$0xff]
      %v2727 = vld [vmem:[#allocation3 + $0x9] sm:$0xff]
      %v2728 = vld [vmem:[#allocation3 + $0x19] sm:$0xff]
      %v2729 = vld [vmem:[#allocation3 + $0x21] sm:$0xff]
      %v2730 = vld [vmem:[#allocation3 + $0x31] sm:$0xff]
      %v2731 = vld [vmem:[#allocation3 + $0x39] sm:$0xff]
      %v2732 = vld [vmem:[#allocation3 + $0x49] sm:$0xff]
      %v2733 = vld [vmem:[#allocation3 + $0x51] sm:$0xff]
      %v2734 = vld [vmem:[#allocation3 + $0x61] sm:$0xff]
      %v2735 = vld [vmem:[#allocation3 + $0x69] sm:$0xff]
      %v2736 = vld [vmem:[#allocation3 + $0x79] sm:$0xff]
      %v2737 = vld [vmem:[#allocation3 + $0x81] sm:$0xff]
      %v2738 = vld [vmem:[#allocation3 + $0x91] sm:$0xff]
      %v2739 = vld [vmem:[#allocation3 + $0x99] sm:$0xff]
      %v2740 = vld [vmem:[#allocation3 + $0xa9] sm:$0xff]
      %v2741 = vld [vmem:[#allocation3 + $0xb1] sm:$0xff]
      %v2742 = vld [vmem:[#allocation3 + $0xc1] sm:$0xff]
      %v2743 = vld [vmem:[#allocation3 + $0xc9] sm:$0xff]
      %v2744 = vld [vmem:[#allocation3 + $0xd9] sm:$0xff]
      %v2745 = vld [vmem:[#allocation3 + $0xe1] sm:$0xff]
      %v2746 = vld [vmem:[#allocation3 + $0xf1] sm:$0xff]
      %v2747 = vld [vmem:[#allocation3 + $0xf9] sm:$0xff]
      %v2748 = vld [vmem:[#allocation3 + $0x109] sm:$0xff]
      %v2749 = vld [vmem:[#allocation3 + $0x111] sm:$0xff]
      %v2750 = vld [vmem:[#allocation3 + $0x121] sm:$0xff]
      %v2751 = vld [vmem:[#allocation3 + $0x129] sm:$0xff]
      %v2752 = vld [vmem:[#allocation3 + $0x139] sm:$0xff]
      %v2753 = vld [vmem:[#allocation3 + $0x141] sm:$0xff]
      %v2754 = vld [vmem:[#allocation3 + $0x151] sm:$0xff]
      %v2755 = vld [vmem:[#allocation3 + $0x159] sm:$0xff]
      %v2756 = vld [vmem:[#allocation3 + $0x169] sm:$0xff]
      %v2757 = vld [vmem:[#allocation3 + $0x171] sm:$0xff]
      %v2758 = vld [vmem:[#allocation3 + $0x2] sm:$0xff]
      %v2759 = vld [vmem:[#allocation3 + $0xa] sm:$0xff]
      %v2760 = vld [vmem:[#allocation3 + $0x1a] sm:$0xff]
      %v2761 = vld [vmem:[#allocation3 + $0x22] sm:$0xff]
      %v2762 = vld [vmem:[#allocation3 + $0x32] sm:$0xff]
      %v2763 = vld [vmem:[#allocation3 + $0x3a] sm:$0xff]
      %v2764 = vld [vmem:[#allocation3 + $0x4a] sm:$0xff]
      %v2765 = vld [vmem:[#allocation3 + $0x52] sm:$0xff]
      %v2766 = vld [vmem:[#allocation3 + $0x62] sm:$0xff]
      %v2767 = vld [vmem:[#allocation3 + $0x6a] sm:$0xff]
      %v2768 = vld [vmem:[#allocation3 + $0x7a] sm:$0xff]
      %v2769 = vld [vmem:[#allocation3 + $0x82] sm:$0xff]
      %v2770 = vld [vmem:[#allocation3 + $0x92] sm:$0xff]
      %v2771 = vld [vmem:[#allocation3 + $0x9a] sm:$0xff]
      %v2772 = vld [vmem:[#allocation3 + $0xaa] sm:$0xff]
      %v2773 = vld [vmem:[#allocation3 + $0xb2] sm:$0xff]
      %v2774 = vld [vmem:[#allocation3 + $0xc2] sm:$0xff]
      %v2775 = vld [vmem:[#allocation3 + $0xca] sm:$0xff]
      %v2776 = vld [vmem:[#allocation3 + $0xda] sm:$0xff]
      %v2777 = vld [vmem:[#allocation3 + $0xe2] sm:$0xff]
      %v2778 = vld [vmem:[#allocation3 + $0xf2] sm:$0xff]
      %v2779 = vld [vmem:[#allocation3 + $0xfa] sm:$0xff]
      %v2780 = vld [vmem:[#allocation3 + $0x10a] sm:$0xff]
      %v2781 = vld [vmem:[#allocation3 + $0x112] sm:$0xff]
      %v2782 = vld [vmem:[#allocation3 + $0x122] sm:$0xff]
      %v2783 = vld [vmem:[#allocation3 + $0x12a] sm:$0xff]
      %v2784 = vld [vmem:[#allocation3 + $0x13a] sm:$0xff]
      %v2785 = vld [vmem:[#allocation3 + $0x142] sm:$0xff]
      %v2786 = vld [vmem:[#allocation3 + $0x152] sm:$0xff]
      %v2787 = vld [vmem:[#allocation3 + $0x15a] sm:$0xff]
      %v2788 = vld [vmem:[#allocation3 + $0x16a] sm:$0xff]
      %v2789 = vld [vmem:[#allocation3 + $0x172] sm:$0xff]
      %v2790 = vld [vmem:[%s2661] sm:$0xff]
      %v2791 = vld [vmem:[%s2661 + $0x8] sm:$0xff]
      %v2792 = vld [vmem:[%s2661 + $0x18] sm:$0xff]
      %v2793 = vld [vmem:[%s2661 + $0x20] sm:$0xff]
      %v2794 = vld [vmem:[%s2661 + $0x30] sm:$0xff]
      %v2795 = vld [vmem:[%s2661 + $0x38] sm:$0xff]
      %v2796 = vld [vmem:[%s2661 + $0x48] sm:$0xff]
      %v2797 = vld [vmem:[%s2661 + $0x50] sm:$0xff]
      %v2798 = vld [vmem:[%s2661 + $0x60] sm:$0xff]
      %v2799 = vld [vmem:[%s2661 + $0x68] sm:$0xff]
      %v2800 = vld [vmem:[%s2661 + $0x78] sm:$0xff]
      %v2801 = vld [vmem:[%s2661 + $0x80] sm:$0xff]
      %v2802 = vld [vmem:[%s2661 + $0x90] sm:$0xff]
      %v2803 = vld [vmem:[%s2661 + $0x98] sm:$0xff]
      %v2804 = vld [vmem:[%s2661 + $0xa8] sm:$0xff]
      %v2805 = vld [vmem:[%s2661 + $0xb0] sm:$0xff]
      %v2806 = vld [vmem:[%s2661 + $0xc0] sm:$0xff]
      %v2807 = vld [vmem:[%s2661 + $0xc8] sm:$0xff]
      %v2808 = vld [vmem:[%s2661 + $0xd8] sm:$0xff]
      %v2809 = vld [vmem:[%s2661 + $0xe0] sm:$0xff]
      %v2810 = vld [vmem:[%s2661 + $0xf0] sm:$0xff]
      %v2811 = vld [vmem:[%s2661 + $0xf8] sm:$0xff]
      %v2812 = vld [vmem:[%s2661 + $0x108] sm:$0xff]
      %v2813 = vld [vmem:[%s2661 + $0x110] sm:$0xff]
      %v2814 = vld [vmem:[%s2661 + $0x120] sm:$0xff]
      %v2815 = vld [vmem:[%s2661 + $0x128] sm:$0xff]
      %v2816 = vld [vmem:[%s2661 + $0x138] sm:$0xff]
      %v2817 = vld [vmem:[%s2661 + $0x140] sm:$0xff]
      %v2818 = vld [vmem:[%s2661 + $0x150] sm:$0xff]
      %v2819 = vld [vmem:[%s2661 + $0x158] sm:$0xff]
      %v2820 = vld [vmem:[%s2661 + $0x168] sm:$0xff]
      %v2821 = vld [vmem:[%s2661 + $0x170] sm:$0xff]
      %v2822 = vld [vmem:[%s2661 + $0x1] sm:$0xff]
      %v2823 = vld [vmem:[%s2661 + $0x9] sm:$0xff]
      %v2824 = vld [vmem:[%s2661 + $0x19] sm:$0xff]
      %v2825 = vld [vmem:[%s2661 + $0x21] sm:$0xff]
      %v2826 = vld [vmem:[%s2661 + $0x31] sm:$0xff]
      %v2827 = vld [vmem:[%s2661 + $0x39] sm:$0xff]
      %v2828 = vld [vmem:[%s2661 + $0x49] sm:$0xff]
      %v2829 = vld [vmem:[%s2661 + $0x51] sm:$0xff]
      %v2830 = vld [vmem:[%s2661 + $0x61] sm:$0xff]
      %v2831 = vld [vmem:[%s2661 + $0x69] sm:$0xff]
      %v2832 = vld [vmem:[%s2661 + $0x79] sm:$0xff]
      %v2833 = vld [vmem:[%s2661 + $0x81] sm:$0xff]
      %v2834 = vld [vmem:[%s2661 + $0x91] sm:$0xff]
      %v2835 = vld [vmem:[%s2661 + $0x99] sm:$0xff]
      %v2836 = vld [vmem:[%s2661 + $0xa9] sm:$0xff]
      %v2837 = vld [vmem:[%s2661 + $0xb1] sm:$0xff]
      %v2838 = vld [vmem:[%s2661 + $0xc1] sm:$0xff]
      %v2839 = vld [vmem:[%s2661 + $0xc9] sm:$0xff]
      %v2840 = vld [vmem:[%s2661 + $0xd9] sm:$0xff]
      %v2841 = vld [vmem:[%s2661 + $0xe1] sm:$0xff]
      %v2842 = vld [vmem:[%s2661 + $0xf1] sm:$0xff]
      %v2843 = vld [vmem:[%s2661 + $0xf9] sm:$0xff]
      %v2844 = vld [vmem:[%s2661 + $0x109] sm:$0xff]
      %v2845 = vld [vmem:[%s2661 + $0x111] sm:$0xff]
      %v2846 = vld [vmem:[%s2661 + $0x121] sm:$0xff]
      %v2847 = vld [vmem:[%s2661 + $0x129] sm:$0xff]
      %v2848 = vld [vmem:[%s2661 + $0x139] sm:$0xff]
      %v2849 = vld [vmem:[%s2661 + $0x141] sm:$0xff]
      %v2850 = vld [vmem:[%s2661 + $0x151] sm:$0xff]
      %v2851 = vld [vmem:[%s2661 + $0x159] sm:$0xff]
      %v2852 = vld [vmem:[%s2661 + $0x169] sm:$0xff]
      %v2853 = vld [vmem:[%s2661 + $0x171] sm:$0xff]
      %v2854 = vld [vmem:[%s2661 + $0x2] sm:$0xff]
      %v2855 = vld [vmem:[%s2661 + $0xa] sm:$0xff]
      %v2856 = vld [vmem:[%s2661 + $0x1a] sm:$0xff]
      %v2857 = vld [vmem:[%s2661 + $0x22] sm:$0xff]
      %v2858 = vld [vmem:[%s2661 + $0x32] sm:$0xff]
      %v2859 = vld [vmem:[%s2661 + $0x3a] sm:$0xff]
      %v2860 = vld [vmem:[%s2661 + $0x4a] sm:$0xff]
      %v2861 = vld [vmem:[%s2661 + $0x52] sm:$0xff]
      %v2862 = vld [vmem:[%s2661 + $0x62] sm:$0xff]
      %v2863 = vld [vmem:[%s2661 + $0x6a] sm:$0xff]
      %v2864 = vld [vmem:[%s2661 + $0x7a] sm:$0xff]
      %v2865 = vld [vmem:[%s2661 + $0x82] sm:$0xff]
      %v2866 = vld [vmem:[%s2661 + $0x92] sm:$0xff]
      %v2867 = vld [vmem:[%s2661 + $0x9a] sm:$0xff]
      %v2868 = vld [vmem:[%s2661 + $0xaa] sm:$0xff]
      %v2869 = vld [vmem:[%s2661 + $0xb2] sm:$0xff]
      %v2870 = vld [vmem:[%s2661 + $0xc2] sm:$0xff]
      %v2871 = vld [vmem:[%s2661 + $0xca] sm:$0xff]
      %v2872 = vld [vmem:[%s2661 + $0xda] sm:$0xff]
      %v2873 = vld [vmem:[%s2661 + $0xe2] sm:$0xff]
      %v2874 = vld [vmem:[%s2661 + $0xf2] sm:$0xff]
      %v2875 = vld [vmem:[%s2661 + $0xfa] sm:$0xff]
      %v2876 = vld [vmem:[%s2661 + $0x10a] sm:$0xff]
      %v2877 = vld [vmem:[%s2661 + $0x112] sm:$0xff]
      %v2878 = vld [vmem:[%s2661 + $0x122] sm:$0xff]
      %v2879 = vld [vmem:[%s2661 + $0x12a] sm:$0xff]
      %v2880 = vld [vmem:[%s2661 + $0x13a] sm:$0xff]
      %v2881 = vld [vmem:[%s2661 + $0x142] sm:$0xff]
      %v2882 = vld [vmem:[%s2661 + $0x152] sm:$0xff]
      %v2883 = vld [vmem:[%s2661 + $0x15a] sm:$0xff]
      %v2884 = vld [vmem:[%s2661 + $0x16a] sm:$0xff]
      %v2885 = vld [vmem:[%s2661 + $0x172] sm:$0xff]
      %s2886 = scalar_lea.vmem [#allocation3], 48
      %v2887 = vld [vmem:[%s2886] sm:$0xff]
      %v2888 = vld [vmem:[%s2886 + $0x8] sm:$0xff]
      %v2889 = vld [vmem:[%s2886 + $0x18] sm:$0xff]
      %v2890 = vld [vmem:[%s2886 + $0x20] sm:$0xff]
      %v2891 = vld [vmem:[%s2886 + $0x30] sm:$0xff]
      %v2892 = vld [vmem:[%s2886 + $0x38] sm:$0xff]
      %v2893 = vld [vmem:[%s2886 + $0x48] sm:$0xff]
      %v2894 = vld [vmem:[%s2886 + $0x50] sm:$0xff]
      %v2895 = vld [vmem:[%s2886 + $0x60] sm:$0xff]
      %v2896 = vld [vmem:[%s2886 + $0x68] sm:$0xff]
      %v2897 = vld [vmem:[%s2886 + $0x78] sm:$0xff]
      %v2898 = vld [vmem:[%s2886 + $0x80] sm:$0xff]
      %v2899 = vld [vmem:[%s2886 + $0x90] sm:$0xff]
      %v2900 = vld [vmem:[%s2886 + $0x98] sm:$0xff]
      %v2901 = vld [vmem:[%s2886 + $0xa8] sm:$0xff]
      %v2902 = vld [vmem:[%s2886 + $0xb0] sm:$0xff]
      %v2903 = vld [vmem:[%s2886 + $0xc0] sm:$0xff]
      %v2904 = vld [vmem:[%s2886 + $0xc8] sm:$0xff]
      %v2905 = vld [vmem:[%s2886 + $0xd8] sm:$0xff]
      %v2906 = vld [vmem:[%s2886 + $0xe0] sm:$0xff]
      %v2907 = vld [vmem:[%s2886 + $0xf0] sm:$0xff]
      %v2908 = vld [vmem:[%s2886 + $0xf8] sm:$0xff]
      %v2909 = vld [vmem:[%s2886 + $0x108] sm:$0xff]
      %v2910 = vld [vmem:[%s2886 + $0x110] sm:$0xff]
      %v2911 = vld [vmem:[%s2886 + $0x120] sm:$0xff]
      %v2912 = vld [vmem:[%s2886 + $0x128] sm:$0xff]
      %v2913 = vld [vmem:[%s2886 + $0x138] sm:$0xff]
      %v2914 = vld [vmem:[%s2886 + $0x140] sm:$0xff]
      %v2915 = vld [vmem:[%s2886 + $0x150] sm:$0xff]
      %v2916 = vld [vmem:[%s2886 + $0x158] sm:$0xff]
      %v2917 = vld [vmem:[%s2886 + $0x168] sm:$0xff]
      %v2918 = vld [vmem:[%s2886 + $0x170] sm:$0xff]
      %v2919 = vld [vmem:[%s2886 + $0x1] sm:$0xff]
      %v2920 = vld [vmem:[%s2886 + $0x9] sm:$0xff]
      %v2921 = vld [vmem:[%s2886 + $0x19] sm:$0xff]
      %v2922 = vld [vmem:[%s2886 + $0x21] sm:$0xff]
      %v2923 = vld [vmem:[%s2886 + $0x31] sm:$0xff]
      %v2924 = vld [vmem:[%s2886 + $0x39] sm:$0xff]
      %v2925 = vld [vmem:[%s2886 + $0x49] sm:$0xff]
      %v2926 = vld [vmem:[%s2886 + $0x51] sm:$0xff]
      %v2927 = vld [vmem:[%s2886 + $0x61] sm:$0xff]
      %v2928 = vld [vmem:[%s2886 + $0x69] sm:$0xff]
      %v2929 = vld [vmem:[%s2886 + $0x79] sm:$0xff]
      %v2930 = vld [vmem:[%s2886 + $0x81] sm:$0xff]
      %v2931 = vld [vmem:[%s2886 + $0x91] sm:$0xff]
      %v2932 = vld [vmem:[%s2886 + $0x99] sm:$0xff]
      %v2933 = vld [vmem:[%s2886 + $0xa9] sm:$0xff]
      %v2934 = vld [vmem:[%s2886 + $0xb1] sm:$0xff]
      %v2935 = vld [vmem:[%s2886 + $0xc1] sm:$0xff]
      %v2936 = vld [vmem:[%s2886 + $0xc9] sm:$0xff]
      %v2937 = vld [vmem:[%s2886 + $0xd9] sm:$0xff]
      %v2938 = vld [vmem:[%s2886 + $0xe1] sm:$0xff]
      %v2939 = vld [vmem:[%s2886 + $0xf1] sm:$0xff]
      %v2940 = vld [vmem:[%s2886 + $0xf9] sm:$0xff]
      %v2941 = vld [vmem:[%s2886 + $0x109] sm:$0xff]
      %v2942 = vld [vmem:[%s2886 + $0x111] sm:$0xff]
      %v2943 = vld [vmem:[%s2886 + $0x121] sm:$0xff]
      %v2944 = vld [vmem:[%s2886 + $0x129] sm:$0xff]
      %v2945 = vld [vmem:[%s2886 + $0x139] sm:$0xff]
      %v2946 = vld [vmem:[%s2886 + $0x141] sm:$0xff]
      %v2947 = vld [vmem:[%s2886 + $0x151] sm:$0xff]
      %v2948 = vld [vmem:[%s2886 + $0x159] sm:$0xff]
      %v2949 = vld [vmem:[%s2886 + $0x169] sm:$0xff]
      %v2950 = vld [vmem:[%s2886 + $0x171] sm:$0xff]
      %v2951 = vld [vmem:[%s2886 + $0x2] sm:$0xff]
      %v2952 = vld [vmem:[%s2886 + $0xa] sm:$0xff]
      %v2953 = vld [vmem:[%s2886 + $0x1a] sm:$0xff]
      %v2954 = vld [vmem:[%s2886 + $0x22] sm:$0xff]
      %v2955 = vld [vmem:[%s2886 + $0x32] sm:$0xff]
      %v2956 = vld [vmem:[%s2886 + $0x3a] sm:$0xff]
      %v2957 = vld [vmem:[%s2886 + $0x4a] sm:$0xff]
      %v2958 = vld [vmem:[%s2886 + $0x52] sm:$0xff]
      %v2959 = vld [vmem:[%s2886 + $0x62] sm:$0xff]
      %v2960 = vld [vmem:[%s2886 + $0x6a] sm:$0xff]
      %v2961 = vld [vmem:[%s2886 + $0x7a] sm:$0xff]
      %v2962 = vld [vmem:[%s2886 + $0x82] sm:$0xff]
      %v2963 = vld [vmem:[%s2886 + $0x92] sm:$0xff]
      %v2964 = vld [vmem:[%s2886 + $0x9a] sm:$0xff]
      %v2965 = vld [vmem:[%s2886 + $0xaa] sm:$0xff]
      %v2966 = vld [vmem:[%s2886 + $0xb2] sm:$0xff]
      %v2967 = vld [vmem:[%s2886 + $0xc2] sm:$0xff]
      %v2968 = vld [vmem:[%s2886 + $0xca] sm:$0xff]
      %v2969 = vld [vmem:[%s2886 + $0xda] sm:$0xff]
      %v2970 = vld [vmem:[%s2886 + $0xe2] sm:$0xff]
      %v2971 = vld [vmem:[%s2886 + $0xf2] sm:$0xff]
      %v2972 = vld [vmem:[%s2886 + $0xfa] sm:$0xff]
      %v2973 = vld [vmem:[%s2886 + $0x10a] sm:$0xff]
      %v2974 = vld [vmem:[%s2886 + $0x112] sm:$0xff]
      %v2975 = vld [vmem:[%s2886 + $0x122] sm:$0xff]
      %v2976 = vld [vmem:[%s2886 + $0x12a] sm:$0xff]
      %v2977 = vld [vmem:[%s2886 + $0x13a] sm:$0xff]
      %v2978 = vld [vmem:[%s2886 + $0x142] sm:$0xff]
      %v2979 = vld [vmem:[%s2886 + $0x152] sm:$0xff]
      %v2980 = vld [vmem:[%s2886 + $0x15a] sm:$0xff]
      %v2981 = vld [vmem:[%s2886 + $0x16a] sm:$0xff]
      %v2982 = vld [vmem:[%s2886 + $0x172] sm:$0xff]
      %3015 = vrot.lane.b32.xlu0 %v2726, 64
      %v3016 = vpop.permute.xlu0 %3015
      %3017 = vrot.lane.b32.xlu0 %v2727, 64
      %v3018 = vpop.permute.xlu0 %3017
      %3019 = vrot.lane.b32.xlu0 %v2728, 64
      %v3020 = vpop.permute.xlu0 %3019
      %3021 = vrot.lane.b32.xlu0 %v2729, 64
      %v3022 = vpop.permute.xlu0 %3021
      %3023 = vrot.lane.b32.xlu0 %v2730, 64
      %v3024 = vpop.permute.xlu0 %3023
      %3025 = vrot.lane.b32.xlu0 %v2731, 64
      %v3026 = vpop.permute.xlu0 %3025
      %3027 = vrot.lane.b32.xlu0 %v2732, 64
      %v3028 = vpop.permute.xlu0 %3027
      %3029 = vrot.lane.b32.xlu0 %v2733, 64
      %v3030 = vpop.permute.xlu0 %3029
      %3031 = vrot.lane.b32.xlu0 %v2734, 64
      %v3032 = vpop.permute.xlu0 %3031
      %3033 = vrot.lane.b32.xlu0 %v2735, 64
      %v3034 = vpop.permute.xlu0 %3033
      %3035 = vrot.lane.b32.xlu0 %v2736, 64
      %v3036 = vpop.permute.xlu0 %3035
      %3037 = vrot.lane.b32.xlu0 %v2737, 64
      %v3038 = vpop.permute.xlu0 %3037
      %3039 = vrot.lane.b32.xlu0 %v2738, 64
      %v3040 = vpop.permute.xlu0 %3039
      %3041 = vrot.lane.b32.xlu0 %v2739, 64
      %v3042 = vpop.permute.xlu0 %3041
      %3043 = vrot.lane.b32.xlu0 %v2740, 64
      %v3044 = vpop.permute.xlu0 %3043
      %3045 = vrot.lane.b32.xlu0 %v2741, 64
      %v3046 = vpop.permute.xlu0 %3045
      %3047 = vrot.lane.b32.xlu0 %v2742, 64
      %v3048 = vpop.permute.xlu0 %3047
      %3049 = vrot.lane.b32.xlu0 %v2743, 64
      %v3050 = vpop.permute.xlu0 %3049
      %3051 = vrot.lane.b32.xlu0 %v2744, 64
      %v3052 = vpop.permute.xlu0 %3051
      %3053 = vrot.lane.b32.xlu0 %v2745, 64
      %v3054 = vpop.permute.xlu0 %3053
      %3055 = vrot.lane.b32.xlu0 %v2746, 64
      %v3056 = vpop.permute.xlu0 %3055
      %3057 = vrot.lane.b32.xlu0 %v2747, 64
      %v3058 = vpop.permute.xlu0 %3057
      %3059 = vrot.lane.b32.xlu0 %v2748, 64
      %v3060 = vpop.permute.xlu0 %3059
      %3061 = vrot.lane.b32.xlu0 %v2749, 64
      %v3062 = vpop.permute.xlu0 %3061
      %3063 = vrot.lane.b32.xlu0 %v2750, 64
      %v3064 = vpop.permute.xlu0 %3063
      %3065 = vrot.lane.b32.xlu0 %v2751, 64
      %v3066 = vpop.permute.xlu0 %3065
      %3067 = vrot.lane.b32.xlu0 %v2752, 64
      %v3068 = vpop.permute.xlu0 %3067
      %3069 = vrot.lane.b32.xlu0 %v2753, 64
      %v3070 = vpop.permute.xlu0 %3069
      %3071 = vrot.lane.b32.xlu0 %v2754, 64
      %v3072 = vpop.permute.xlu0 %3071
      %3073 = vrot.lane.b32.xlu0 %v2755, 64
      %v3074 = vpop.permute.xlu0 %3073
      %3075 = vrot.lane.b32.xlu0 %v2756, 64
      %v3076 = vpop.permute.xlu0 %3075
      %3077 = vrot.lane.b32.xlu0 %v2757, 64
      %v3078 = vpop.permute.xlu0 %3077
      %3143 = vrot.lane.b32.xlu0 %v2790, 64
      %v3144 = vpop.permute.xlu0 %3143
      %3145 = vrot.lane.b32.xlu0 %v2791, 64
      %v3146 = vpop.permute.xlu0 %3145
      %3147 = vrot.lane.b32.xlu0 %v2792, 64
      %v3148 = vpop.permute.xlu0 %3147
      %3149 = vrot.lane.b32.xlu0 %v2793, 64
      %v3150 = vpop.permute.xlu0 %3149
      %3151 = vrot.lane.b32.xlu0 %v2794, 64
      %v3152 = vpop.permute.xlu0 %3151
      %3153 = vrot.lane.b32.xlu0 %v2795, 64
      %v3154 = vpop.permute.xlu0 %3153
      %3155 = vrot.lane.b32.xlu0 %v2796, 64
      %v3156 = vpop.permute.xlu0 %3155
      %3157 = vrot.lane.b32.xlu0 %v2797, 64
      %v3158 = vpop.permute.xlu0 %3157
      %3159 = vrot.lane.b32.xlu0 %v2798, 64
      %v3160 = vpop.permute.xlu0 %3159
      %3161 = vrot.lane.b32.xlu0 %v2799, 64
      %v3162 = vpop.permute.xlu0 %3161
      %3163 = vrot.lane.b32.xlu0 %v2800, 64
      %v3164 = vpop.permute.xlu0 %3163
      %3165 = vrot.lane.b32.xlu0 %v2801, 64
      %v3166 = vpop.permute.xlu0 %3165
      %3167 = vrot.lane.b32.xlu0 %v2802, 64
      %v3168 = vpop.permute.xlu0 %3167
      %3169 = vrot.lane.b32.xlu0 %v2803, 64
      %v3170 = vpop.permute.xlu0 %3169
      %3171 = vrot.lane.b32.xlu0 %v2804, 64
      %v3172 = vpop.permute.xlu0 %3171
      %3173 = vrot.lane.b32.xlu0 %v2805, 64
      %v3174 = vpop.permute.xlu0 %3173
      %3175 = vrot.lane.b32.xlu0 %v2806, 64
      %v3176 = vpop.permute.xlu0 %3175
      %3177 = vrot.lane.b32.xlu0 %v2807, 64
      %v3178 = vpop.permute.xlu0 %3177
      %3179 = vrot.lane.b32.xlu0 %v2808, 64
      %v3180 = vpop.permute.xlu0 %3179
      %3181 = vrot.lane.b32.xlu0 %v2809, 64
      %v3182 = vpop.permute.xlu0 %3181
      %3183 = vrot.lane.b32.xlu0 %v2810, 64
      %v3184 = vpop.permute.xlu0 %3183
      %3185 = vrot.lane.b32.xlu0 %v2811, 64
      %v3186 = vpop.permute.xlu0 %3185
      %3187 = vrot.lane.b32.xlu0 %v2812, 64
      %v3188 = vpop.permute.xlu0 %3187
      %3189 = vrot.lane.b32.xlu0 %v2813, 64
      %v3190 = vpop.permute.xlu0 %3189
      %3191 = vrot.lane.b32.xlu0 %v2814, 64
      %v3192 = vpop.permute.xlu0 %3191
      %3193 = vrot.lane.b32.xlu0 %v2815, 64
      %v3194 = vpop.permute.xlu0 %3193
      %3195 = vrot.lane.b32.xlu0 %v2816, 64
      %v3196 = vpop.permute.xlu0 %3195
      %3197 = vrot.lane.b32.xlu0 %v2817, 64
      %v3198 = vpop.permute.xlu0 %3197
      %3199 = vrot.lane.b32.xlu0 %v2818, 64
      %v3200 = vpop.permute.xlu0 %3199
      %3201 = vrot.lane.b32.xlu0 %v2819, 64
      %v3202 = vpop.permute.xlu0 %3201
      %3203 = vrot.lane.b32.xlu0 %v2820, 64
      %v3204 = vpop.permute.xlu0 %3203
      %3205 = vrot.lane.b32.xlu0 %v2821, 64
      %v3206 = vpop.permute.xlu0 %3205
      %3271 = vrot.lane.b32.xlu0 %v2854, 64
      %v3272 = vpop.permute.xlu0 %3271
      %3273 = vrot.lane.b32.xlu0 %v2855, 64
      %v3274 = vpop.permute.xlu0 %3273
      %3275 = vrot.lane.b32.xlu0 %v2856, 64
      %v3276 = vpop.permute.xlu0 %3275
      %3277 = vrot.lane.b32.xlu0 %v2857, 64
      %v3278 = vpop.permute.xlu0 %3277
      %3279 = vrot.lane.b32.xlu0 %v2858, 64
      %v3280 = vpop.permute.xlu0 %3279
      %3281 = vrot.lane.b32.xlu0 %v2859, 64
      %v3282 = vpop.permute.xlu0 %3281
      %3283 = vrot.lane.b32.xlu0 %v2860, 64
      %v3284 = vpop.permute.xlu0 %3283
      %3285 = vrot.lane.b32.xlu0 %v2861, 64
      %v3286 = vpop.permute.xlu0 %3285
      %3287 = vrot.lane.b32.xlu0 %v2862, 64
      %v3288 = vpop.permute.xlu0 %3287
      %3289 = vrot.lane.b32.xlu0 %v2863, 64
      %v3290 = vpop.permute.xlu0 %3289
      %3291 = vrot.lane.b32.xlu0 %v2864, 64
      %v3292 = vpop.permute.xlu0 %3291
      %3293 = vrot.lane.b32.xlu0 %v2865, 64
      %v3294 = vpop.permute.xlu0 %3293
      %3295 = vrot.lane.b32.xlu0 %v2866, 64
      %v3296 = vpop.permute.xlu0 %3295
      %3297 = vrot.lane.b32.xlu0 %v2867, 64
      %v3298 = vpop.permute.xlu0 %3297
      %3299 = vrot.lane.b32.xlu0 %v2868, 64
      %v3300 = vpop.permute.xlu0 %3299
      %3301 = vrot.lane.b32.xlu0 %v2869, 64
      %v3302 = vpop.permute.xlu0 %3301
      %3303 = vrot.lane.b32.xlu0 %v2870, 64
      %v3304 = vpop.permute.xlu0 %3303
      %3305 = vrot.lane.b32.xlu0 %v2871, 64
      %v3306 = vpop.permute.xlu0 %3305
      %3307 = vrot.lane.b32.xlu0 %v2872, 64
      %v3308 = vpop.permute.xlu0 %3307
      %3309 = vrot.lane.b32.xlu0 %v2873, 64
      %v3310 = vpop.permute.xlu0 %3309
      %3311 = vrot.lane.b32.xlu0 %v2874, 64
      %v3312 = vpop.permute.xlu0 %3311
      %3313 = vrot.lane.b32.xlu0 %v2875, 64
      %v3314 = vpop.permute.xlu0 %3313
      %3315 = vrot.lane.b32.xlu0 %v2876, 64
      %v3316 = vpop.permute.xlu0 %3315
      %3317 = vrot.lane.b32.xlu0 %v2877, 64
      %v3318 = vpop.permute.xlu0 %3317
      %3319 = vrot.lane.b32.xlu0 %v2878, 64
      %v3320 = vpop.permute.xlu0 %3319
      %3321 = vrot.lane.b32.xlu0 %v2879, 64
      %v3322 = vpop.permute.xlu0 %3321
      %3323 = vrot.lane.b32.xlu0 %v2880, 64
      %v3324 = vpop.permute.xlu0 %3323
      %3325 = vrot.lane.b32.xlu0 %v2881, 64
      %v3326 = vpop.permute.xlu0 %3325
      %3327 = vrot.lane.b32.xlu0 %v2882, 64
      %v3328 = vpop.permute.xlu0 %3327
      %3329 = vrot.lane.b32.xlu0 %v2883, 64
      %v3330 = vpop.permute.xlu0 %3329
      %3331 = vrot.lane.b32.xlu0 %v2884, 64
      %v3332 = vpop.permute.xlu0 %3331
      %3333 = vrot.lane.b32.xlu0 %v2885, 64
      %v3334 = vpop.permute.xlu0 %3333
      %3399 = vrot.lane.b32.xlu0 %v2919, 64
      %v3400 = vpop.permute.xlu0 %3399
      %3401 = vrot.lane.b32.xlu0 %v2920, 64
      %v3402 = vpop.permute.xlu0 %3401
      %3403 = vrot.lane.b32.xlu0 %v2921, 64
      %v3404 = vpop.permute.xlu0 %3403
      %3405 = vrot.lane.b32.xlu0 %v2922, 64
      %v3406 = vpop.permute.xlu0 %3405
      %3407 = vrot.lane.b32.xlu0 %v2923, 64
      %v3408 = vpop.permute.xlu0 %3407
      %3409 = vrot.lane.b32.xlu0 %v2924, 64
      %v3410 = vpop.permute.xlu0 %3409
      %3411 = vrot.lane.b32.xlu0 %v2925, 64
      %v3412 = vpop.permute.xlu0 %3411
      %3413 = vrot.lane.b32.xlu0 %v2926, 64
      %v3414 = vpop.permute.xlu0 %3413
      %3415 = vrot.lane.b32.xlu0 %v2927, 64
      %v3416 = vpop.permute.xlu0 %3415
      %3417 = vrot.lane.b32.xlu0 %v2928, 64
      %v3418 = vpop.permute.xlu0 %3417
      %3419 = vrot.lane.b32.xlu0 %v2929, 64
      %v3420 = vpop.permute.xlu0 %3419
      %3421 = vrot.lane.b32.xlu0 %v2930, 64
      %v3422 = vpop.permute.xlu0 %3421
      %3423 = vrot.lane.b32.xlu0 %v2931, 64
      %v3424 = vpop.permute.xlu0 %3423
      %3425 = vrot.lane.b32.xlu0 %v2932, 64
      %v3426 = vpop.permute.xlu0 %3425
      %3427 = vrot.lane.b32.xlu0 %v2933, 64
      %v3428 = vpop.permute.xlu0 %3427
      %3429 = vrot.lane.b32.xlu0 %v2934, 64
      %v3430 = vpop.permute.xlu0 %3429
      %3431 = vrot.lane.b32.xlu0 %v2935, 64
      %v3432 = vpop.permute.xlu0 %3431
      %3433 = vrot.lane.b32.xlu0 %v2936, 64
      %v3434 = vpop.permute.xlu0 %3433
      %3435 = vrot.lane.b32.xlu0 %v2937, 64
      %v3436 = vpop.permute.xlu0 %3435
      %3437 = vrot.lane.b32.xlu0 %v2938, 64
      %v3438 = vpop.permute.xlu0 %3437
      %3439 = vrot.lane.b32.xlu0 %v2939, 64
      %v3440 = vpop.permute.xlu0 %3439
      %3441 = vrot.lane.b32.xlu0 %v2940, 64
      %v3442 = vpop.permute.xlu0 %3441
      %3443 = vrot.lane.b32.xlu0 %v2941, 64
      %v3444 = vpop.permute.xlu0 %3443
      %3445 = vrot.lane.b32.xlu0 %v2942, 64
      %v3446 = vpop.permute.xlu0 %3445
      %3447 = vrot.lane.b32.xlu0 %v2943, 64
      %v3448 = vpop.permute.xlu0 %3447
      %3449 = vrot.lane.b32.xlu0 %v2944, 64
      %v3450 = vpop.permute.xlu0 %3449
      %3451 = vrot.lane.b32.xlu0 %v2945, 64
      %v3452 = vpop.permute.xlu0 %3451
      %3453 = vrot.lane.b32.xlu0 %v2946, 64
      %v3454 = vpop.permute.xlu0 %3453
      %3455 = vrot.lane.b32.xlu0 %v2947, 64
      %v3456 = vpop.permute.xlu0 %3455
      %3457 = vrot.lane.b32.xlu0 %v2948, 64
      %v3458 = vpop.permute.xlu0 %3457
      %3459 = vrot.lane.b32.xlu0 %v2949, 64
      %v3460 = vpop.permute.xlu0 %3459
      %3461 = vrot.lane.b32.xlu0 %v2950, 64
      %v3462 = vpop.permute.xlu0 %3461
      %v3495 = vsel %vm1843, %v2694, %v3016
      %v3496 = vsel %vm1843, %v2695, %v3018
      %v3497 = vsel %vm1843, %v2696, %v3020
      %v3498 = vsel %vm1843, %v2697, %v3022
      %v3499 = vsel %vm1843, %v2698, %v3024
      %v3500 = vsel %vm1843, %v2699, %v3026
      %v3501 = vsel %vm1843, %v2700, %v3028
      %v3502 = vsel %vm1843, %v2701, %v3030
      %v3503 = vsel %vm1843, %v2702, %v3032
      %v3504 = vsel %vm1843, %v2703, %v3034
      %v3505 = vsel %vm1843, %v2704, %v3036
      %v3506 = vsel %vm1843, %v2705, %v3038
      %v3507 = vsel %vm1843, %v2706, %v3040
      %v3508 = vsel %vm1843, %v2707, %v3042
      %v3509 = vsel %vm1843, %v2708, %v3044
      %v3510 = vsel %vm1843, %v2709, %v3046
      %v3511 = vsel %vm1843, %v2710, %v3048
      %v3512 = vsel %vm1843, %v2711, %v3050
      %v3513 = vsel %vm1843, %v2712, %v3052
      %v3514 = vsel %vm1843, %v2713, %v3054
      %v3515 = vsel %vm1843, %v2714, %v3056
      %v3516 = vsel %vm1843, %v2715, %v3058
      %v3517 = vsel %vm1843, %v2716, %v3060
      %v3518 = vsel %vm1843, %v2717, %v3062
      %v3519 = vsel %vm1843, %v2718, %v3064
      %v3520 = vsel %vm1843, %v2719, %v3066
      %v3521 = vsel %vm1843, %v2720, %v3068
      %v3522 = vsel %vm1843, %v2721, %v3070
      %v3523 = vsel %vm1843, %v2722, %v3072
      %v3524 = vsel %vm1843, %v2723, %v3074
      %v3525 = vsel %vm1843, %v2724, %v3076
      %v3526 = vsel %vm1843, %v2725, %v3078
      %v3527 = vsel %vm1843, %v2758, %v3144
      %v3528 = vsel %vm1843, %v2759, %v3146
      %v3529 = vsel %vm1843, %v2760, %v3148
      %v3530 = vsel %vm1843, %v2761, %v3150
      %v3531 = vsel %vm1843, %v2762, %v3152
      %v3532 = vsel %vm1843, %v2763, %v3154
      %v3533 = vsel %vm1843, %v2764, %v3156
      %v3534 = vsel %vm1843, %v2765, %v3158
      %v3535 = vsel %vm1843, %v2766, %v3160
      %v3536 = vsel %vm1843, %v2767, %v3162
      %v3537 = vsel %vm1843, %v2768, %v3164
      %v3538 = vsel %vm1843, %v2769, %v3166
      %v3539 = vsel %vm1843, %v2770, %v3168
      %v3540 = vsel %vm1843, %v2771, %v3170
      %v3541 = vsel %vm1843, %v2772, %v3172
      %v3542 = vsel %vm1843, %v2773, %v3174
      %v3543 = vsel %vm1843, %v2774, %v3176
      %v3544 = vsel %vm1843, %v2775, %v3178
      %v3545 = vsel %vm1843, %v2776, %v3180
      %v3546 = vsel %vm1843, %v2777, %v3182
      %v3547 = vsel %vm1843, %v2778, %v3184
      %v3548 = vsel %vm1843, %v2779, %v3186
      %v3549 = vsel %vm1843, %v2780, %v3188
      %v3550 = vsel %vm1843, %v2781, %v3190
      %v3551 = vsel %vm1843, %v2782, %v3192
      %v3552 = vsel %vm1843, %v2783, %v3194
      %v3553 = vsel %vm1843, %v2784, %v3196
      %v3554 = vsel %vm1843, %v2785, %v3198
      %v3555 = vsel %vm1843, %v2786, %v3200
      %v3556 = vsel %vm1843, %v2787, %v3202
      %v3557 = vsel %vm1843, %v2788, %v3204
      %v3558 = vsel %vm1843, %v2789, %v3206
      %v3559 = vsel %vm1843, %v2822, %v3272
      %v3560 = vsel %vm1843, %v2823, %v3274
      %v3561 = vsel %vm1843, %v2824, %v3276
      %v3562 = vsel %vm1843, %v2825, %v3278
      %v3563 = vsel %vm1843, %v2826, %v3280
      %v3564 = vsel %vm1843, %v2827, %v3282
      %v3565 = vsel %vm1843, %v2828, %v3284
      %v3566 = vsel %vm1843, %v2829, %v3286
      %v3567 = vsel %vm1843, %v2830, %v3288
      %v3568 = vsel %vm1843, %v2831, %v3290
      %v3569 = vsel %vm1843, %v2832, %v3292
      %v3570 = vsel %vm1843, %v2833, %v3294
      %v3571 = vsel %vm1843, %v2834, %v3296
      %v3572 = vsel %vm1843, %v2835, %v3298
      %v3573 = vsel %vm1843, %v2836, %v3300
      %v3574 = vsel %vm1843, %v2837, %v3302
      %v3575 = vsel %vm1843, %v2838, %v3304
      %v3576 = vsel %vm1843, %v2839, %v3306
      %v3577 = vsel %vm1843, %v2840, %v3308
      %v3578 = vsel %vm1843, %v2841, %v3310
      %v3579 = vsel %vm1843, %v2842, %v3312
      %v3580 = vsel %vm1843, %v2843, %v3314
      %v3581 = vsel %vm1843, %v2844, %v3316
      %v3582 = vsel %vm1843, %v2845, %v3318
      %v3583 = vsel %vm1843, %v2846, %v3320
      %v3584 = vsel %vm1843, %v2847, %v3322
      %v3585 = vsel %vm1843, %v2848, %v3324
      %v3586 = vsel %vm1843, %v2849, %v3326
      %v3587 = vsel %vm1843, %v2850, %v3328
      %v3588 = vsel %vm1843, %v2851, %v3330
      %v3589 = vsel %vm1843, %v2852, %v3332
      %v3590 = vsel %vm1843, %v2853, %v3334
      %v3591 = vsel %vm1843, %v2887, %v3400
      %v3592 = vsel %vm1843, %v2888, %v3402
      %v3593 = vsel %vm1843, %v2889, %v3404
      %v3594 = vsel %vm1843, %v2890, %v3406
      %v3595 = vsel %vm1843, %v2891, %v3408
      %v3596 = vsel %vm1843, %v2892, %v3410
      %v3597 = vsel %vm1843, %v2893, %v3412
      %v3598 = vsel %vm1843, %v2894, %v3414
      %v3599 = vsel %vm1843, %v2895, %v3416
      %v3600 = vsel %vm1843, %v2896, %v3418
      %v3601 = vsel %vm1843, %v2897, %v3420
      %v3602 = vsel %vm1843, %v2898, %v3422
      %v3603 = vsel %vm1843, %v2899, %v3424
      %v3604 = vsel %vm1843, %v2900, %v3426
      %v3605 = vsel %vm1843, %v2901, %v3428
      %v3606 = vsel %vm1843, %v2902, %v3430
      %v3607 = vsel %vm1843, %v2903, %v3432
      %v3608 = vsel %vm1843, %v2904, %v3434
      %v3609 = vsel %vm1843, %v2905, %v3436
      %v3610 = vsel %vm1843, %v2906, %v3438
      %v3611 = vsel %vm1843, %v2907, %v3440
      %v3612 = vsel %vm1843, %v2908, %v3442
      %v3613 = vsel %vm1843, %v2909, %v3444
      %v3614 = vsel %vm1843, %v2910, %v3446
      %v3615 = vsel %vm1843, %v2911, %v3448
      %v3616 = vsel %vm1843, %v2912, %v3450
      %v3617 = vsel %vm1843, %v2913, %v3452
      %v3618 = vsel %vm1843, %v2914, %v3454
      %v3619 = vsel %vm1843, %v2915, %v3456
      %v3620 = vsel %vm1843, %v2916, %v3458
      %v3621 = vsel %vm1843, %v2917, %v3460
      %v3622 = vsel %vm1843, %v2918, %v3462
      %v3623 = vpack.c.bf16 %v3496, %v3495
      %v3624 = vpack.c.bf16 %v3528, %v3527
      %v3625 = vpack.c.bf16 %v3560, %v3559
      %v3626 = vpack.c.bf16 %v3592, %v3591
      %v3627 = vpack.c.bf16 %v2952, %v2951
      %v3628 = vpack.c.bf16 %v3498, %v3497
      %v3629 = vpack.c.bf16 %v3530, %v3529
      %v3630 = vpack.c.bf16 %v3562, %v3561
      %v3631 = vpack.c.bf16 %v3594, %v3593
      %v3632 = vpack.c.bf16 %v2954, %v2953
      %v3633 = vpack.c.bf16 %v3500, %v3499
      %v3634 = vpack.c.bf16 %v3532, %v3531
      %v3635 = vpack.c.bf16 %v3564, %v3563
      %v3636 = vpack.c.bf16 %v3596, %v3595
      %v3637 = vpack.c.bf16 %v2956, %v2955
      %v3638 = vpack.c.bf16 %v3502, %v3501
      %v3639 = vpack.c.bf16 %v3534, %v3533
      %v3640 = vpack.c.bf16 %v3566, %v3565
      %v3641 = vpack.c.bf16 %v3598, %v3597
      %v3642 = vpack.c.bf16 %v2958, %v2957
      %v3643 = vpack.c.bf16 %v3504, %v3503
      %v3644 = vpack.c.bf16 %v3536, %v3535
      %v3645 = vpack.c.bf16 %v3568, %v3567
      %v3646 = vpack.c.bf16 %v3600, %v3599
      %v3647 = vpack.c.bf16 %v2960, %v2959
      %v3648 = vpack.c.bf16 %v3506, %v3505
      %v3649 = vpack.c.bf16 %v3538, %v3537
      %v3650 = vpack.c.bf16 %v3570, %v3569
      %v3651 = vpack.c.bf16 %v3602, %v3601
      %v3652 = vpack.c.bf16 %v2962, %v2961
      %v3653 = vpack.c.bf16 %v3508, %v3507
      %v3654 = vpack.c.bf16 %v3540, %v3539
      %v3655 = vpack.c.bf16 %v3572, %v3571
      %v3656 = vpack.c.bf16 %v3604, %v3603
      %v3657 = vpack.c.bf16 %v2964, %v2963
      %v3658 = vpack.c.bf16 %v3510, %v3509
      %v3659 = vpack.c.bf16 %v3542, %v3541
      %v3660 = vpack.c.bf16 %v3574, %v3573
      %v3661 = vpack.c.bf16 %v3606, %v3605
      %v3662 = vpack.c.bf16 %v2966, %v2965
      %v3663 = vpack.c.bf16 %v3512, %v3511
      %v3664 = vpack.c.bf16 %v3544, %v3543
      %v3665 = vpack.c.bf16 %v3576, %v3575
      %v3666 = vpack.c.bf16 %v3608, %v3607
      %v3667 = vpack.c.bf16 %v2968, %v2967
      %v3668 = vpack.c.bf16 %v3514, %v3513
      %v3669 = vpack.c.bf16 %v3546, %v3545
      %v3670 = vpack.c.bf16 %v3578, %v3577
      %v3671 = vpack.c.bf16 %v3610, %v3609
      %v3672 = vpack.c.bf16 %v2970, %v2969
      %v3673 = vpack.c.bf16 %v3516, %v3515
      %v3674 = vpack.c.bf16 %v3548, %v3547
      %v3675 = vpack.c.bf16 %v3580, %v3579
      %v3676 = vpack.c.bf16 %v3612, %v3611
      %v3677 = vpack.c.bf16 %v2972, %v2971
      %v3678 = vpack.c.bf16 %v3518, %v3517
      %v3679 = vpack.c.bf16 %v3550, %v3549
      %v3680 = vpack.c.bf16 %v3582, %v3581
      %v3681 = vpack.c.bf16 %v3614, %v3613
      %v3682 = vpack.c.bf16 %v2974, %v2973
      %v3683 = vpack.c.bf16 %v3520, %v3519
      %v3684 = vpack.c.bf16 %v3552, %v3551
      %v3685 = vpack.c.bf16 %v3584, %v3583
      %v3686 = vpack.c.bf16 %v3616, %v3615
      %v3687 = vpack.c.bf16 %v2976, %v2975
      %v3688 = vpack.c.bf16 %v3522, %v3521
      %v3689 = vpack.c.bf16 %v3554, %v3553
      %v3690 = vpack.c.bf16 %v3586, %v3585
      %v3691 = vpack.c.bf16 %v3618, %v3617
      %v3692 = vpack.c.bf16 %v2978, %v2977
      %v3693 = vpack.c.bf16 %v3524, %v3523
      %v3694 = vpack.c.bf16 %v3556, %v3555
      %v3695 = vpack.c.bf16 %v3588, %v3587
      %v3696 = vpack.c.bf16 %v3620, %v3619
      %v3697 = vpack.c.bf16 %v2980, %v2979
      %v3698 = vpack.c.bf16 %v3526, %v3525
      %v3699 = vpack.c.bf16 %v3558, %v3557
      %v3700 = vpack.c.bf16 %v3590, %v3589
      %v3701 = vpack.c.bf16 %v3622, %v3621
      %v3702 = vpack.c.bf16 %v2982, %v2981
      %v3703 = vld [vmem:[%s5] sm:$0xf]
      %v3704 = vld [vmem:[%s5 + $0x4] sm:$0xf]
      %v3705 = vld [vmem:[%s5 + $0x8] sm:$0xf]
      %v3706 = vld [vmem:[%s5 + $0xc] sm:$0xf]
      %v3707 = vld [vmem:[%s5 + $0x10] sm:$0xf]
      %v3708 = vld [vmem:[%s5 + $0x14] sm:$0xf]
      %v3709 = vld [vmem:[%s5 + $0x18] sm:$0xf]
      %v3710 = vld [vmem:[%s5 + $0x1c] sm:$0xf]
      %v3711 = vld [vmem:[%s5 + $0x20] sm:$0xf]
      %v3712 = vld [vmem:[%s5 + $0x24] sm:$0xf]
      %v3713 = vld [vmem:[%s5 + $0x28] sm:$0xf]
      %v3714 = vld [vmem:[%s5 + $0x2c] sm:$0xf]
      %v3715 = vld [vmem:[%s5 + $0x30] sm:$0xf]
      %v3716 = vld [vmem:[%s5 + $0x34] sm:$0xf]
      %v3717 = vld [vmem:[%s5 + $0x38] sm:$0xf]
      %v3718 = vld [vmem:[%s5 + $0x3c] sm:$0xf]
      %v3719 = vld [vmem:[%s5 + $0x40] sm:$0xf]
      %v3720 = vld [vmem:[%s5 + $0x44] sm:$0xf]
      %v3721 = vld [vmem:[%s5 + $0x48] sm:$0xf]
      %v3722 = vld [vmem:[%s5 + $0x4c] sm:$0xf]
      %v3723 = vld [vmem:[%s5 + $0x50] sm:$0xf]
      %v3724 = vld [vmem:[%s5 + $0x54] sm:$0xf]
      %v3725 = vld [vmem:[%s5 + $0x58] sm:$0xf]
      %v3726 = vld [vmem:[%s5 + $0x5c] sm:$0xf]
      %v3727 = vld [vmem:[%s5 + $0x60] sm:$0xf]
      %v3728 = vld [vmem:[%s5 + $0x64] sm:$0xf]
      %v3729 = vld [vmem:[%s5 + $0x68] sm:$0xf]
      %v3730 = vld [vmem:[%s5 + $0x6c] sm:$0xf]
      %v3731 = vld [vmem:[%s5 + $0x70] sm:$0xf]
      %v3732 = vld [vmem:[%s5 + $0x74] sm:$0xf]
      %v3733 = vld [vmem:[%s5 + $0x78] sm:$0xf]
      %v3734 = vld [vmem:[%s5 + $0x7c] sm:$0xf]
      %v3735 = vld [vmem:[%s5 + $0x80] sm:$0xf]
      %v3736 = vld [vmem:[%s5 + $0x84] sm:$0xf]
      %v3737 = vld [vmem:[%s5 + $0x88] sm:$0xf]
      %v3738 = vld [vmem:[%s5 + $0x8c] sm:$0xf]
      %v3739 = vld [vmem:[%s5 + $0x90] sm:$0xf]
      %v3740 = vld [vmem:[%s5 + $0x94] sm:$0xf]
      %v3741 = vld [vmem:[%s5 + $0x98] sm:$0xf]
      %v3742 = vld [vmem:[%s5 + $0x9c] sm:$0xf]
      %v3743 = vld [vmem:[%s5 + $0xa0] sm:$0xf]
      %v3744 = vld [vmem:[%s5 + $0xa4] sm:$0xf]
      %v3745 = vld [vmem:[%s5 + $0xa8] sm:$0xf]
      %v3746 = vld [vmem:[%s5 + $0xac] sm:$0xf]
      %v3747 = vld [vmem:[%s5 + $0xb0] sm:$0xf]
      %v3748 = vld [vmem:[%s5 + $0xb4] sm:$0xf]
      %v3749 = vld [vmem:[%s5 + $0xb8] sm:$0xf]
      %v3750 = vld [vmem:[%s5 + $0xbc] sm:$0xf]
      %v3751 = vld [vmem:[%s5 + $0xc0] sm:$0xf]
      %v3752 = vld [vmem:[%s5 + $0xc4] sm:$0xf]
      %v3753 = vld [vmem:[%s5 + $0xc8] sm:$0xf]
      %v3754 = vld [vmem:[%s5 + $0xcc] sm:$0xf]
      %v3755 = vld [vmem:[%s5 + $0xd0] sm:$0xf]
      %v3756 = vld [vmem:[%s5 + $0xd4] sm:$0xf]
      %v3757 = vld [vmem:[%s5 + $0xd8] sm:$0xf]
      %v3758 = vld [vmem:[%s5 + $0xdc] sm:$0xf]
      %v3759 = vld [vmem:[%s5 + $0xe0] sm:$0xf]
      %v3760 = vld [vmem:[%s5 + $0xe4] sm:$0xf]
      %v3761 = vld [vmem:[%s5 + $0xe8] sm:$0xf]
      %v3762 = vld [vmem:[%s5 + $0xec] sm:$0xf]
      %v3763 = vld [vmem:[%s5 + $0xf0] sm:$0xf]
      %v3764 = vld [vmem:[%s5 + $0xf4] sm:$0xf]
      %v3765 = vld [vmem:[%s5 + $0xf8] sm:$0xf]
      %v3766 = vld [vmem:[%s5 + $0xfc] sm:$0xf]
      %v3767 = vld [vmem:[%s5 + $0x100] sm:$0xf]
      %v3768 = vld [vmem:[%s5 + $0x104] sm:$0xf]
      %v3769 = vld [vmem:[%s5 + $0x108] sm:$0xf]
      %v3770 = vld [vmem:[%s5 + $0x10c] sm:$0xf]
      %v3771 = vld [vmem:[%s5 + $0x110] sm:$0xf]
      %v3772 = vld [vmem:[%s5 + $0x114] sm:$0xf]
      %v3773 = vld [vmem:[%s5 + $0x118] sm:$0xf]
      %v3774 = vld [vmem:[%s5 + $0x11c] sm:$0xf]
      %v3775 = vld [vmem:[%s6] sm:$0x1]
      %v3777 = vlaneseq
      %v3778 = vshrl.u32 %v3777, 7
      %v3779 = vsub.s32 0, %v3778
      %v3780 = vrot.slane %v3775, %v3779
      %v3854 = vunpack.c.l.b16 %v3703
      %v3855 = vunpack.c.l.b16 %v3704
      %v3856 = vunpack.c.l.b16 %v3705
      %v3857 = vunpack.c.l.b16 %v3706
      %v3858 = vunpack.c.l.b16 %v3707
      %v3859 = vunpack.c.l.b16 %v3708
      %v3860 = vunpack.c.l.b16 %v3709
      %v3861 = vunpack.c.l.b16 %v3710
      %v3862 = vunpack.c.l.b16 %v3711
      %v3863 = vunpack.c.l.b16 %v3712
      %v3864 = vunpack.c.l.b16 %v3713
      %v3865 = vunpack.c.l.b16 %v3714
      %v3866 = vunpack.c.l.b16 %v3715
      %v3867 = vunpack.c.l.b16 %v3716
      %v3868 = vunpack.c.l.b16 %v3717
      %v3869 = vunpack.c.l.b16 %v3718
      %v3870 = vunpack.c.l.b16 %v3719
      %v3871 = vunpack.c.l.b16 %v3720
      %v3872 = vunpack.c.l.b16 %v3721
      %v3873 = vunpack.c.l.b16 %v3722
      %v3874 = vunpack.c.l.b16 %v3723
      %v3875 = vunpack.c.l.b16 %v3724
      %v3876 = vunpack.c.l.b16 %v3725
      %v3877 = vunpack.c.l.b16 %v3726
      %v3878 = vunpack.c.l.b16 %v3727
      %v3879 = vunpack.c.l.b16 %v3728
      %v3880 = vunpack.c.l.b16 %v3729
      %v3881 = vunpack.c.l.b16 %v3730
      %v3882 = vunpack.c.l.b16 %v3731
      %v3883 = vunpack.c.l.b16 %v3732
      %v3884 = vunpack.c.l.b16 %v3733
      %v3885 = vunpack.c.l.b16 %v3734
      %v3886 = vunpack.c.l.b16 %v3735
      %v3887 = vunpack.c.l.b16 %v3736
      %v3888 = vunpack.c.l.b16 %v3737
      %v3889 = vunpack.c.l.b16 %v3738
      %v3890 = vunpack.c.l.b16 %v3739
      %v3891 = vunpack.c.l.b16 %v3740
      %v3892 = vunpack.c.l.b16 %v3741
      %v3893 = vunpack.c.l.b16 %v3742
      %v3894 = vunpack.c.l.b16 %v3743
      %v3895 = vunpack.c.l.b16 %v3744
      %v3896 = vunpack.c.l.b16 %v3745
      %v3897 = vunpack.c.l.b16 %v3746
      %v3898 = vunpack.c.l.b16 %v3747
      %v3899 = vunpack.c.l.b16 %v3748
      %v3900 = vunpack.c.l.b16 %v3749
      %v3901 = vunpack.c.l.b16 %v3750
      %v3902 = vunpack.c.l.b16 %v3751
      %v3903 = vunpack.c.l.b16 %v3752
      %v3904 = vunpack.c.l.b16 %v3753
      %v3905 = vunpack.c.l.b16 %v3754
      %v3906 = vunpack.c.l.b16 %v3755
      %v3907 = vunpack.c.l.b16 %v3756
      %v3908 = vunpack.c.l.b16 %v3757
      %v3909 = vunpack.c.l.b16 %v3758
      %v3910 = vunpack.c.l.b16 %v3759
      %v3911 = vunpack.c.l.b16 %v3760
      %v3912 = vunpack.c.l.b16 %v3761
      %v3913 = vunpack.c.l.b16 %v3762
      %v3914 = vunpack.c.l.b16 %v3763
      %v3915 = vunpack.c.l.b16 %v3764
      %v3916 = vunpack.c.l.b16 %v3765
      %v3917 = vunpack.c.l.b16 %v3766
      %v3918 = vunpack.c.l.b16 %v3767
      %v3919 = vunpack.c.l.b16 %v3768
      %v3920 = vunpack.c.l.b16 %v3769
      %v3921 = vunpack.c.l.b16 %v3770
      %v3922 = vunpack.c.l.b16 %v3771
      %v3923 = vunpack.c.l.b16 %v3772
      %v3924 = vunpack.c.l.b16 %v3773
      %v3925 = vunpack.c.l.b16 %v3774
      %v3926 = vpack.c.b16 %v3855, %v3854
      %v3927 = vpack.c.b16 %v3857, %v3856
      %v3928 = vpack.c.b16 %v3859, %v3858
      %v3929 = vpack.c.b16 %v3861, %v3860
      %v3930 = vpack.c.b16 %v3863, %v3862
      %v3931 = vpack.c.b16 %v3865, %v3864
      %v3932 = vpack.c.b16 %v3867, %v3866
      %v3933 = vpack.c.b16 %v3869, %v3868
      %v3934 = vpack.c.b16 %v3871, %v3870
      %v3935 = vpack.c.b16 %v3873, %v3872
      %v3936 = vpack.c.b16 %v3875, %v3874
      %v3937 = vpack.c.b16 %v3877, %v3876
      %v3938 = vpack.c.b16 %v3879, %v3878
      %v3939 = vpack.c.b16 %v3881, %v3880
      %v3940 = vpack.c.b16 %v3883, %v3882
      %v3941 = vpack.c.b16 %v3885, %v3884
      %v3942 = vpack.c.b16 %v3887, %v3886
      %v3943 = vpack.c.b16 %v3889, %v3888
      %v3944 = vpack.c.b16 %v3891, %v3890
      %v3945 = vpack.c.b16 %v3893, %v3892
      %v3946 = vpack.c.b16 %v3895, %v3894
      %v3947 = vpack.c.b16 %v3897, %v3896
      %v3948 = vpack.c.b16 %v3899, %v3898
      %v3949 = vpack.c.b16 %v3901, %v3900
      %v3950 = vpack.c.b16 %v3903, %v3902
      %v3951 = vpack.c.b16 %v3905, %v3904
      %v3952 = vpack.c.b16 %v3907, %v3906
      %v3953 = vpack.c.b16 %v3909, %v3908
      %v3954 = vpack.c.b16 %v3911, %v3910
      %v3955 = vpack.c.b16 %v3913, %v3912
      %v3956 = vpack.c.b16 %v3915, %v3914
      %v3957 = vpack.c.b16 %v3917, %v3916
      %v3958 = vpack.c.b16 %v3919, %v3918
      %v3959 = vpack.c.b16 %v3921, %v3920
      %v3960 = vpack.c.b16 %v3923, %v3922
      %v3961 = vpack.c.b16 %v3925, %v3924
      %v3999 = vsel %vm1843, %v3627, 0
      %v4002 = vsel %vm1843, %v3632, 0
      %v4005 = vsel %vm1843, %v3637, 0
      %v4008 = vsel %vm1843, %v3642, 0
      %v4011 = vsel %vm1843, %v3647, 0
      %v4014 = vsel %vm1843, %v3652, 0
      %v4017 = vsel %vm1843, %v3657, 0
      %v4020 = vsel %vm1843, %v3662, 0
      %v4023 = vsel %vm1843, %v3667, 0
      %v4026 = vsel %vm1843, %v3672, 0
      %v4029 = vsel %vm1843, %v3677, 0
      %v4032 = vsel %vm1843, %v3682, 0
      %v4035 = vsel %vm1843, %v3687, 0
      %v4038 = vsel %vm1843, %v3692, 0
      %v4041 = vsel %vm1843, %v3697, 0
      %v4044 = vsel %vm1843, %v3702, 0
      %4046 = vmatprep.subr.bf16.mxu0 0
      %4047 = vmatpush1.bf16.msra.mxu0 %v3933
      %4048 = vmatprep.subr.bf16.mxu0 0
      %4049 = vmatpush1.bf16.msra.mxu0 %v3932
      %4050 = vmatprep.subr.bf16.mxu0 0
      %4051 = vmatpush1.bf16.msra.mxu0 %v3931
      %4052 = vmatprep.subr.bf16.mxu0 0
      %4053 = vmatpush1.bf16.msra.mxu0 %v3930
      %4054 = vmatprep.subr.bf16.mxu0 0
      %4055 = vmatpush1.bf16.msra.mxu0 %v3929
      %4056 = vmatprep.subr.bf16.mxu0 0
      %4057 = vmatpush1.bf16.msra.mxu0 %v3928
      %4058 = vmatprep.subr.bf16.mxu0 0
      %4059 = vmatpush1.bf16.msra.mxu0 %v3927
      %4060 = vmatprep.subr.bf16.mxu0 0
      %4061 = vmatpush1.bf16.msra.mxu0 %v3926
      %4062 = vmatprep.subr.bf16.mxu0 0
      %4063 = vmatpush2.bf16.msra.mxu0 %v3941
      %4064 = vmatprep.subr.bf16.mxu0 0
      %4065 = vmatpush2.bf16.msra.mxu0 %v3940
      %4066 = vmatprep.subr.bf16.mxu0 0
      %4067 = vmatpush2.bf16.msra.mxu0 %v3939
      %4068 = vmatprep.subr.bf16.mxu0 0
      %4069 = vmatpush2.bf16.msra.mxu0 %v3938
      %4070 = vmatprep.subr.bf16.mxu0 0
      %4071 = vmatpush2.bf16.msra.mxu0 %v3937
      %4072 = vmatprep.subr.bf16.mxu0 0
      %4073 = vmatpush2.bf16.msra.mxu0 %v3936
      %4074 = vmatprep.subr.bf16.mxu0 0
      %4075 = vmatpush2.bf16.msra.mxu0 %v3935
      %4076 = vmatprep.subr.bf16.mxu0 0
      %4077 = vmatpush2.bf16.msra.mxu0 %v3934
      %4078 = vmatprep.mubr.bf16.mxu0 %v3624
      %4079 = vmatmul.mubr.bf16.gmra.mxu0 %v3623
      %v4080 = vpop.f32.mrf.mxu0
      %v4081 = vadd.f32 %v3780, %v4080
      %v4082 = vpop.f32.mrf.mxu0
      %v4083 = vpop.f32.mrf.mxu0
      %v4084 = vadd.f32 %v3780, %v4083
      %v4085 = vpop.f32.mrf.mxu0
      %4086 = vmatprep.mubr.bf16.mxu0 %v3629
      %4087 = vmatmul.mubr.bf16.gmra.mxu0 %v3628
      %v4088 = vpop.f32.mrf.mxu0
      %v4089 = vadd.f32 %v3780, %v4088
      %v4090 = vpop.f32.mrf.mxu0
      %v4091 = vpop.f32.mrf.mxu0
      %v4092 = vadd.f32 %v3780, %v4091
      %v4093 = vpop.f32.mrf.mxu0
      %4094 = vmatprep.mubr.bf16.mxu0 %v3634
      %4095 = vmatmul.mubr.bf16.gmra.mxu0 %v3633
      %v4096 = vpop.f32.mrf.mxu0
      %v4097 = vadd.f32 %v3780, %v4096
      %v4098 = vpop.f32.mrf.mxu0
      %v4099 = vpop.f32.mrf.mxu0
      %v4100 = vadd.f32 %v3780, %v4099
      %v4101 = vpop.f32.mrf.mxu0
      %4102 = vmatprep.mubr.bf16.mxu0 %v3639
      %4103 = vmatmul.mubr.bf16.gmra.mxu0 %v3638
      %v4104 = vpop.f32.mrf.mxu0
      %v4105 = vadd.f32 %v3780, %v4104
      %v4106 = vpop.f32.mrf.mxu0
      %v4107 = vpop.f32.mrf.mxu0
      %v4108 = vadd.f32 %v3780, %v4107
      %v4109 = vpop.f32.mrf.mxu0
      %4110 = vmatprep.mubr.bf16.mxu0 %v3644
      %4111 = vmatmul.mubr.bf16.gmra.mxu0 %v3643
      %v4112 = vpop.f32.mrf.mxu0
      %v4113 = vadd.f32 %v3780, %v4112
      %v4114 = vpop.f32.mrf.mxu0
      %v4115 = vpop.f32.mrf.mxu0
      %v4116 = vadd.f32 %v3780, %v4115
      %v4117 = vpop.f32.mrf.mxu0
      %4118 = vmatprep.mubr.bf16.mxu0 %v3649
      %4119 = vmatmul.mubr.bf16.gmra.mxu0 %v3648
      %v4120 = vpop.f32.mrf.mxu0
      %v4121 = vadd.f32 %v3780, %v4120
      %v4122 = vpop.f32.mrf.mxu0
      %v4123 = vpop.f32.mrf.mxu0
      %v4124 = vadd.f32 %v3780, %v4123
      %v4125 = vpop.f32.mrf.mxu0
      %4126 = vmatprep.mubr.bf16.mxu0 %v3654
      %4127 = vmatmul.mubr.bf16.gmra.mxu0 %v3653
      %v4128 = vpop.f32.mrf.mxu0
      %v4129 = vadd.f32 %v3780, %v4128
      %v4130 = vpop.f32.mrf.mxu0
      %v4131 = vpop.f32.mrf.mxu0
      %v4132 = vadd.f32 %v3780, %v4131
      %v4133 = vpop.f32.mrf.mxu0
      %4134 = vmatprep.mubr.bf16.mxu0 %v3659
      %4135 = vmatmul.mubr.bf16.gmra.mxu0 %v3658
      %v4136 = vpop.f32.mrf.mxu0
      %v4137 = vadd.f32 %v3780, %v4136
      %v4138 = vpop.f32.mrf.mxu0
      %v4139 = vpop.f32.mrf.mxu0
      %v4140 = vadd.f32 %v3780, %v4139
      %v4141 = vpop.f32.mrf.mxu0
      %4142 = vmatprep.mubr.bf16.mxu0 %v3664
      %4143 = vmatmul.mubr.bf16.gmra.mxu0 %v3663
      %v4144 = vpop.f32.mrf.mxu0
      %v4145 = vadd.f32 %v3780, %v4144
      %v4146 = vpop.f32.mrf.mxu0
      %v4147 = vpop.f32.mrf.mxu0
      %v4148 = vadd.f32 %v3780, %v4147
      %v4149 = vpop.f32.mrf.mxu0
      %4150 = vmatprep.mubr.bf16.mxu0 %v3669
      %4151 = vmatmul.mubr.bf16.gmra.mxu0 %v3668
      %v4152 = vpop.f32.mrf.mxu0
      %v4153 = vadd.f32 %v3780, %v4152
      %v4154 = vpop.f32.mrf.mxu0
      %v4155 = vpop.f32.mrf.mxu0
      %v4156 = vadd.f32 %v3780, %v4155
      %v4157 = vpop.f32.mrf.mxu0
      %4158 = vmatprep.mubr.bf16.mxu0 %v3674
      %4159 = vmatmul.mubr.bf16.gmra.mxu0 %v3673
      %v4160 = vpop.f32.mrf.mxu0
      %v4161 = vadd.f32 %v3780, %v4160
      %v4162 = vpop.f32.mrf.mxu0
      %v4163 = vpop.f32.mrf.mxu0
      %v4164 = vadd.f32 %v3780, %v4163
      %v4165 = vpop.f32.mrf.mxu0
      %4166 = vmatprep.mubr.bf16.mxu0 %v3679
      %4167 = vmatmul.mubr.bf16.gmra.mxu0 %v3678
      %v4168 = vpop.f32.mrf.mxu0
      %v4169 = vadd.f32 %v3780, %v4168
      %v4170 = vpop.f32.mrf.mxu0
      %v4171 = vpop.f32.mrf.mxu0
      %v4172 = vadd.f32 %v3780, %v4171
      %v4173 = vpop.f32.mrf.mxu0
      %4174 = vmatprep.mubr.bf16.mxu0 %v3684
      %4175 = vmatmul.mubr.bf16.gmra.mxu0 %v3683
      %v4176 = vpop.f32.mrf.mxu0
      %v4177 = vadd.f32 %v3780, %v4176
      %v4178 = vpop.f32.mrf.mxu0
      %v4179 = vpop.f32.mrf.mxu0
      %v4180 = vadd.f32 %v3780, %v4179
      %v4181 = vpop.f32.mrf.mxu0
      %4182 = vmatprep.mubr.bf16.mxu0 %v3689
      %4183 = vmatmul.mubr.bf16.gmra.mxu0 %v3688
      %v4184 = vpop.f32.mrf.mxu0
      %v4185 = vadd.f32 %v3780, %v4184
      %v4186 = vpop.f32.mrf.mxu0
      %v4187 = vpop.f32.mrf.mxu0
      %v4188 = vadd.f32 %v3780, %v4187
      %v4189 = vpop.f32.mrf.mxu0
      %4190 = vmatprep.mubr.bf16.mxu0 %v3694
      %4191 = vmatmul.mubr.bf16.gmra.mxu0 %v3693
      %v4192 = vpop.f32.mrf.mxu0
      %v4193 = vadd.f32 %v3780, %v4192
      %v4194 = vpop.f32.mrf.mxu0
      %v4195 = vpop.f32.mrf.mxu0
      %v4196 = vadd.f32 %v3780, %v4195
      %v4197 = vpop.f32.mrf.mxu0
      %4198 = vmatprep.mubr.bf16.mxu0 %v3699
      %4199 = vmatmul.mubr.bf16.gmra.mxu0 %v3698
      %v4200 = vpop.f32.mrf.mxu0
      %v4201 = vadd.f32 %v3780, %v4200
      %v4202 = vpop.f32.mrf.mxu0
      %v4203 = vpop.f32.mrf.mxu0
      %v4204 = vadd.f32 %v3780, %v4203
      %v4205 = vpop.f32.mrf.mxu0
      %4206 = vdwg.mxu0
      %4207 = vmatprep.subr.bf16.mxu0 0
      %4208 = vmatpush1.bf16.msra.mxu0 %v3949
      %4209 = vmatprep.subr.bf16.mxu0 0
      %4210 = vmatpush1.bf16.msra.mxu0 %v3948
      %4211 = vmatprep.subr.bf16.mxu0 0
      %4212 = vmatpush1.bf16.msra.mxu0 %v3947
      %4213 = vmatprep.subr.bf16.mxu0 0
      %4214 = vmatpush1.bf16.msra.mxu0 %v3946
      %4215 = vmatprep.subr.bf16.mxu0 0
      %4216 = vmatpush1.bf16.msra.mxu0 %v3945
      %4217 = vmatprep.subr.bf16.mxu0 0
      %4218 = vmatpush1.bf16.msra.mxu0 %v3944
      %4219 = vmatprep.subr.bf16.mxu0 0
      %4220 = vmatpush1.bf16.msra.mxu0 %v3943
      %4221 = vmatprep.subr.bf16.mxu0 0
      %4222 = vmatpush1.bf16.msra.mxu0 %v3942
      %4223 = vmatprep.subr.bf16.mxu0 0
      %4224 = vmatpush2.bf16.msra.mxu0 %v3957
      %4225 = vmatprep.subr.bf16.mxu0 0
      %4226 = vmatpush2.bf16.msra.mxu0 %v3956
      %4227 = vmatprep.subr.bf16.mxu0 0
      %4228 = vmatpush2.bf16.msra.mxu0 %v3955
      %4229 = vmatprep.subr.bf16.mxu0 0
      %4230 = vmatpush2.bf16.msra.mxu0 %v3954
      %4231 = vmatprep.subr.bf16.mxu0 0
      %4232 = vmatpush2.bf16.msra.mxu0 %v3953
      %4233 = vmatprep.subr.bf16.mxu0 0
      %4234 = vmatpush2.bf16.msra.mxu0 %v3952
      %4235 = vmatprep.subr.bf16.mxu0 0
      %4236 = vmatpush2.bf16.msra.mxu0 %v3951
      %4237 = vmatprep.subr.bf16.mxu0 0
      %4238 = vmatpush2.bf16.msra.mxu0 %v3950
      %4239 = vmatprep.mubr.bf16.mxu0 %v3626
      %4240 = vmatmul.mubr.bf16.gmra.mxu0 %v3625
      %v4241 = vpop.f32.mrf.mxu0
      %v4242 = vadd.f32 %v4081, %v4241
      %v4243 = vpop.f32.mrf.mxu0
      %v4244 = vpop.f32.mrf.mxu0
      %v4245 = vadd.f32 %v4084, %v4244
      %v4246 = vpop.f32.mrf.mxu0
      %4247 = vmatprep.mubr.bf16.mxu0 %v3631
      %4248 = vmatmul.mubr.bf16.gmra.mxu0 %v3630
      %v4249 = vpop.f32.mrf.mxu0
      %v4250 = vadd.f32 %v4089, %v4249
      %v4251 = vpop.f32.mrf.mxu0
      %v4252 = vpop.f32.mrf.mxu0
      %v4253 = vadd.f32 %v4092, %v4252
      %v4254 = vpop.f32.mrf.mxu0
      %4255 = vmatprep.mubr.bf16.mxu0 %v3636
      %4256 = vmatmul.mubr.bf16.gmra.mxu0 %v3635
      %v4257 = vpop.f32.mrf.mxu0
      %v4258 = vadd.f32 %v4097, %v4257
      %v4259 = vpop.f32.mrf.mxu0
      %v4260 = vpop.f32.mrf.mxu0
      %v4261 = vadd.f32 %v4100, %v4260
      %v4262 = vpop.f32.mrf.mxu0
      %4263 = vmatprep.mubr.bf16.mxu0 %v3641
      %4264 = vmatmul.mubr.bf16.gmra.mxu0 %v3640
      %v4265 = vpop.f32.mrf.mxu0
      %v4266 = vadd.f32 %v4105, %v4265
      %v4267 = vpop.f32.mrf.mxu0
      %v4268 = vpop.f32.mrf.mxu0
      %v4269 = vadd.f32 %v4108, %v4268
      %v4270 = vpop.f32.mrf.mxu0
      %4271 = vmatprep.mubr.bf16.mxu0 %v3646
      %4272 = vmatmul.mubr.bf16.gmra.mxu0 %v3645
      %v4273 = vpop.f32.mrf.mxu0
      %v4274 = vadd.f32 %v4113, %v4273
      %v4275 = vpop.f32.mrf.mxu0
      %v4276 = vpop.f32.mrf.mxu0
      %v4277 = vadd.f32 %v4116, %v4276
      %v4278 = vpop.f32.mrf.mxu0
      %4279 = vmatprep.mubr.bf16.mxu0 %v3651
      %4280 = vmatmul.mubr.bf16.gmra.mxu0 %v3650
      %v4281 = vpop.f32.mrf.mxu0
      %v4282 = vadd.f32 %v4121, %v4281
      %v4283 = vpop.f32.mrf.mxu0
      %v4284 = vpop.f32.mrf.mxu0
      %v4285 = vadd.f32 %v4124, %v4284
      %v4286 = vpop.f32.mrf.mxu0
      %4287 = vmatprep.mubr.bf16.mxu0 %v3656
      %4288 = vmatmul.mubr.bf16.gmra.mxu0 %v3655
      %v4289 = vpop.f32.mrf.mxu0
      %v4290 = vadd.f32 %v4129, %v4289
      %v4291 = vpop.f32.mrf.mxu0
      %v4292 = vpop.f32.mrf.mxu0
      %v4293 = vadd.f32 %v4132, %v4292
      %v4294 = vpop.f32.mrf.mxu0
      %4295 = vmatprep.mubr.bf16.mxu0 %v3661
      %4296 = vmatmul.mubr.bf16.gmra.mxu0 %v3660
      %v4297 = vpop.f32.mrf.mxu0
      %v4298 = vadd.f32 %v4137, %v4297
      %v4299 = vpop.f32.mrf.mxu0
      %v4300 = vpop.f32.mrf.mxu0
      %v4301 = vadd.f32 %v4140, %v4300
      %v4302 = vpop.f32.mrf.mxu0
      %4303 = vmatprep.mubr.bf16.mxu0 %v3666
      %4304 = vmatmul.mubr.bf16.gmra.mxu0 %v3665
      %v4305 = vpop.f32.mrf.mxu0
      %v4306 = vadd.f32 %v4145, %v4305
      %v4307 = vpop.f32.mrf.mxu0
      %v4308 = vpop.f32.mrf.mxu0
      %v4309 = vadd.f32 %v4148, %v4308
      %v4310 = vpop.f32.mrf.mxu0
      %4311 = vmatprep.mubr.bf16.mxu0 %v3671
      %4312 = vmatmul.mubr.bf16.gmra.mxu0 %v3670
      %v4313 = vpop.f32.mrf.mxu0
      %v4314 = vadd.f32 %v4153, %v4313
      %v4315 = vpop.f32.mrf.mxu0
      %v4316 = vpop.f32.mrf.mxu0
      %v4317 = vadd.f32 %v4156, %v4316
      %v4318 = vpop.f32.mrf.mxu0
      %4319 = vmatprep.mubr.bf16.mxu0 %v3676
      %4320 = vmatmul.mubr.bf16.gmra.mxu0 %v3675
      %v4321 = vpop.f32.mrf.mxu0
      %v4322 = vadd.f32 %v4161, %v4321
      %v4323 = vpop.f32.mrf.mxu0
      %v4324 = vpop.f32.mrf.mxu0
      %v4325 = vadd.f32 %v4164, %v4324
      %v4326 = vpop.f32.mrf.mxu0
      %4327 = vmatprep.mubr.bf16.mxu0 %v3681
      %4328 = vmatmul.mubr.bf16.gmra.mxu0 %v3680
      %v4329 = vpop.f32.mrf.mxu0
      %v4330 = vadd.f32 %v4169, %v4329
      %v4331 = vpop.f32.mrf.mxu0
      %v4332 = vpop.f32.mrf.mxu0
      %v4333 = vadd.f32 %v4172, %v4332
      %v4334 = vpop.f32.mrf.mxu0
      %4335 = vmatprep.mubr.bf16.mxu0 %v3686
      %4336 = vmatmul.mubr.bf16.gmra.mxu0 %v3685
      %v4337 = vpop.f32.mrf.mxu0
      %v4338 = vadd.f32 %v4177, %v4337
      %v4339 = vpop.f32.mrf.mxu0
      %v4340 = vpop.f32.mrf.mxu0
      %v4341 = vadd.f32 %v4180, %v4340
      %v4342 = vpop.f32.mrf.mxu0
      %4343 = vmatprep.mubr.bf16.mxu0 %v3691
      %4344 = vmatmul.mubr.bf16.gmra.mxu0 %v3690
      %v4345 = vpop.f32.mrf.mxu0
      %v4346 = vadd.f32 %v4185, %v4345
      %v4347 = vpop.f32.mrf.mxu0
      %v4348 = vpop.f32.mrf.mxu0
      %v4349 = vadd.f32 %v4188, %v4348
      %v4350 = vpop.f32.mrf.mxu0
      %4351 = vmatprep.mubr.bf16.mxu0 %v3696
      %4352 = vmatmul.mubr.bf16.gmra.mxu0 %v3695
      %v4353 = vpop.f32.mrf.mxu0
      %v4354 = vadd.f32 %v4193, %v4353
      %v4355 = vpop.f32.mrf.mxu0
      %v4356 = vpop.f32.mrf.mxu0
      %v4357 = vadd.f32 %v4196, %v4356
      %v4358 = vpop.f32.mrf.mxu0
      %4359 = vmatprep.mubr.bf16.mxu0 %v3701
      %4360 = vmatmul.mubr.bf16.gmra.mxu0 %v3700
      %v4361 = vpop.f32.mrf.mxu0
      %v4362 = vadd.f32 %v4201, %v4361
      %v4363 = vpop.f32.mrf.mxu0
      %v4364 = vpop.f32.mrf.mxu0
      %v4365 = vadd.f32 %v4204, %v4364
      %v4366 = vpop.f32.mrf.mxu0
      %4367 = vdwg.mxu0
      %4368 = vmatprep.subr.bf16.mxu0 0
      %4369 = vmatpush1.bf16.msra.mxu0 0
      %4370 = vmatprep.subr.bf16.mxu0 0
      %4371 = vmatpush1.bf16.msra.mxu0 0
      %4372 = vmatprep.subr.bf16.mxu0 0
      %4373 = vmatpush1.bf16.msra.mxu0 0
      %4374 = vmatprep.subr.bf16.mxu0 0
      %4375 = vmatpush1.bf16.msra.mxu0 0
      %4376 = vmatprep.subr.bf16.mxu0 0
      %4377 = vmatpush1.bf16.msra.mxu0 %v3961
      %4378 = vmatprep.subr.bf16.mxu0 0
      %4379 = vmatpush1.bf16.msra.mxu0 %v3960
      %4380 = vmatprep.subr.bf16.mxu0 0
      %4381 = vmatpush1.bf16.msra.mxu0 %v3959
      %4382 = vmatprep.subr.bf16.mxu0 0
      %4383 = vmatpush1.bf16.msra.mxu0 %v3958
      %4384 = vmatprep.subr.bf16.mxu0 0
      %4385 = vmatpush2.bf16.msra.mxu0 0
      %4386 = vmatprep.subr.bf16.mxu0 0
      %4387 = vmatpush2.bf16.msra.mxu0 0
      %4388 = vmatprep.subr.bf16.mxu0 0
      %4389 = vmatpush2.bf16.msra.mxu0 0
      %4390 = vmatprep.subr.bf16.mxu0 0
      %4391 = vmatpush2.bf16.msra.mxu0 0
      %4392 = vmatprep.subr.bf16.mxu0 0
      %4393 = vmatpush2.bf16.msra.mxu0 0
      %4394 = vmatprep.subr.bf16.mxu0 0
      %4395 = vmatpush2.bf16.msra.mxu0 0
      %4396 = vmatprep.subr.bf16.mxu0 0
      %4397 = vmatpush2.bf16.msra.mxu0 0
      %4398 = vmatprep.subr.bf16.mxu0 0
      %4399 = vmatpush2.bf16.msra.mxu0 0
      %4400 = vmatprep.mubr.bf16.mxu0 0
      %4401 = vmatmul.mubr.bf16.gmra.mxu0 %v3999
      %v4402 = vpop.f32.mrf.mxu0
      %v4403 = vadd.f32 %v4242, %v4402
      %v4404 = vpop.f32.mrf.mxu0
      %v4405 = vpop.f32.mrf.mxu0
      %v4406 = vadd.f32 %v4245, %v4405
      %v4407 = vpop.f32.mrf.mxu0
      %4408 = vmatprep.mubr.bf16.mxu0 0
      %4409 = vmatmul.mubr.bf16.gmra.mxu0 %v4002
      %v4410 = vpop.f32.mrf.mxu0
      %v4411 = vadd.f32 %v4250, %v4410
      %v4412 = vpop.f32.mrf.mxu0
      %v4413 = vpop.f32.mrf.mxu0
      %v4414 = vadd.f32 %v4253, %v4413
      %v4415 = vpop.f32.mrf.mxu0
      %4416 = vmatprep.mubr.bf16.mxu0 0
      %4417 = vmatmul.mubr.bf16.gmra.mxu0 %v4005
      %v4418 = vpop.f32.mrf.mxu0
      %v4419 = vadd.f32 %v4258, %v4418
      %v4420 = vpop.f32.mrf.mxu0
      %v4421 = vpop.f32.mrf.mxu0
      %v4422 = vadd.f32 %v4261, %v4421
      %v4423 = vpop.f32.mrf.mxu0
      %4424 = vmatprep.mubr.bf16.mxu0 0
      %4425 = vmatmul.mubr.bf16.gmra.mxu0 %v4008
      %v4426 = vpop.f32.mrf.mxu0
      %v4427 = vadd.f32 %v4266, %v4426
      %v4428 = vpop.f32.mrf.mxu0
      %v4429 = vpop.f32.mrf.mxu0
      %v4430 = vadd.f32 %v4269, %v4429
      %v4431 = vpop.f32.mrf.mxu0
      %4432 = vmatprep.mubr.bf16.mxu0 0
      %4433 = vmatmul.mubr.bf16.gmra.mxu0 %v4011
      %v4434 = vpop.f32.mrf.mxu0
      %v4435 = vadd.f32 %v4274, %v4434
      %v4436 = vpop.f32.mrf.mxu0
      %v4437 = vpop.f32.mrf.mxu0
      %v4438 = vadd.f32 %v4277, %v4437
      %v4439 = vpop.f32.mrf.mxu0
      %4440 = vmatprep.mubr.bf16.mxu0 0
      %4441 = vmatmul.mubr.bf16.gmra.mxu0 %v4014
      %v4442 = vpop.f32.mrf.mxu0
      %v4443 = vadd.f32 %v4282, %v4442
      %v4444 = vpop.f32.mrf.mxu0
      %v4445 = vpop.f32.mrf.mxu0
      %v4446 = vadd.f32 %v4285, %v4445
      %v4447 = vpop.f32.mrf.mxu0
      %4448 = vmatprep.mubr.bf16.mxu0 0
      %4449 = vmatmul.mubr.bf16.gmra.mxu0 %v4017
      %v4450 = vpop.f32.mrf.mxu0
      %v4451 = vadd.f32 %v4290, %v4450
      %v4452 = vpop.f32.mrf.mxu0
      %v4453 = vpop.f32.mrf.mxu0
      %v4454 = vadd.f32 %v4293, %v4453
      %v4455 = vpop.f32.mrf.mxu0
      %4456 = vmatprep.mubr.bf16.mxu0 0
      %4457 = vmatmul.mubr.bf16.gmra.mxu0 %v4020
      %v4458 = vpop.f32.mrf.mxu0
      %v4459 = vadd.f32 %v4298, %v4458
      %v4460 = vpop.f32.mrf.mxu0
      %v4461 = vpop.f32.mrf.mxu0
      %v4462 = vadd.f32 %v4301, %v4461
      %v4463 = vpop.f32.mrf.mxu0
      %4464 = vmatprep.mubr.bf16.mxu0 0
      %4465 = vmatmul.mubr.bf16.gmra.mxu0 %v4023
      %v4466 = vpop.f32.mrf.mxu0
      %v4467 = vadd.f32 %v4306, %v4466
      %v4468 = vpop.f32.mrf.mxu0
      %v4469 = vpop.f32.mrf.mxu0
      %v4470 = vadd.f32 %v4309, %v4469
      %v4471 = vpop.f32.mrf.mxu0
      %4472 = vmatprep.mubr.bf16.mxu0 0
      %4473 = vmatmul.mubr.bf16.gmra.mxu0 %v4026
      %v4474 = vpop.f32.mrf.mxu0
      %v4475 = vadd.f32 %v4314, %v4474
      %v4476 = vpop.f32.mrf.mxu0
      %v4477 = vpop.f32.mrf.mxu0
      %v4478 = vadd.f32 %v4317, %v4477
      %v4479 = vpop.f32.mrf.mxu0
      %4480 = vmatprep.mubr.bf16.mxu0 0
      %4481 = vmatmul.mubr.bf16.gmra.mxu0 %v4029
      %v4482 = vpop.f32.mrf.mxu0
      %v4483 = vadd.f32 %v4322, %v4482
      %v4484 = vpop.f32.mrf.mxu0
      %v4485 = vpop.f32.mrf.mxu0
      %v4486 = vadd.f32 %v4325, %v4485
      %v4487 = vpop.f32.mrf.mxu0
      %4488 = vmatprep.mubr.bf16.mxu0 0
      %4489 = vmatmul.mubr.bf16.gmra.mxu0 %v4032
      %v4490 = vpop.f32.mrf.mxu0
      %v4491 = vadd.f32 %v4330, %v4490
      %v4492 = vpop.f32.mrf.mxu0
      %v4493 = vpop.f32.mrf.mxu0
      %v4494 = vadd.f32 %v4333, %v4493
      %v4495 = vpop.f32.mrf.mxu0
      %4496 = vmatprep.mubr.bf16.mxu0 0
      %4497 = vmatmul.mubr.bf16.gmra.mxu0 %v4035
      %v4498 = vpop.f32.mrf.mxu0
      %v4499 = vadd.f32 %v4338, %v4498
      %v4500 = vpop.f32.mrf.mxu0
      %v4501 = vpop.f32.mrf.mxu0
      %v4502 = vadd.f32 %v4341, %v4501
      %v4503 = vpop.f32.mrf.mxu0
      %4504 = vmatprep.mubr.bf16.mxu0 0
      %4505 = vmatmul.mubr.bf16.gmra.mxu0 %v4038
      %v4506 = vpop.f32.mrf.mxu0
      %v4507 = vadd.f32 %v4346, %v4506
      %v4508 = vpop.f32.mrf.mxu0
      %v4509 = vpop.f32.mrf.mxu0
      %v4510 = vadd.f32 %v4349, %v4509
      %v4511 = vpop.f32.mrf.mxu0
      %4512 = vmatprep.mubr.bf16.mxu0 0
      %4513 = vmatmul.mubr.bf16.gmra.mxu0 %v4041
      %v4514 = vpop.f32.mrf.mxu0
      %v4515 = vadd.f32 %v4354, %v4514
      %v4516 = vpop.f32.mrf.mxu0
      %v4517 = vpop.f32.mrf.mxu0
      %v4518 = vadd.f32 %v4357, %v4517
      %v4519 = vpop.f32.mrf.mxu0
      %4520 = vmatprep.mubr.bf16.mxu0 0
      %4521 = vmatmul.mubr.bf16.gmra.mxu0 %v4044
      %v4522 = vpop.f32.mrf.mxu0
      %v4523 = vadd.f32 %v4362, %v4522
      %v4524 = vpop.f32.mrf.mxu0
      %v4525 = vpop.f32.mrf.mxu0
      %v4526 = vadd.f32 %v4365, %v4525
      %v4527 = vpop.f32.mrf.mxu0
      %4528 = vdwg.mxu0
      %v4529 = vmax.f32 %v4403, 0.0
      %v4530 = vmax.f32 %v4406, 0.0
      %v4531 = vmax.f32 %v4411, 0.0
      %v4532 = vmax.f32 %v4414, 0.0
      %v4533 = vmax.f32 %v4419, 0.0
      %v4534 = vmax.f32 %v4422, 0.0
      %v4535 = vmax.f32 %v4427, 0.0
      %v4536 = vmax.f32 %v4430, 0.0
      %v4537 = vmax.f32 %v4435, 0.0
      %v4538 = vmax.f32 %v4438, 0.0
      %v4539 = vmax.f32 %v4443, 0.0
      %v4540 = vmax.f32 %v4446, 0.0
      %v4541 = vmax.f32 %v4451, 0.0
      %v4542 = vmax.f32 %v4454, 0.0
      %v4543 = vmax.f32 %v4459, 0.0
      %v4544 = vmax.f32 %v4462, 0.0
      %v4545 = vmax.f32 %v4467, 0.0
      %v4546 = vmax.f32 %v4470, 0.0
      %v4547 = vmax.f32 %v4475, 0.0
      %v4548 = vmax.f32 %v4478, 0.0
      %v4549 = vmax.f32 %v4483, 0.0
      %v4550 = vmax.f32 %v4486, 0.0
      %v4551 = vmax.f32 %v4491, 0.0
      %v4552 = vmax.f32 %v4494, 0.0
      %v4553 = vmax.f32 %v4499, 0.0
      %v4554 = vmax.f32 %v4502, 0.0
      %v4555 = vmax.f32 %v4507, 0.0
      %v4556 = vmax.f32 %v4510, 0.0
      %v4557 = vmax.f32 %v4515, 0.0
      %v4558 = vmax.f32 %v4518, 0.0
      %v4559 = vmax.f32 %v4523, 0.0
      %v4560 = vmax.f32 %v4526, 0.0
      %4561 = vxpose.xlu0.b32.start [1/16] %v4529, 128
      %4562 = vxpose.xlu0.b32.cont [2/16] %v4530, 128
      %4563 = vxpose.xlu0.b32.cont [3/16] %v4531, 128
      %4564 = vxpose.xlu0.b32.cont [4/16] %v4532, 128
      %4565 = vxpose.xlu0.b32.cont [5/16] %v4533, 128
      %4566 = vxpose.xlu0.b32.cont [6/16] %v4534, 128
      %4567 = vxpose.xlu0.b32.cont [7/16] %v4535, 128
      %4568 = vxpose.xlu0.b32.cont [8/16] %v4536, 128
      %4569 = vxpose.xlu0.b32.cont [9/16] %v4537, 128
      %4570 = vxpose.xlu0.b32.cont [10/16] %v4538, 128
      %4571 = vxpose.xlu0.b32.cont [11/16] %v4539, 128
      %4572 = vxpose.xlu0.b32.cont [12/16] %v4540, 128
      %4573 = vxpose.xlu0.b32.cont [13/16] %v4541, 128
      %4574 = vxpose.xlu0.b32.cont [14/16] %v4542, 128
      %4575 = vxpose.xlu0.b32.cont [15/16] %v4543, 128
      %4576 = vxpose.xlu0.b32.end [16/16] %v4544, 128
      %v4577 = vpop.trf.xlu0
      %v4578 = vpop.trf.xlu0
      %v4579 = vpop.trf.xlu0
      %v4580 = vpop.trf.xlu0
      %v4581 = vpop.trf.xlu0
      %v4582 = vpop.trf.xlu0
      %v4583 = vpop.trf.xlu0
      %v4584 = vpop.trf.xlu0
      %v4585 = vpop.trf.xlu0
      %v4586 = vpop.trf.xlu0
      %v4587 = vpop.trf.xlu0
      %v4588 = vpop.trf.xlu0
      %v4589 = vpop.trf.xlu0
      %v4590 = vpop.trf.xlu0
      %v4591 = vpop.trf.xlu0
      %v4592 = vpop.trf.xlu0
      %4593 = vxpose.xlu0.b32.start [1/16] %v4545, 128
      %4594 = vxpose.xlu0.b32.cont [2/16] %v4546, 128
      %4595 = vxpose.xlu0.b32.cont [3/16] %v4547, 128
      %4596 = vxpose.xlu0.b32.cont [4/16] %v4548, 128
      %4597 = vxpose.xlu0.b32.cont [5/16] %v4549, 128
      %4598 = vxpose.xlu0.b32.cont [6/16] %v4550, 128
      %4599 = vxpose.xlu0.b32.cont [7/16] %v4551, 128
      %4600 = vxpose.xlu0.b32.cont [8/16] %v4552, 128
      %4601 = vxpose.xlu0.b32.cont [9/16] %v4553, 128
      %4602 = vxpose.xlu0.b32.cont [10/16] %v4554, 128
      %4603 = vxpose.xlu0.b32.cont [11/16] %v4555, 128
      %4604 = vxpose.xlu0.b32.cont [12/16] %v4556, 128
      %4605 = vxpose.xlu0.b32.cont [13/16] %v4557, 128
      %4606 = vxpose.xlu0.b32.cont [14/16] %v4558, 128
      %4607 = vxpose.xlu0.b32.cont [15/16] %v4559, 128
      %4608 = vxpose.xlu0.b32.end [16/16] %v4560, 128
      %v4609 = vpop.trf.xlu0
      %v4610 = vpop.trf.xlu0
      %v4611 = vpop.trf.xlu0
      %v4612 = vpop.trf.xlu0
      %v4613 = vpop.trf.xlu0
      %v4614 = vpop.trf.xlu0
      %v4615 = vpop.trf.xlu0
      %v4616 = vpop.trf.xlu0
      %v4617 = vpop.trf.xlu0
      %v4618 = vpop.trf.xlu0
      %v4619 = vpop.trf.xlu0
      %v4620 = vpop.trf.xlu0
      %v4621 = vpop.trf.xlu0
      %v4622 = vpop.trf.xlu0
      %v4623 = vpop.trf.xlu0
      %v4624 = vpop.trf.xlu0
      %4625 = vst [vmem:[%s278] sm:$0xff] %v4577
      %4626 = vst [vmem:[%s278 + $0x8] sm:$0xff] %v4609
      %4627 = vst [vmem:[%s278 + $0x10] sm:$0xff] %v4578
      %4628 = vst [vmem:[%s278 + $0x18] sm:$0xff] %v4610
      %4629 = vst [vmem:[%s278 + $0x20] sm:$0xff] %v4579
      %4630 = vst [vmem:[%s278 + $0x28] sm:$0xff] %v4611
      %4631 = vst [vmem:[%s278 + $0x30] sm:$0xff] %v4580
      %4632 = vst [vmem:[%s278 + $0x38] sm:$0xff] %v4612
      %4633 = vst [vmem:[%s278 + $0x40] sm:$0xff] %v4581
      %4634 = vst [vmem:[%s278 + $0x48] sm:$0xff] %v4613
      %4635 = vst [vmem:[%s278 + $0x50] sm:$0xff] %v4582
      %4636 = vst [vmem:[%s278 + $0x58] sm:$0xff] %v4614
      %4637 = vst [vmem:[%s278 + $0x60] sm:$0xff] %v4583
      %4638 = vst [vmem:[%s278 + $0x68] sm:$0xff] %v4615
      %4639 = vst [vmem:[%s278 + $0x70] sm:$0xff] %v4584
      %4640 = vst [vmem:[%s278 + $0x78] sm:$0xff] %v4616
      %p4641 = scmp.lt.s32.totalorder %s18, 1
      %s4642 = scalar_select %p4641, %s18, 1
      %s4643 = smul.addr %s4642, 16
      %s4644 = smul.addr %s4643, 8
      %s4645 = scalar_lea.vmem %s7, %s4644
      // Predicated region
      $region49: #{shared_features_forward.1} parent=47 // pred_check
        %p4646 = pneg %p188
      $region50: #{shared_features_forward.1} parent=47 // pred_check_branch
        %4648 = sbr.rel (%p4646) target = $region52
      $region51: #{shared_features_forward.1} parent=47 // pred_region
        _
      $region52: #{shared_features_forward.1} parent=47 // pred_fallthru
        _
    $region48: #{shared_features_forward.1} parent=5 // pred_fallthru
      _
    %p4649 = scmp.le.s32.totalorder 2, %s13
    // Predicated region
    $region53: #{shared_features_forward.1} parent=5 // pred_check
      %p4650 = pneg %p4649
    $region54: #{shared_features_forward.1} parent=5 // pred_check_branch
      %4652 = sbr.rel (%p4650) target = $region56
    $region55: #{shared_features_forward.1} parent=5 // pred_region
      %s4653 = ssub.s32 %s13, 2
      // Predicated region
      $region57: #{shared_features_forward.1} parent=55 // pred_check
        %p4654 = pneg %p194
      $region58: #{shared_features_forward.1} parent=55 // pred_check_branch
        %4656 = sbr.rel (%p4654) target = $region60
      $region59: #{shared_features_forward.1} parent=55 // pred_region
        %p4657 = scmp.lt.s32.totalorder %s19, 1
        %s4658 = scalar_select %p4657, %s19, 1
        %s4659 = smul.addr %s4658, 16
        %s4660 = smul.addr %s4659, 8
        %s4661 = scalar_lea.vmem %s7, %s4660
      $region60: #{shared_features_forward.1} parent=55 // pred_fallthru
        _
    $region56: #{shared_features_forward.1} parent=5 // pred_fallthru
      _
  $region6: #{shared_features_forward.1} parent=0 // loop_footer
    %s17 = sadd.s32 1, %s13
  $region7: #{shared_features_forward.1} parent=0 // loop_footer_branch
    %12 = sbr.rel target = $region3
  $region8: #{shared_features_forward.1} parent=0 // loop_exit
    _

</llo_original>
